<compile_context>
chip_gen: v7x
topology: tpu7x:2x2x1
jax: 0.10.0
libtpu: 0.0.40
codegen_flags: <defaults>
</compile_context>

<pallas_src>
import functools

import jax
import jax.numpy as jnp
from jax import lax
from jax.experimental import pallas as pl
from jax.experimental.pallas import tpu as pltpu


def _conv_stats_kernel(xc_ref, xn1_ref, xn2_ref, w_ref, mask_ref,
                       y_ref, sum_ref, sq_ref, *, wp):
    """3x3x3 conv for one (batch, depth-block) tile + masked BN partial stats.

    xc_ref  : (BD, Cp, SP)   padded depth rows [db*BD, db*BD+BD)
    xn1_ref : (1,  Cp, SP)   padded depth row  db*BD+BD
    xn2_ref : (1,  Cp, SP)   padded depth row  db*BD+BD+1
    w_ref   : (9, Cout, 3*Cp) weights per (kh,kw) tap, kd folded into K
    mask_ref: (SPo, 1)        1.0 on valid flat columns, 0.0 on garbage cols
    y_ref   : (BD, Cout, SPo) conv output (flat lane-dense rows), bf16
    sum_ref : (Cout, 1)       per-tile channel sum        (f32, valid cols only)
    sq_ref  : (Cout, 1)       per-tile channel sum of sq  (f32, valid cols only)
    """
    BD, Cp, SP = xc_ref.shape
    _, Cout, _ = w_ref.shape
    SPo = y_ref.shape[-1]

    ssum = jnp.zeros((Cout, SPo), jnp.float32)
    ssq = jnp.zeros((Cout, SPo), jnp.float32)

    for od in range(BD):                       # static unroll (BD is small)
        # 3-depth-row window stacked on the sublane (contraction) axis:
        # row index kd*Cp + c  <->  channel c of padded depth row od+kd.
        rows = []
        for kd in range(3):
            r = od + kd
            if r < BD:
                rows.append(xc_ref[r])         # (Cp, SP)
            elif r == BD:
                rows.append(xn1_ref[0])
            else:
                rows.append(xn2_ref[0])
        win = jnp.concatenate(rows, axis=0)    # (3*Cp, SP), sublane-aligned

        acc = jnp.zeros((Cout, SPo), jnp.float32)
        for kh in range(3):
            for kw in range(3):
                off = kh * wp + kw             # static lane offset of this tap
                rhs = win[:, off:off + SPo]    # (3*Cp, SPo) shifted view
                acc = acc + jnp.dot(w_ref[kh * 3 + kw], rhs,
                                    preferred_element_type=jnp.float32)

        ssum = ssum + acc
        ssq = ssq + acc * acc
        y_ref[od] = acc.astype(y_ref.dtype)    # plane store, no relayout

    # Masked channel reductions on the (otherwise idle) MXU.
    mask = mask_ref[...]                       # (SPo, 1)
    sum_ref[...] = jnp.dot(ssum, mask, preferred_element_type=jnp.float32)
    sq_ref[...] = jnp.dot(ssq, mask, preferred_element_type=jnp.float32)


def _bn_relu_kernel(y_ref, scale_ref, shift_ref, o_ref):
    """Folded-BN affine + ReLU + garbage-column compaction + NCDHW layout.

    y_ref    : (BD2, Cout, H, Wp) bf16 conv intermediate (2 garbage cols/row)
    scale_ref: (Cout, 1, 1) f32
    shift_ref: (Cout, 1, 1) f32
    o_ref    : (Cout, BD2, H, W) f32 final output block
    """
    BD2 = y_ref.shape[0]
    w_out = o_ref.shape[-1]
    sc = scale_ref[...]
    sh = shift_ref[...]
    for od in range(BD2):
        v = y_ref[od][:, :, :w_out].astype(jnp.float32)   # (Cout, H, W)
        o_ref[:, od, :, :] = jnp.maximum(v * sc + sh, 0.0)


def _round_up(x, m):
    return ((x + m - 1) // m) * m


def _pick_conv_bd(D, Cp, SP, Cout, SPo, budget=10 * 1024 * 1024, max_bd=16):
    """Largest divisor of D (<= max_bd) whose estimated per-step live set fits.

    Live set estimate: double-buffered input block + halo rows + bf16 output
    block, plus in-flight values (window, acc, stats).  Fallback = smallest
    valid divisor (1), never the full volume.
    """
    best = 1
    for bd in range(1, D + 1):
        if D % bd or bd > max_bd:
            continue
        live = (2 * (bd * Cp * SP * 4 + 2 * Cp * SP * 4 + bd * Cout * SPo * 2)
                + (3 * Cp * SP + 3 * Cout * SPo) * 4)
        if live <= budget:
            best = bd
    return best


def _pick_bn_bd(D, Cout, H, Wp, W, budget=12 * 1024 * 1024):
    """Largest divisor of D for the memory-bound BN+ReLU pass."""
    best = 1
    for bd in range(1, D + 1):
        if D % bd:
            continue
        live = 2 * (bd * Cout * H * Wp * 2 + bd * Cout * H * W * 4)
        if live <= budget:
            best = bd
    return best


def input_block_forward(x_ncdhw, conv_w, conv_b, gamma, beta,
                        eps=1e-5, block_d=None, block_d_bn=None):
    """Forward of InputBlock. x_ncdhw: (N, Cin, D, H, W); conv_w: (Cout, Cin, 3, 3, 3)."""
    del conv_b  # cancels exactly under training-mode BatchNorm (see header note)

    N, Cin, D, H, W = x_ncdhw.shape
    Cout = conv_w.shape[0]
    Dp, Hp, Wp = D + 2, H + 2, W + 2
    Cp = _round_up(Cin, 8)                    # f32 sublane tile
    SPo = H * Wp                              # flat output spatial per depth row
    SP = _round_up(Hp * Wp + 2, 128)          # flat padded input spatial per row

    if block_d is None:
        block_d = _pick_conv_bd(D, Cp, SP, Cout, SPo)
    BD = block_d
    assert D % BD == 0, "block_d must divide D"
    nDB = D // BD

    if block_d_bn is None:
        block_d_bn = _pick_bn_bd(D, Cout, H, Wp, W)
    BD2 = block_d_bn
    assert D % BD2 == 0, "block_d_bn must divide D"
    nDB2 = D // BD2

    # ---- prep: one small XLA pass over the input --------------------------
    # (N,Cin,D,H,W) -> zero pad D/H/W by 1 -> (N, Dp, Cin, Hp*Wp) -> pad
    # channels to Cp and flat spatial to SP (lane-dense, depth-halo included).
    xp = jnp.pad(x_ncdhw.astype(jnp.float32),
                 ((0, 0), (0, 0), (1, 1), (1, 1), (1, 1)))
    xp = jnp.transpose(xp, (0, 2, 1, 3, 4)).reshape(N, Dp, Cin, Hp * Wp)
    xprep = jnp.pad(xp, ((0, 0), (0, 0), (0, Cp - Cin), (0, SP - Hp * Wp)))

    # Weights: (Cout,Cin,kd,kh,kw) -> (kh,kw,Cout,kd,Cp) -> (9, Cout, 3*Cp),
    # contraction column index = kd*Cp + c (matches the in-kernel window rows).
    w_t = jnp.transpose(conv_w.astype(jnp.float32), (3, 4, 0, 2, 1))
    w_t = jnp.pad(w_t, ((0, 0), (0, 0), (0, 0), (0, 0), (0, Cp - Cin)))
    w9 = w_t.reshape(9, Cout, 3 * Cp)

    # Lane mask over the flat output row: valid where (q mod Wp) < W.
    maskv = ((jnp.arange(SPo) % Wp) < W).astype(jnp.float32).reshape(SPo, 1)

    kernel1 = functools.partial(_conv_stats_kernel, wp=Wp)

    conv_y, psum, psq = pl.pallas_call(
        kernel1,
        out_shape=(
            jax.ShapeDtypeStruct((N, D, Cout, SPo), jnp.bfloat16),
            jax.ShapeDtypeStruct((N, nDB, Cout, 1), jnp.float32),
            jax.ShapeDtypeStruct((N, nDB, Cout, 1), jnp.float32),
        ),
        grid=(N, nDB),
        in_specs=[
            # current depth block (padded rows [d*BD, d*BD+BD))
            pl.BlockSpec((None, BD, Cp, SP), lambda n, d: (n, d, 0, 0)),
            # the two halo rows just after the block (always in-bounds: D is
            # pre-padded in the wrapper, so no clamping / zero-flag needed)
            pl.BlockSpec((None, 1, Cp, SP),
                         lambda n, d: (n, (d + 1) * BD, 0, 0)),
            pl.BlockSpec((None, 1, Cp, SP),
                         lambda n, d: (n, (d + 1) * BD + 1, 0, 0)),
            pl.BlockSpec((9, Cout, 3 * Cp), lambda n, d: (0, 0, 0)),
            pl.BlockSpec((SPo, 1), lambda n, d: (0, 0)),
        ],
        out_specs=(
            pl.BlockSpec((None, BD, Cout, SPo), lambda n, d: (n, d, 0, 0)),
            pl.BlockSpec((None, None, Cout, 1), lambda n, d: (n, d, 0, 0)),
            pl.BlockSpec((None, None, Cout, 1), lambda n, d: (n, d, 0, 0)),
        ),
        compiler_params=pltpu.CompilerParams(
            dimension_semantics=("parallel", "parallel"),
            vmem_limit_bytes=32 * 1024 * 1024),
    )(xprep, xprep, xprep, w9, maskv)

    # ---- BatchNorm3d (training mode): biased batch stats over (N, D, H, W) --
    cnt = jnp.float32(N * D * H * W)
    mean = jnp.sum(psum, axis=(0, 1)) / cnt                       # (Cout, 1)
    var = jnp.maximum(jnp.sum(psq, axis=(0, 1)) / cnt - mean * mean, 0.0)
    scale = gamma.reshape(Cout, 1).astype(jnp.float32) / jnp.sqrt(var + eps)
    shift = beta.reshape(Cout, 1).astype(jnp.float32) - mean * scale
    scale3 = scale.reshape(Cout, 1, 1)
    shift3 = shift.reshape(Cout, 1, 1)

    # Free metadata reshape: (N, D, Cout, H*Wp) -> (N, D, Cout, H, Wp).
    y5 = conv_y.reshape(N, D, Cout, H, Wp)

    out = pl.pallas_call(
        _bn_relu_kernel,
        out_shape=jax.ShapeDtypeStruct((N, Cout, D, H, W), jnp.float32),
        grid=(N, nDB2),
        in_specs=[
            pl.BlockSpec((None, BD2, Cout, H, Wp),
                         lambda n, d: (n, d, 0, 0, 0)),
            pl.BlockSpec((Cout, 1, 1), lambda n, d: (0, 0, 0)),
            pl.BlockSpec((Cout, 1, 1), lambda n, d: (0, 0, 0)),
        ],
        out_specs=pl.BlockSpec((None, Cout, BD2, H, W),
                               lambda n, d: (n, 0, d, 0, 0)),
        compiler_params=pltpu.CompilerParams(
            dimension_semantics=("parallel", "parallel"),
            vmem_limit_bytes=32 * 1024 * 1024),
    )(y5, scale3, shift3)

    return out


def _reference(x_ncdhw, conv_w, conv_b, gamma, beta, eps=1e-5):
    y = lax.conv_general_dilated(
        x_ncdhw, conv_w, window_strides=(1, 1, 1),
        padding=((1, 1), (1, 1), (1, 1)),
        dimension_numbers=("NCDHW", "OIDHW", "NCDHW"))
    y = y + conv_b.reshape(1, -1, 1, 1, 1)
    mean = jnp.mean(y, axis=(0, 2, 3, 4), keepdims=True)
    var = jnp.mean((y - mean) ** 2, axis=(0, 2, 3, 4), keepdims=True)
    yn = (y - mean) / jnp.sqrt(var + eps)
    yn = yn * gamma.reshape(1, -1, 1, 1, 1) + beta.reshape(1, -1, 1, 1, 1)
    return jnp.maximum(yn, 0.0)


if __name__ == "__main__":
    N, Cin, Cout, D, H, W = 2, 4, 8, 8, 8, 8
    key = jax.random.PRNGKey(0)
    kx, kw, kb = jax.random.split(key, 3)

    x = jax.random.normal(kx, (N, Cin, D, H, W), dtype=jnp.float32)
    conv_w = 0.1 * jax.random.normal(kw, (Cout, Cin, 3, 3, 3), dtype=jnp.float32)
    conv_b = 0.1 * jax.random.normal(kb, (Cout,), dtype=jnp.float32)
    gamma = jnp.ones((Cout,), dtype=jnp.float32)    # BatchNorm weight init = 1
    beta = jnp.zeros((Cout,), dtype=jnp.float32)    # BatchNorm bias init = 0

    # block_d=4 -> two depth blocks per batch element so the halo-row reads
    # hit both real-data rows and the zero-padded edge rows.
    out = input_block_forward(x, conv_w, conv_b, gamma, beta, block_d=4)
    out = jax.block_until_ready(out)

    ref = _reference(x, conv_w, conv_b, gamma, beta)
    assert out.shape == (N, Cout, D, H, W)
    err = float(jnp.max(jnp.abs(out - ref)))
    # bf16 conv intermediate -> ~0.4% relative error on pre-norm values.
    assert err < 5e-2, f"max abs err {err}"

    print("KERNEL_OK")
</pallas_src>

<mosaic_0001>
module attributes {stable_mosaic.version = 11 : i64} {
  func.func @_conv_stats_kernel(%arg0: i32, %arg1: i32, %arg2: memref<1x4x8x128xf32, #tpu.memory_space<vmem>>, %arg3: memref<1x1x8x128xf32, #tpu.memory_space<vmem>>, %arg4: memref<1x1x8x128xf32, #tpu.memory_space<vmem>>, %arg5: memref<9x8x24xf32, #tpu.memory_space<vmem>>, %arg6: memref<80x1xf32, #tpu.memory_space<vmem>>, %arg7: memref<1x4x8x80xbf16, #tpu.memory_space<vmem>>, %arg8: memref<1x1x8x1xf32, #tpu.memory_space<vmem>>, %arg9: memref<1x1x8x1xf32, #tpu.memory_space<vmem>>) attributes {dimension_semantics = [#tpu.dimension_semantics<parallel>, #tpu.dimension_semantics<parallel>], iteration_bounds = array<i64: 2, 2>, scalar_prefetch = 0 : i64, scratch_operands = 0 : i64, tpu.core_type = #tpu.core_type<tc>, window_params = [{transform_indices = @transform_0, window_bounds = array<i64: 1, 4, 8, 128>}, {transform_indices = @transform_1, window_bounds = array<i64: 1, 1, 8, 128>}, {transform_indices = @transform_2, window_bounds = array<i64: 1, 1, 8, 128>}, {pipeline_mode = #tpu.pipeline_mode<synchronous>, transform_indices = @transform_3, window_bounds = array<i64: 9, 8, 24>}, {pipeline_mode = #tpu.pipeline_mode<synchronous>, transform_indices = @transform_4, window_bounds = array<i64: 80, 1>}, {transform_indices = @transform_5, window_bounds = array<i64: 1, 4, 8, 80>}, {transform_indices = @transform_6, window_bounds = array<i64: 1, 1, 8, 1>}, {transform_indices = @transform_7, window_bounds = array<i64: 1, 1, 8, 1>}]} {
    %cst = arith.constant 0.000000e+00 : f32
    %0 = vector.broadcast %cst : f32 to vector<8x80xf32>
    %cst_0 = arith.constant 0.000000e+00 : f32
    %1 = vector.broadcast %cst_0 : f32 to vector<8x80xf32>
    %c0 = arith.constant 0 : index
    %c0_1 = arith.constant 0 : index
    %c0_2 = arith.constant 0 : index
    %c0_3 = arith.constant 0 : index
    %2 = vector.load %arg2[%c0, %c0_1, %c0_2, %c0_3] : memref<1x4x8x128xf32, #tpu.memory_space<vmem>>, vector<1x1x8x128xf32>
    %3 = vector.shape_cast %2 : vector<1x1x8x128xf32> to vector<8x128xf32>
    %c0_4 = arith.constant 0 : index
    %c1 = arith.constant 1 : index
    %c0_5 = arith.constant 0 : index
    %c0_6 = arith.constant 0 : index
    %4 = vector.load %arg2[%c0_4, %c1, %c0_5, %c0_6] : memref<1x4x8x128xf32, #tpu.memory_space<vmem>>, vector<1x1x8x128xf32>
    %5 = vector.shape_cast %4 : vector<1x1x8x128xf32> to vector<8x128xf32>
    %c0_7 = arith.constant 0 : index
    %c2 = arith.constant 2 : index
    %c0_8 = arith.constant 0 : index
    %c0_9 = arith.constant 0 : index
    %6 = vector.load %arg2[%c0_7, %c2, %c0_8, %c0_9] : memref<1x4x8x128xf32, #tpu.memory_space<vmem>>, vector<1x1x8x128xf32>
    %7 = vector.shape_cast %6 : vector<1x1x8x128xf32> to vector<8x128xf32>
    %8 = tpu.concatenate %3, %5, %7 in 0 : vector<8x128xf32>, vector<8x128xf32>, vector<8x128xf32> -> vector<24x128xf32>
    %cst_10 = arith.constant 0.000000e+00 : f32
    %9 = vector.broadcast %cst_10 : f32 to vector<8x80xf32>
    %10 = vector.extract_strided_slice %8 {offsets = [0, 0], sizes = [24, 80], strides = [1, 1]} : vector<24x128xf32> to vector<24x80xf32>
    %c0_11 = arith.constant 0 : index
    %c0_12 = arith.constant 0 : index
    %c0_13 = arith.constant 0 : index
    %11 = vector.load %arg5[%c0_11, %c0_12, %c0_13] : memref<9x8x24xf32, #tpu.memory_space<vmem>>, vector<1x8x24xf32>
    %12 = vector.shape_cast %11 : vector<1x8x24xf32> to vector<8x24xf32>
    %cst_14 = arith.constant dense<0.000000e+00> : vector<8x80xf32>
    %13 = tpu.matmul %12, %10, %cst_14 {dimension_numbers = #tpu.dot_dimension_numbers<[1], [0], [0], [1], [0, 0, 1, 1], [], []>} : vector<8x24xf32>, vector<24x80xf32>, vector<8x80xf32> -> vector<8x80xf32>
    %14 = arith.addf %9, %13 : vector<8x80xf32>
    %15 = vector.extract_strided_slice %8 {offsets = [0, 1], sizes = [24, 80], strides = [1, 1]} : vector<24x128xf32> to vector<24x80xf32>
    %c1_15 = arith.constant 1 : index
    %c0_16 = arith.constant 0 : index
    %c0_17 = arith.constant 0 : index
    %16 = vector.load %arg5[%c1_15, %c0_16, %c0_17] : memref<9x8x24xf32, #tpu.memory_space<vmem>>, vector<1x8x24xf32>
    %17 = vector.shape_cast %16 : vector<1x8x24xf32> to vector<8x24xf32>
    %cst_18 = arith.constant dense<0.000000e+00> : vector<8x80xf32>
    %18 = tpu.matmul %17, %15, %cst_18 {dimension_numbers = #tpu.dot_dimension_numbers<[1], [0], [0], [1], [0, 0, 1, 1], [], []>} : vector<8x24xf32>, vector<24x80xf32>, vector<8x80xf32> -> vector<8x80xf32>
    %19 = arith.addf %14, %18 : vector<8x80xf32>
    %20 = vector.extract_strided_slice %8 {offsets = [0, 2], sizes = [24, 80], strides = [1, 1]} : vector<24x128xf32> to vector<24x80xf32>
    %c2_19 = arith.constant 2 : index
    %c0_20 = arith.constant 0 : index
    %c0_21 = arith.constant 0 : index
    %21 = vector.load %arg5[%c2_19, %c0_20, %c0_21] : memref<9x8x24xf32, #tpu.memory_space<vmem>>, vector<1x8x24xf32>
    %22 = vector.shape_cast %21 : vector<1x8x24xf32> to vector<8x24xf32>
    %cst_22 = arith.constant dense<0.000000e+00> : vector<8x80xf32>
    %23 = tpu.matmul %22, %20, %cst_22 {dimension_numbers = #tpu.dot_dimension_numbers<[1], [0], [0], [1], [0, 0, 1, 1], [], []>} : vector<8x24xf32>, vector<24x80xf32>, vector<8x80xf32> -> vector<8x80xf32>
    %24 = arith.addf %19, %23 : vector<8x80xf32>
    %25 = vector.extract_strided_slice %8 {offsets = [0, 10], sizes = [24, 80], strides = [1, 1]} : vector<24x128xf32> to vector<24x80xf32>
    %c3 = arith.constant 3 : index
    %c0_23 = arith.constant 0 : index
    %c0_24 = arith.constant 0 : index
    %26 = vector.load %arg5[%c3, %c0_23, %c0_24] : memref<9x8x24xf32, #tpu.memory_space<vmem>>, vector<1x8x24xf32>
    %27 = vector.shape_cast %26 : vector<1x8x24xf32> to vector<8x24xf32>
    %cst_25 = arith.constant dense<0.000000e+00> : vector<8x80xf32>
    %28 = tpu.matmul %27, %25, %cst_25 {dimension_numbers = #tpu.dot_dimension_numbers<[1], [0], [0], [1], [0, 0, 1, 1], [], []>} : vector<8x24xf32>, vector<24x80xf32>, vector<8x80xf32> -> vector<8x80xf32>
    %29 = arith.addf %24, %28 : vector<8x80xf32>
    %30 = vector.extract_strided_slice %8 {offsets = [0, 11], sizes = [24, 80], strides = [1, 1]} : vector<24x128xf32> to vector<24x80xf32>
    %c4 = arith.constant 4 : index
    %c0_26 = arith.constant 0 : index
    %c0_27 = arith.constant 0 : index
    %31 = vector.load %arg5[%c4, %c0_26, %c0_27] : memref<9x8x24xf32, #tpu.memory_space<vmem>>, vector<1x8x24xf32>
    %32 = vector.shape_cast %31 : vector<1x8x24xf32> to vector<8x24xf32>
    %cst_28 = arith.constant dense<0.000000e+00> : vector<8x80xf32>
    %33 = tpu.matmul %32, %30, %cst_28 {dimension_numbers = #tpu.dot_dimension_numbers<[1], [0], [0], [1], [0, 0, 1, 1], [], []>} : vector<8x24xf32>, vector<24x80xf32>, vector<8x80xf32> -> vector<8x80xf32>
    %34 = arith.addf %29, %33 : vector<8x80xf32>
    %35 = vector.extract_strided_slice %8 {offsets = [0, 12], sizes = [24, 80], strides = [1, 1]} : vector<24x128xf32> to vector<24x80xf32>
    %c5 = arith.constant 5 : index
    %c0_29 = arith.constant 0 : index
    %c0_30 = arith.constant 0 : index
    %36 = vector.load %arg5[%c5, %c0_29, %c0_30] : memref<9x8x24xf32, #tpu.memory_space<vmem>>, vector<1x8x24xf32>
    %37 = vector.shape_cast %36 : vector<1x8x24xf32> to vector<8x24xf32>
    %cst_31 = arith.constant dense<0.000000e+00> : vector<8x80xf32>
    %38 = tpu.matmul %37, %35, %cst_31 {dimension_numbers = #tpu.dot_dimension_numbers<[1], [0], [0], [1], [0, 0, 1, 1], [], []>} : vector<8x24xf32>, vector<24x80xf32>, vector<8x80xf32> -> vector<8x80xf32>
    %39 = arith.addf %34, %38 : vector<8x80xf32>
    %40 = vector.extract_strided_slice %8 {offsets = [0, 20], sizes = [24, 80], strides = [1, 1]} : vector<24x128xf32> to vector<24x80xf32>
    %c6 = arith.constant 6 : index
    %c0_32 = arith.constant 0 : index
    %c0_33 = arith.constant 0 : index
    %41 = vector.load %arg5[%c6, %c0_32, %c0_33] : memref<9x8x24xf32, #tpu.memory_space<vmem>>, vector<1x8x24xf32>
    %42 = vector.shape_cast %41 : vector<1x8x24xf32> to vector<8x24xf32>
    %cst_34 = arith.constant dense<0.000000e+00> : vector<8x80xf32>
    %43 = tpu.matmul %42, %40, %cst_34 {dimension_numbers = #tpu.dot_dimension_numbers<[1], [0], [0], [1], [0, 0, 1, 1], [], []>} : vector<8x24xf32>, vector<24x80xf32>, vector<8x80xf32> -> vector<8x80xf32>
    %44 = arith.addf %39, %43 : vector<8x80xf32>
    %45 = vector.extract_strided_slice %8 {offsets = [0, 21], sizes = [24, 80], strides = [1, 1]} : vector<24x128xf32> to vector<24x80xf32>
    %c7 = arith.constant 7 : index
    %c0_35 = arith.constant 0 : index
    %c0_36 = arith.constant 0 : index
    %46 = vector.load %arg5[%c7, %c0_35, %c0_36] : memref<9x8x24xf32, #tpu.memory_space<vmem>>, vector<1x8x24xf32>
    %47 = vector.shape_cast %46 : vector<1x8x24xf32> to vector<8x24xf32>
    %cst_37 = arith.constant dense<0.000000e+00> : vector<8x80xf32>
    %48 = tpu.matmul %47, %45, %cst_37 {dimension_numbers = #tpu.dot_dimension_numbers<[1], [0], [0], [1], [0, 0, 1, 1], [], []>} : vector<8x24xf32>, vector<24x80xf32>, vector<8x80xf32> -> vector<8x80xf32>
    %49 = arith.addf %44, %48 : vector<8x80xf32>
    %50 = vector.extract_strided_slice %8 {offsets = [0, 22], sizes = [24, 80], strides = [1, 1]} : vector<24x128xf32> to vector<24x80xf32>
    %c8 = arith.constant 8 : index
    %c0_38 = arith.constant 0 : index
    %c0_39 = arith.constant 0 : index
    %51 = vector.load %arg5[%c8, %c0_38, %c0_39] : memref<9x8x24xf32, #tpu.memory_space<vmem>>, vector<1x8x24xf32>
    %52 = vector.shape_cast %51 : vector<1x8x24xf32> to vector<8x24xf32>
    %cst_40 = arith.constant dense<0.000000e+00> : vector<8x80xf32>
    %53 = tpu.matmul %52, %50, %cst_40 {dimension_numbers = #tpu.dot_dimension_numbers<[1], [0], [0], [1], [0, 0, 1, 1], [], []>} : vector<8x24xf32>, vector<24x80xf32>, vector<8x80xf32> -> vector<8x80xf32>
    %54 = arith.addf %49, %53 : vector<8x80xf32>
    %55 = arith.addf %0, %54 : vector<8x80xf32>
    %56 = arith.mulf %54, %54 : vector<8x80xf32>
    %57 = arith.addf %1, %56 : vector<8x80xf32>
    %58 = arith.truncf %54 : vector<8x80xf32> to vector<8x80xbf16>
    %c0_41 = arith.constant 0 : index
    %c0_42 = arith.constant 0 : index
    %c0_43 = arith.constant 0 : index
    %c0_44 = arith.constant 0 : index
    %59 = vector.load %arg7[%c0_41, %c0_42, %c0_43, %c0_44] : memref<1x4x8x80xbf16, #tpu.memory_space<vmem>>, vector<1x1x8x80xbf16>
    %60 = vector.shape_cast %59 : vector<1x1x8x80xbf16> to vector<8x80xbf16>
    %61 = vector.shape_cast %58 : vector<8x80xbf16> to vector<1x1x8x80xbf16>
    tpu.vector_store %arg7[%c0_41, %c0_42, %c0_43, %c0_44], %61 {strides = array<i32>} : memref<1x4x8x80xbf16, #tpu.memory_space<vmem>>, vector<1x1x8x80xbf16>,
    %c0_45 = arith.constant 0 : index
    %c1_46 = arith.constant 1 : index
    %c0_47 = arith.constant 0 : index
    %c0_48 = arith.constant 0 : index
    %62 = vector.load %arg2[%c0_45, %c1_46, %c0_47, %c0_48] : memref<1x4x8x128xf32, #tpu.memory_space<vmem>>, vector<1x1x8x128xf32>
    %63 = vector.shape_cast %62 : vector<1x1x8x128xf32> to vector<8x128xf32>
    %c0_49 = arith.constant 0 : index
    %c2_50 = arith.constant 2 : index
    %c0_51 = arith.constant 0 : index
    %c0_52 = arith.constant 0 : index
    %64 = vector.load %arg2[%c0_49, %c2_50, %c0_51, %c0_52] : memref<1x4x8x128xf32, #tpu.memory_space<vmem>>, vector<1x1x8x128xf32>
    %65 = vector.shape_cast %64 : vector<1x1x8x128xf32> to vector<8x128xf32>
    %c0_53 = arith.constant 0 : index
    %c3_54 = arith.constant 3 : index
    %c0_55 = arith.constant 0 : index
    %c0_56 = arith.constant 0 : index
    %66 = vector.load %arg2[%c0_53, %c3_54, %c0_55, %c0_56] : memref<1x4x8x128xf32, #tpu.memory_space<vmem>>, vector<1x1x8x128xf32>
    %67 = vector.shape_cast %66 : vector<1x1x8x128xf32> to vector<8x128xf32>
    %68 = tpu.concatenate %63, %65, %67 in 0 : vector<8x128xf32>, vector<8x128xf32>, vector<8x128xf32> -> vector<24x128xf32>
    %cst_57 = arith.constant 0.000000e+00 : f32
    %69 = vector.broadcast %cst_57 : f32 to vector<8x80xf32>
    %70 = vector.extract_strided_slice %68 {offsets = [0, 0], sizes = [24, 80], strides = [1, 1]} : vector<24x128xf32> to vector<24x80xf32>
    %c0_58 = arith.constant 0 : index
    %c0_59 = arith.constant 0 : index
    %c0_60 = arith.constant 0 : index
    %71 = vector.load %arg5[%c0_58, %c0_59, %c0_60] : memref<9x8x24xf32, #tpu.memory_space<vmem>>, vector<1x8x24xf32>
    %72 = vector.shape_cast %71 : vector<1x8x24xf32> to vector<8x24xf32>
    %cst_61 = arith.constant dense<0.000000e+00> : vector<8x80xf32>
    %73 = tpu.matmul %72, %70, %cst_61 {dimension_numbers = #tpu.dot_dimension_numbers<[1], [0], [0], [1], [0, 0, 1, 1], [], []>} : vector<8x24xf32>, vector<24x80xf32>, vector<8x80xf32> -> vector<8x80xf32>
    %74 = arith.addf %69, %73 : vector<8x80xf32>
    %75 = vector.extract_strided_slice %68 {offsets = [0, 1], sizes = [24, 80], strides = [1, 1]} : vector<24x128xf32> to vector<24x80xf32>
    %c1_62 = arith.constant 1 : index
    %c0_63 = arith.constant 0 : index
    %c0_64 = arith.constant 0 : index
    %76 = vector.load %arg5[%c1_62, %c0_63, %c0_64] : memref<9x8x24xf32, #tpu.memory_space<vmem>>, vector<1x8x24xf32>
    %77 = vector.shape_cast %76 : vector<1x8x24xf32> to vector<8x24xf32>
    %cst_65 = arith.constant dense<0.000000e+00> : vector<8x80xf32>
    %78 = tpu.matmul %77, %75, %cst_65 {dimension_numbers = #tpu.dot_dimension_numbers<[1], [0], [0], [1], [0, 0, 1, 1], [], []>} : vector<8x24xf32>, vector<24x80xf32>, vector<8x80xf32> -> vector<8x80xf32>
    %79 = arith.addf %74, %78 : vector<8x80xf32>
    %80 = vector.extract_strided_slice %68 {offsets = [0, 2], sizes = [24, 80], strides = [1, 1]} : vector<24x128xf32> to vector<24x80xf32>
    %c2_66 = arith.constant 2 : index
    %c0_67 = arith.constant 0 : index
    %c0_68 = arith.constant 0 : index
    %81 = vector.load %arg5[%c2_66, %c0_67, %c0_68] : memref<9x8x24xf32, #tpu.memory_space<vmem>>, vector<1x8x24xf32>
    %82 = vector.shape_cast %81 : vector<1x8x24xf32> to vector<8x24xf32>
    %cst_69 = arith.constant dense<0.000000e+00> : vector<8x80xf32>
    %83 = tpu.matmul %82, %80, %cst_69 {dimension_numbers = #tpu.dot_dimension_numbers<[1], [0], [0], [1], [0, 0, 1, 1], [], []>} : vector<8x24xf32>, vector<24x80xf32>, vector<8x80xf32> -> vector<8x80xf32>
    %84 = arith.addf %79, %83 : vector<8x80xf32>
    %85 = vector.extract_strided_slice %68 {offsets = [0, 10], sizes = [24, 80], strides = [1, 1]} : vector<24x128xf32> to vector<24x80xf32>
    %c3_70 = arith.constant 3 : index
    %c0_71 = arith.constant 0 : index
    %c0_72 = arith.constant 0 : index
    %86 = vector.load %arg5[%c3_70, %c0_71, %c0_72] : memref<9x8x24xf32, #tpu.memory_space<vmem>>, vector<1x8x24xf32>
    %87 = vector.shape_cast %86 : vector<1x8x24xf32> to vector<8x24xf32>
    %cst_73 = arith.constant dense<0.000000e+00> : vector<8x80xf32>
    %88 = tpu.matmul %87, %85, %cst_73 {dimension_numbers = #tpu.dot_dimension_numbers<[1], [0], [0], [1], [0, 0, 1, 1], [], []>} : vector<8x24xf32>, vector<24x80xf32>, vector<8x80xf32> -> vector<8x80xf32>
    %89 = arith.addf %84, %88 : vector<8x80xf32>
    %90 = vector.extract_strided_slice %68 {offsets = [0, 11], sizes = [24, 80], strides = [1, 1]} : vector<24x128xf32> to vector<24x80xf32>
    %c4_74 = arith.constant 4 : index
    %c0_75 = arith.constant 0 : index
    %c0_76 = arith.constant 0 : index
    %91 = vector.load %arg5[%c4_74, %c0_75, %c0_76] : memref<9x8x24xf32, #tpu.memory_space<vmem>>, vector<1x8x24xf32>
    %92 = vector.shape_cast %91 : vector<1x8x24xf32> to vector<8x24xf32>
    %cst_77 = arith.constant dense<0.000000e+00> : vector<8x80xf32>
    %93 = tpu.matmul %92, %90, %cst_77 {dimension_numbers = #tpu.dot_dimension_numbers<[1], [0], [0], [1], [0, 0, 1, 1], [], []>} : vector<8x24xf32>, vector<24x80xf32>, vector<8x80xf32> -> vector<8x80xf32>
    %94 = arith.addf %89, %93 : vector<8x80xf32>
    %95 = vector.extract_strided_slice %68 {offsets = [0, 12], sizes = [24, 80], strides = [1, 1]} : vector<24x128xf32> to vector<24x80xf32>
    %c5_78 = arith.constant 5 : index
    %c0_79 = arith.constant 0 : index
    %c0_80 = arith.constant 0 : index
    %96 = vector.load %arg5[%c5_78, %c0_79, %c0_80] : memref<9x8x24xf32, #tpu.memory_space<vmem>>, vector<1x8x24xf32>
    %97 = vector.shape_cast %96 : vector<1x8x24xf32> to vector<8x24xf32>
    %cst_81 = arith.constant dense<0.000000e+00> : vector<8x80xf32>
    %98 = tpu.matmul %97, %95, %cst_81 {dimension_numbers = #tpu.dot_dimension_numbers<[1], [0], [0], [1], [0, 0, 1, 1], [], []>} : vector<8x24xf32>, vector<24x80xf32>, vector<8x80xf32> -> vector<8x80xf32>
    %99 = arith.addf %94, %98 : vector<8x80xf32>
    %100 = vector.extract_strided_slice %68 {offsets = [0, 20], sizes = [24, 80], strides = [1, 1]} : vector<24x128xf32> to vector<24x80xf32>
    %c6_82 = arith.constant 6 : index
    %c0_83 = arith.constant 0 : index
    %c0_84 = arith.constant 0 : index
    %101 = vector.load %arg5[%c6_82, %c0_83, %c0_84] : memref<9x8x24xf32, #tpu.memory_space<vmem>>, vector<1x8x24xf32>
    %102 = vector.shape_cast %101 : vector<1x8x24xf32> to vector<8x24xf32>
    %cst_85 = arith.constant dense<0.000000e+00> : vector<8x80xf32>
    %103 = tpu.matmul %102, %100, %cst_85 {dimension_numbers = #tpu.dot_dimension_numbers<[1], [0], [0], [1], [0, 0, 1, 1], [], []>} : vector<8x24xf32>, vector<24x80xf32>, vector<8x80xf32> -> vector<8x80xf32>
    %104 = arith.addf %99, %103 : vector<8x80xf32>
    %105 = vector.extract_strided_slice %68 {offsets = [0, 21], sizes = [24, 80], strides = [1, 1]} : vector<24x128xf32> to vector<24x80xf32>
    %c7_86 = arith.constant 7 : index
    %c0_87 = arith.constant 0 : index
    %c0_88 = arith.constant 0 : index
    %106 = vector.load %arg5[%c7_86, %c0_87, %c0_88] : memref<9x8x24xf32, #tpu.memory_space<vmem>>, vector<1x8x24xf32>
    %107 = vector.shape_cast %106 : vector<1x8x24xf32> to vector<8x24xf32>
    %cst_89 = arith.constant dense<0.000000e+00> : vector<8x80xf32>
    %108 = tpu.matmul %107, %105, %cst_89 {dimension_numbers = #tpu.dot_dimension_numbers<[1], [0], [0], [1], [0, 0, 1, 1], [], []>} : vector<8x24xf32>, vector<24x80xf32>, vector<8x80xf32> -> vector<8x80xf32>
    %109 = arith.addf %104, %108 : vector<8x80xf32>
    %110 = vector.extract_strided_slice %68 {offsets = [0, 22], sizes = [24, 80], strides = [1, 1]} : vector<24x128xf32> to vector<24x80xf32>
    %c8_90 = arith.constant 8 : index
    %c0_91 = arith.constant 0 : index
    %c0_92 = arith.constant 0 : index
    %111 = vector.load %arg5[%c8_90, %c0_91, %c0_92] : memref<9x8x24xf32, #tpu.memory_space<vmem>>, vector<1x8x24xf32>
    %112 = vector.shape_cast %111 : vector<1x8x24xf32> to vector<8x24xf32>
    %cst_93 = arith.constant dense<0.000000e+00> : vector<8x80xf32>
    %113 = tpu.matmul %112, %110, %cst_93 {dimension_numbers = #tpu.dot_dimension_numbers<[1], [0], [0], [1], [0, 0, 1, 1], [], []>} : vector<8x24xf32>, vector<24x80xf32>, vector<8x80xf32> -> vector<8x80xf32>
    %114 = arith.addf %109, %113 : vector<8x80xf32>
    %115 = arith.addf %55, %114 : vector<8x80xf32>
    %116 = arith.mulf %114, %114 : vector<8x80xf32>
    %117 = arith.addf %57, %116 : vector<8x80xf32>
    %118 = arith.truncf %114 : vector<8x80xf32> to vector<8x80xbf16>
    %c0_94 = arith.constant 0 : index
    %c1_95 = arith.constant 1 : index
    %c0_96 = arith.constant 0 : index
    %c0_97 = arith.constant 0 : index
    %119 = vector.load %arg7[%c0_94, %c1_95, %c0_96, %c0_97] : memref<1x4x8x80xbf16, #tpu.memory_space<vmem>>, vector<1x1x8x80xbf16>
    %120 = vector.shape_cast %119 : vector<1x1x8x80xbf16> to vector<8x80xbf16>
    %121 = vector.shape_cast %118 : vector<8x80xbf16> to vector<1x1x8x80xbf16>
    tpu.vector_store %arg7[%c0_94, %c1_95, %c0_96, %c0_97], %121 {strides = array<i32>} : memref<1x4x8x80xbf16, #tpu.memory_space<vmem>>, vector<1x1x8x80xbf16>,
    %c0_98 = arith.constant 0 : index
    %c2_99 = arith.constant 2 : index
    %c0_100 = arith.constant 0 : index
    %c0_101 = arith.constant 0 : index
    %122 = vector.load %arg2[%c0_98, %c2_99, %c0_100, %c0_101] : memref<1x4x8x128xf32, #tpu.memory_space<vmem>>, vector<1x1x8x128xf32>
    %123 = vector.shape_cast %122 : vector<1x1x8x128xf32> to vector<8x128xf32>
    %c0_102 = arith.constant 0 : index
    %c3_103 = arith.constant 3 : index
    %c0_104 = arith.constant 0 : index
    %c0_105 = arith.constant 0 : index
    %124 = vector.load %arg2[%c0_102, %c3_103, %c0_104, %c0_105] : memref<1x4x8x128xf32, #tpu.memory_space<vmem>>, vector<1x1x8x128xf32>
    %125 = vector.shape_cast %124 : vector<1x1x8x128xf32> to vector<8x128xf32>
    %c0_106 = arith.constant 0 : index
    %c0_107 = arith.constant 0 : index
    %c0_108 = arith.constant 0 : index
    %c0_109 = arith.constant 0 : index
    %126 = vector.load %arg3[%c0_106, %c0_107, %c0_108, %c0_109] : memref<1x1x8x128xf32, #tpu.memory_space<vmem>>, vector<1x1x8x128xf32>
    %127 = vector.shape_cast %126 : vector<1x1x8x128xf32> to vector<8x128xf32>
    %128 = tpu.concatenate %123, %125, %127 in 0 : vector<8x128xf32>, vector<8x128xf32>, vector<8x128xf32> -> vector<24x128xf32>
    %cst_110 = arith.constant 0.000000e+00 : f32
    %129 = vector.broadcast %cst_110 : f32 to vector<8x80xf32>
    %130 = vector.extract_strided_slice %128 {offsets = [0, 0], sizes = [24, 80], strides = [1, 1]} : vector<24x128xf32> to vector<24x80xf32>
    %c0_111 = arith.constant 0 : index
    %c0_112 = arith.constant 0 : index
    %c0_113 = arith.constant 0 : index
    %131 = vector.load %arg5[%c0_111, %c0_112, %c0_113] : memref<9x8x24xf32, #tpu.memory_space<vmem>>, vector<1x8x24xf32>
    %132 = vector.shape_cast %131 : vector<1x8x24xf32> to vector<8x24xf32>
    %cst_114 = arith.constant dense<0.000000e+00> : vector<8x80xf32>
    %133 = tpu.matmul %132, %130, %cst_114 {dimension_numbers = #tpu.dot_dimension_numbers<[1], [0], [0], [1], [0, 0, 1, 1], [], []>} : vector<8x24xf32>, vector<24x80xf32>, vector<8x80xf32> -> vector<8x80xf32>
    %134 = arith.addf %129, %133 : vector<8x80xf32>
    %135 = vector.extract_strided_slice %128 {offsets = [0, 1], sizes = [24, 80], strides = [1, 1]} : vector<24x128xf32> to vector<24x80xf32>
    %c1_115 = arith.constant 1 : index
    %c0_116 = arith.constant 0 : index
    %c0_117 = arith.constant 0 : index
    %136 = vector.load %arg5[%c1_115, %c0_116, %c0_117] : memref<9x8x24xf32, #tpu.memory_space<vmem>>, vector<1x8x24xf32>
    %137 = vector.shape_cast %136 : vector<1x8x24xf32> to vector<8x24xf32>
    %cst_118 = arith.constant dense<0.000000e+00> : vector<8x80xf32>
    %138 = tpu.matmul %137, %135, %cst_118 {dimension_numbers = #tpu.dot_dimension_numbers<[1], [0], [0], [1], [0, 0, 1, 1], [], []>} : vector<8x24xf32>, vector<24x80xf32>, vector<8x80xf32> -> vector<8x80xf32>
    %139 = arith.addf %134, %138 : vector<8x80xf32>
    %140 = vector.extract_strided_slice %128 {offsets = [0, 2], sizes = [24, 80], strides = [1, 1]} : vector<24x128xf32> to vector<24x80xf32>
    %c2_119 = arith.constant 2 : index
    %c0_120 = arith.constant 0 : index
    %c0_121 = arith.constant 0 : index
    %141 = vector.load %arg5[%c2_119, %c0_120, %c0_121] : memref<9x8x24xf32, #tpu.memory_space<vmem>>, vector<1x8x24xf32>
    %142 = vector.shape_cast %141 : vector<1x8x24xf32> to vector<8x24xf32>
    %cst_122 = arith.constant dense<0.000000e+00> : vector<8x80xf32>
    %143 = tpu.matmul %142, %140, %cst_122 {dimension_numbers = #tpu.dot_dimension_numbers<[1], [0], [0], [1], [0, 0, 1, 1], [], []>} : vector<8x24xf32>, vector<24x80xf32>, vector<8x80xf32> -> vector<8x80xf32>
    %144 = arith.addf %139, %143 : vector<8x80xf32>
    %145 = vector.extract_strided_slice %128 {offsets = [0, 10], sizes = [24, 80], strides = [1, 1]} : vector<24x128xf32> to vector<24x80xf32>
    %c3_123 = arith.constant 3 : index
    %c0_124 = arith.constant 0 : index
    %c0_125 = arith.constant 0 : index
    %146 = vector.load %arg5[%c3_123, %c0_124, %c0_125] : memref<9x8x24xf32, #tpu.memory_space<vmem>>, vector<1x8x24xf32>
    %147 = vector.shape_cast %146 : vector<1x8x24xf32> to vector<8x24xf32>
    %cst_126 = arith.constant dense<0.000000e+00> : vector<8x80xf32>
    %148 = tpu.matmul %147, %145, %cst_126 {dimension_numbers = #tpu.dot_dimension_numbers<[1], [0], [0], [1], [0, 0, 1, 1], [], []>} : vector<8x24xf32>, vector<24x80xf32>, vector<8x80xf32> -> vector<8x80xf32>
    %149 = arith.addf %144, %148 : vector<8x80xf32>
    %150 = vector.extract_strided_slice %128 {offsets = [0, 11], sizes = [24, 80], strides = [1, 1]} : vector<24x128xf32> to vector<24x80xf32>
    %c4_127 = arith.constant 4 : index
    %c0_128 = arith.constant 0 : index
    %c0_129 = arith.constant 0 : index
    %151 = vector.load %arg5[%c4_127, %c0_128, %c0_129] : memref<9x8x24xf32, #tpu.memory_space<vmem>>, vector<1x8x24xf32>
    %152 = vector.shape_cast %151 : vector<1x8x24xf32> to vector<8x24xf32>
    %cst_130 = arith.constant dense<0.000000e+00> : vector<8x80xf32>
    %153 = tpu.matmul %152, %150, %cst_130 {dimension_numbers = #tpu.dot_dimension_numbers<[1], [0], [0], [1], [0, 0, 1, 1], [], []>} : vector<8x24xf32>, vector<24x80xf32>, vector<8x80xf32> -> vector<8x80xf32>
    %154 = arith.addf %149, %153 : vector<8x80xf32>
    %155 = vector.extract_strided_slice %128 {offsets = [0, 12], sizes = [24, 80], strides = [1, 1]} : vector<24x128xf32> to vector<24x80xf32>
    %c5_131 = arith.constant 5 : index
    %c0_132 = arith.constant 0 : index
    %c0_133 = arith.constant 0 : index
    %156 = vector.load %arg5[%c5_131, %c0_132, %c0_133] : memref<9x8x24xf32, #tpu.memory_space<vmem>>, vector<1x8x24xf32>
    %157 = vector.shape_cast %156 : vector<1x8x24xf32> to vector<8x24xf32>
    %cst_134 = arith.constant dense<0.000000e+00> : vector<8x80xf32>
    %158 = tpu.matmul %157, %155, %cst_134 {dimension_numbers = #tpu.dot_dimension_numbers<[1], [0], [0], [1], [0, 0, 1, 1], [], []>} : vector<8x24xf32>, vector<24x80xf32>, vector<8x80xf32> -> vector<8x80xf32>
    %159 = arith.addf %154, %158 : vector<8x80xf32>
    %160 = vector.extract_strided_slice %128 {offsets = [0, 20], sizes = [24, 80], strides = [1, 1]} : vector<24x128xf32> to vector<24x80xf32>
    %c6_135 = arith.constant 6 : index
    %c0_136 = arith.constant 0 : index
    %c0_137 = arith.constant 0 : index
    %161 = vector.load %arg5[%c6_135, %c0_136, %c0_137] : memref<9x8x24xf32, #tpu.memory_space<vmem>>, vector<1x8x24xf32>
    %162 = vector.shape_cast %161 : vector<1x8x24xf32> to vector<8x24xf32>
    %cst_138 = arith.constant dense<0.000000e+00> : vector<8x80xf32>
    %163 = tpu.matmul %162, %160, %cst_138 {dimension_numbers = #tpu.dot_dimension_numbers<[1], [0], [0], [1], [0, 0, 1, 1], [], []>} : vector<8x24xf32>, vector<24x80xf32>, vector<8x80xf32> -> vector<8x80xf32>
    %164 = arith.addf %159, %163 : vector<8x80xf32>
    %165 = vector.extract_strided_slice %128 {offsets = [0, 21], sizes = [24, 80], strides = [1, 1]} : vector<24x128xf32> to vector<24x80xf32>
    %c7_139 = arith.constant 7 : index
    %c0_140 = arith.constant 0 : index
    %c0_141 = arith.constant 0 : index
    %166 = vector.load %arg5[%c7_139, %c0_140, %c0_141] : memref<9x8x24xf32, #tpu.memory_space<vmem>>, vector<1x8x24xf32>
    %167 = vector.shape_cast %166 : vector<1x8x24xf32> to vector<8x24xf32>
    %cst_142 = arith.constant dense<0.000000e+00> : vector<8x80xf32>
    %168 = tpu.matmul %167, %165, %cst_142 {dimension_numbers = #tpu.dot_dimension_numbers<[1], [0], [0], [1], [0, 0, 1, 1], [], []>} : vector<8x24xf32>, vector<24x80xf32>, vector<8x80xf32> -> vector<8x80xf32>
    %169 = arith.addf %164, %168 : vector<8x80xf32>
    %170 = vector.extract_strided_slice %128 {offsets = [0, 22], sizes = [24, 80], strides = [1, 1]} : vector<24x128xf32> to vector<24x80xf32>
    %c8_143 = arith.constant 8 : index
    %c0_144 = arith.constant 0 : index
    %c0_145 = arith.constant 0 : index
    %171 = vector.load %arg5[%c8_143, %c0_144, %c0_145] : memref<9x8x24xf32, #tpu.memory_space<vmem>>, vector<1x8x24xf32>
    %172 = vector.shape_cast %171 : vector<1x8x24xf32> to vector<8x24xf32>
    %cst_146 = arith.constant dense<0.000000e+00> : vector<8x80xf32>
    %173 = tpu.matmul %172, %170, %cst_146 {dimension_numbers = #tpu.dot_dimension_numbers<[1], [0], [0], [1], [0, 0, 1, 1], [], []>} : vector<8x24xf32>, vector<24x80xf32>, vector<8x80xf32> -> vector<8x80xf32>
    %174 = arith.addf %169, %173 : vector<8x80xf32>
    %175 = arith.addf %115, %174 : vector<8x80xf32>
    %176 = arith.mulf %174, %174 : vector<8x80xf32>
    %177 = arith.addf %117, %176 : vector<8x80xf32>
    %178 = arith.truncf %174 : vector<8x80xf32> to vector<8x80xbf16>
    %c0_147 = arith.constant 0 : index
    %c2_148 = arith.constant 2 : index
    %c0_149 = arith.constant 0 : index
    %c0_150 = arith.constant 0 : index
    %179 = vector.load %arg7[%c0_147, %c2_148, %c0_149, %c0_150] : memref<1x4x8x80xbf16, #tpu.memory_space<vmem>>, vector<1x1x8x80xbf16>
    %180 = vector.shape_cast %179 : vector<1x1x8x80xbf16> to vector<8x80xbf16>
    %181 = vector.shape_cast %178 : vector<8x80xbf16> to vector<1x1x8x80xbf16>
    tpu.vector_store %arg7[%c0_147, %c2_148, %c0_149, %c0_150], %181 {strides = array<i32>} : memref<1x4x8x80xbf16, #tpu.memory_space<vmem>>, vector<1x1x8x80xbf16>,
    %c0_151 = arith.constant 0 : index
    %c3_152 = arith.constant 3 : index
    %c0_153 = arith.constant 0 : index
    %c0_154 = arith.constant 0 : index
    %182 = vector.load %arg2[%c0_151, %c3_152, %c0_153, %c0_154] : memref<1x4x8x128xf32, #tpu.memory_space<vmem>>, vector<1x1x8x128xf32>
    %183 = vector.shape_cast %182 : vector<1x1x8x128xf32> to vector<8x128xf32>
    %c0_155 = arith.constant 0 : index
    %c0_156 = arith.constant 0 : index
    %c0_157 = arith.constant 0 : index
    %c0_158 = arith.constant 0 : index
    %184 = vector.load %arg3[%c0_155, %c0_156, %c0_157, %c0_158] : memref<1x1x8x128xf32, #tpu.memory_space<vmem>>, vector<1x1x8x128xf32>
    %185 = vector.shape_cast %184 : vector<1x1x8x128xf32> to vector<8x128xf32>
    %c0_159 = arith.constant 0 : index
    %c0_160 = arith.constant 0 : index
    %c0_161 = arith.constant 0 : index
    %c0_162 = arith.constant 0 : index
    %186 = vector.load %arg4[%c0_159, %c0_160, %c0_161, %c0_162] : memref<1x1x8x128xf32, #tpu.memory_space<vmem>>, vector<1x1x8x128xf32>
    %187 = vector.shape_cast %186 : vector<1x1x8x128xf32> to vector<8x128xf32>
    %188 = tpu.concatenate %183, %185, %187 in 0 : vector<8x128xf32>, vector<8x128xf32>, vector<8x128xf32> -> vector<24x128xf32>
    %cst_163 = arith.constant 0.000000e+00 : f32
    %189 = vector.broadcast %cst_163 : f32 to vector<8x80xf32>
    %190 = vector.extract_strided_slice %188 {offsets = [0, 0], sizes = [24, 80], strides = [1, 1]} : vector<24x128xf32> to vector<24x80xf32>
    %c0_164 = arith.constant 0 : index
    %c0_165 = arith.constant 0 : index
    %c0_166 = arith.constant 0 : index
    %191 = vector.load %arg5[%c0_164, %c0_165, %c0_166] : memref<9x8x24xf32, #tpu.memory_space<vmem>>, vector<1x8x24xf32>
    %192 = vector.shape_cast %191 : vector<1x8x24xf32> to vector<8x24xf32>
    %cst_167 = arith.constant dense<0.000000e+00> : vector<8x80xf32>
    %193 = tpu.matmul %192, %190, %cst_167 {dimension_numbers = #tpu.dot_dimension_numbers<[1], [0], [0], [1], [0, 0, 1, 1], [], []>} : vector<8x24xf32>, vector<24x80xf32>, vector<8x80xf32> -> vector<8x80xf32>
    %194 = arith.addf %189, %193 : vector<8x80xf32>
    %195 = vector.extract_strided_slice %188 {offsets = [0, 1], sizes = [24, 80], strides = [1, 1]} : vector<24x128xf32> to vector<24x80xf32>
    %c1_168 = arith.constant 1 : index
    %c0_169 = arith.constant 0 : index
    %c0_170 = arith.constant 0 : index
    %196 = vector.load %arg5[%c1_168, %c0_169, %c0_170] : memref<9x8x24xf32, #tpu.memory_space<vmem>>, vector<1x8x24xf32>
    %197 = vector.shape_cast %196 : vector<1x8x24xf32> to vector<8x24xf32>
    %cst_171 = arith.constant dense<0.000000e+00> : vector<8x80xf32>
    %198 = tpu.matmul %197, %195, %cst_171 {dimension_numbers = #tpu.dot_dimension_numbers<[1], [0], [0], [1], [0, 0, 1, 1], [], []>} : vector<8x24xf32>, vector<24x80xf32>, vector<8x80xf32> -> vector<8x80xf32>
    %199 = arith.addf %194, %198 : vector<8x80xf32>
    %200 = vector.extract_strided_slice %188 {offsets = [0, 2], sizes = [24, 80], strides = [1, 1]} : vector<24x128xf32> to vector<24x80xf32>
    %c2_172 = arith.constant 2 : index
    %c0_173 = arith.constant 0 : index
    %c0_174 = arith.constant 0 : index
    %201 = vector.load %arg5[%c2_172, %c0_173, %c0_174] : memref<9x8x24xf32, #tpu.memory_space<vmem>>, vector<1x8x24xf32>
    %202 = vector.shape_cast %201 : vector<1x8x24xf32> to vector<8x24xf32>
    %cst_175 = arith.constant dense<0.000000e+00> : vector<8x80xf32>
    %203 = tpu.matmul %202, %200, %cst_175 {dimension_numbers = #tpu.dot_dimension_numbers<[1], [0], [0], [1], [0, 0, 1, 1], [], []>} : vector<8x24xf32>, vector<24x80xf32>, vector<8x80xf32> -> vector<8x80xf32>
    %204 = arith.addf %199, %203 : vector<8x80xf32>
    %205 = vector.extract_strided_slice %188 {offsets = [0, 10], sizes = [24, 80], strides = [1, 1]} : vector<24x128xf32> to vector<24x80xf32>
    %c3_176 = arith.constant 3 : index
    %c0_177 = arith.constant 0 : index
    %c0_178 = arith.constant 0 : index
    %206 = vector.load %arg5[%c3_176, %c0_177, %c0_178] : memref<9x8x24xf32, #tpu.memory_space<vmem>>, vector<1x8x24xf32>
    %207 = vector.shape_cast %206 : vector<1x8x24xf32> to vector<8x24xf32>
    %cst_179 = arith.constant dense<0.000000e+00> : vector<8x80xf32>
    %208 = tpu.matmul %207, %205, %cst_179 {dimension_numbers = #tpu.dot_dimension_numbers<[1], [0], [0], [1], [0, 0, 1, 1], [], []>} : vector<8x24xf32>, vector<24x80xf32>, vector<8x80xf32> -> vector<8x80xf32>
    %209 = arith.addf %204, %208 : vector<8x80xf32>
    %210 = vector.extract_strided_slice %188 {offsets = [0, 11], sizes = [24, 80], strides = [1, 1]} : vector<24x128xf32> to vector<24x80xf32>
    %c4_180 = arith.constant 4 : index
    %c0_181 = arith.constant 0 : index
    %c0_182 = arith.constant 0 : index
    %211 = vector.load %arg5[%c4_180, %c0_181, %c0_182] : memref<9x8x24xf32, #tpu.memory_space<vmem>>, vector<1x8x24xf32>
    %212 = vector.shape_cast %211 : vector<1x8x24xf32> to vector<8x24xf32>
    %cst_183 = arith.constant dense<0.000000e+00> : vector<8x80xf32>
    %213 = tpu.matmul %212, %210, %cst_183 {dimension_numbers = #tpu.dot_dimension_numbers<[1], [0], [0], [1], [0, 0, 1, 1], [], []>} : vector<8x24xf32>, vector<24x80xf32>, vector<8x80xf32> -> vector<8x80xf32>
    %214 = arith.addf %209, %213 : vector<8x80xf32>
    %215 = vector.extract_strided_slice %188 {offsets = [0, 12], sizes = [24, 80], strides = [1, 1]} : vector<24x128xf32> to vector<24x80xf32>
    %c5_184 = arith.constant 5 : index
    %c0_185 = arith.constant 0 : index
    %c0_186 = arith.constant 0 : index
    %216 = vector.load %arg5[%c5_184, %c0_185, %c0_186] : memref<9x8x24xf32, #tpu.memory_space<vmem>>, vector<1x8x24xf32>
    %217 = vector.shape_cast %216 : vector<1x8x24xf32> to vector<8x24xf32>
    %cst_187 = arith.constant dense<0.000000e+00> : vector<8x80xf32>
    %218 = tpu.matmul %217, %215, %cst_187 {dimension_numbers = #tpu.dot_dimension_numbers<[1], [0], [0], [1], [0, 0, 1, 1], [], []>} : vector<8x24xf32>, vector<24x80xf32>, vector<8x80xf32> -> vector<8x80xf32>
    %219 = arith.addf %214, %218 : vector<8x80xf32>
    %220 = vector.extract_strided_slice %188 {offsets = [0, 20], sizes = [24, 80], strides = [1, 1]} : vector<24x128xf32> to vector<24x80xf32>
    %c6_188 = arith.constant 6 : index
    %c0_189 = arith.constant 0 : index
    %c0_190 = arith.constant 0 : index
    %221 = vector.load %arg5[%c6_188, %c0_189, %c0_190] : memref<9x8x24xf32, #tpu.memory_space<vmem>>, vector<1x8x24xf32>
    %222 = vector.shape_cast %221 : vector<1x8x24xf32> to vector<8x24xf32>
    %cst_191 = arith.constant dense<0.000000e+00> : vector<8x80xf32>
    %223 = tpu.matmul %222, %220, %cst_191 {dimension_numbers = #tpu.dot_dimension_numbers<[1], [0], [0], [1], [0, 0, 1, 1], [], []>} : vector<8x24xf32>, vector<24x80xf32>, vector<8x80xf32> -> vector<8x80xf32>
    %224 = arith.addf %219, %223 : vector<8x80xf32>
    %225 = vector.extract_strided_slice %188 {offsets = [0, 21], sizes = [24, 80], strides = [1, 1]} : vector<24x128xf32> to vector<24x80xf32>
    %c7_192 = arith.constant 7 : index
    %c0_193 = arith.constant 0 : index
    %c0_194 = arith.constant 0 : index
    %226 = vector.load %arg5[%c7_192, %c0_193, %c0_194] : memref<9x8x24xf32, #tpu.memory_space<vmem>>, vector<1x8x24xf32>
    %227 = vector.shape_cast %226 : vector<1x8x24xf32> to vector<8x24xf32>
    %cst_195 = arith.constant dense<0.000000e+00> : vector<8x80xf32>
    %228 = tpu.matmul %227, %225, %cst_195 {dimension_numbers = #tpu.dot_dimension_numbers<[1], [0], [0], [1], [0, 0, 1, 1], [], []>} : vector<8x24xf32>, vector<24x80xf32>, vector<8x80xf32> -> vector<8x80xf32>
    %229 = arith.addf %224, %228 : vector<8x80xf32>
    %230 = vector.extract_strided_slice %188 {offsets = [0, 22], sizes = [24, 80], strides = [1, 1]} : vector<24x128xf32> to vector<24x80xf32>
    %c8_196 = arith.constant 8 : index
    %c0_197 = arith.constant 0 : index
    %c0_198 = arith.constant 0 : index
    %231 = vector.load %arg5[%c8_196, %c0_197, %c0_198] : memref<9x8x24xf32, #tpu.memory_space<vmem>>, vector<1x8x24xf32>
    %232 = vector.shape_cast %231 : vector<1x8x24xf32> to vector<8x24xf32>
    %cst_199 = arith.constant dense<0.000000e+00> : vector<8x80xf32>
    %233 = tpu.matmul %232, %230, %cst_199 {dimension_numbers = #tpu.dot_dimension_numbers<[1], [0], [0], [1], [0, 0, 1, 1], [], []>} : vector<8x24xf32>, vector<24x80xf32>, vector<8x80xf32> -> vector<8x80xf32>
    %234 = arith.addf %229, %233 : vector<8x80xf32>
    %235 = arith.addf %175, %234 : vector<8x80xf32>
    %236 = arith.mulf %234, %234 : vector<8x80xf32>
    %237 = arith.addf %177, %236 : vector<8x80xf32>
    %238 = arith.truncf %234 : vector<8x80xf32> to vector<8x80xbf16>
    %c0_200 = arith.constant 0 : index
    %c3_201 = arith.constant 3 : index
    %c0_202 = arith.constant 0 : index
    %c0_203 = arith.constant 0 : index
    %239 = vector.load %arg7[%c0_200, %c3_201, %c0_202, %c0_203] : memref<1x4x8x80xbf16, #tpu.memory_space<vmem>>, vector<1x1x8x80xbf16>
    %240 = vector.shape_cast %239 : vector<1x1x8x80xbf16> to vector<8x80xbf16>
    %241 = vector.shape_cast %238 : vector<8x80xbf16> to vector<1x1x8x80xbf16>
    tpu.vector_store %arg7[%c0_200, %c3_201, %c0_202, %c0_203], %241 {strides = array<i32>} : memref<1x4x8x80xbf16, #tpu.memory_space<vmem>>, vector<1x1x8x80xbf16>,
    %c0_204 = arith.constant 0 : index
    %c0_205 = arith.constant 0 : index
    %242 = vector.load %arg6[%c0_204, %c0_205] : memref<80x1xf32, #tpu.memory_space<vmem>>, vector<80x1xf32>
    %cst_206 = arith.constant dense<0.000000e+00> : vector<8x1xf32>
    %243 = tpu.matmul %235, %242, %cst_206 {dimension_numbers = #tpu.dot_dimension_numbers<[1], [0], [0], [1], [0, 0, 1, 1], [], []>} : vector<8x80xf32>, vector<80x1xf32>, vector<8x1xf32> -> vector<8x1xf32>
    %c0_207 = arith.constant 0 : index
    %c0_208 = arith.constant 0 : index
    %c0_209 = arith.constant 0 : index
    %c0_210 = arith.constant 0 : index
    %244 = vector.load %arg8[%c0_207, %c0_208, %c0_209, %c0_210] : memref<1x1x8x1xf32, #tpu.memory_space<vmem>>, vector<1x1x8x1xf32>
    %245 = vector.shape_cast %244 : vector<1x1x8x1xf32> to vector<8x1xf32>
    %246 = vector.shape_cast %243 : vector<8x1xf32> to vector<1x1x8x1xf32>
    tpu.vector_store %arg8[%c0_207, %c0_208, %c0_209, %c0_210], %246 {strides = array<i32>} : memref<1x1x8x1xf32, #tpu.memory_space<vmem>>, vector<1x1x8x1xf32>,
    %cst_211 = arith.constant dense<0.000000e+00> : vector<8x1xf32>
    %247 = tpu.matmul %237, %242, %cst_211 {dimension_numbers = #tpu.dot_dimension_numbers<[1], [0], [0], [1], [0, 0, 1, 1], [], []>} : vector<8x80xf32>, vector<80x1xf32>, vector<8x1xf32> -> vector<8x1xf32>
    %c0_212 = arith.constant 0 : index
    %c0_213 = arith.constant 0 : index
    %c0_214 = arith.constant 0 : index
    %c0_215 = arith.constant 0 : index
    %248 = vector.load %arg9[%c0_212, %c0_213, %c0_214, %c0_215] : memref<1x1x8x1xf32, #tpu.memory_space<vmem>>, vector<1x1x8x1xf32>
    %249 = vector.shape_cast %248 : vector<1x1x8x1xf32> to vector<8x1xf32>
    %250 = vector.shape_cast %247 : vector<8x1xf32> to vector<1x1x8x1xf32>
    tpu.vector_store %arg9[%c0_212, %c0_213, %c0_214, %c0_215], %250 {strides = array<i32>} : memref<1x1x8x1xf32, #tpu.memory_space<vmem>>, vector<1x1x8x1xf32>,
    return
  }
  func.func @transform_0(%arg0: i32, %arg1: i32) -> (i32, i32, i32, i32) {
    %c0_i32 = arith.constant 0 : i32
    %c0_i32_0 = arith.constant 0 : i32
    %c0_i32_1 = arith.constant 0 : i32
    return %arg0, %arg1, %c0_i32, %c0_i32_0 : i32, i32, i32, i32
  }
  func.func @transform_1(%arg0: i32, %arg1: i32) -> (i32, i32, i32, i32) {
    %c1_i32 = arith.constant 1 : i32
    %0 = arith.addi %arg1, %c1_i32 : i32
    %c4_i32 = arith.constant 4 : i32
    %1 = arith.muli %0, %c4_i32 : i32
    %c0_i32 = arith.constant 0 : i32
    %c0_i32_0 = arith.constant 0 : i32
    %c0_i32_1 = arith.constant 0 : i32
    return %arg0, %1, %c0_i32, %c0_i32_0 : i32, i32, i32, i32
  }
  func.func @transform_2(%arg0: i32, %arg1: i32) -> (i32, i32, i32, i32) {
    %c1_i32 = arith.constant 1 : i32
    %0 = arith.addi %arg1, %c1_i32 : i32
    %c4_i32 = arith.constant 4 : i32
    %1 = arith.muli %0, %c4_i32 : i32
    %c1_i32_0 = arith.constant 1 : i32
    %2 = arith.addi %1, %c1_i32_0 : i32
    %c0_i32 = arith.constant 0 : i32
    %c0_i32_1 = arith.constant 0 : i32
    %c0_i32_2 = arith.constant 0 : i32
    return %arg0, %2, %c0_i32, %c0_i32_1 : i32, i32, i32, i32
  }
  func.func @transform_3(%arg0: i32, %arg1: i32) -> (i32, i32, i32) {
    %c0_i32 = arith.constant 0 : i32
    %c0_i32_0 = arith.constant 0 : i32
    %c0_i32_1 = arith.constant 0 : i32
    %c0_i32_2 = arith.constant 0 : i32
    return %c0_i32, %c0_i32_0, %c0_i32_1 : i32, i32, i32
  }
  func.func @transform_4(%arg0: i32, %arg1: i32) -> (i32, i32) {
    %c0_i32 = arith.constant 0 : i32
    %c0_i32_0 = arith.constant 0 : i32
    %c0_i32_1 = arith.constant 0 : i32
    return %c0_i32, %c0_i32_0 : i32, i32
  }
  func.func @transform_5(%arg0: i32, %arg1: i32) -> (i32, i32, i32, i32) {
    %c0_i32 = arith.constant 0 : i32
    %c0_i32_0 = arith.constant 0 : i32
    %c0_i32_1 = arith.constant 0 : i32
    return %arg0, %arg1, %c0_i32, %c0_i32_0 : i32, i32, i32, i32
  }
  func.func @transform_6(%arg0: i32, %arg1: i32) -> (i32, i32, i32, i32) {
    %c0_i32 = arith.constant 0 : i32
    %c0_i32_0 = arith.constant 0 : i32
    %c0_i32_1 = arith.constant 0 : i32
    return %arg0, %arg1, %c0_i32, %c0_i32_0 : i32, i32, i32, i32
  }
  func.func @transform_7(%arg0: i32, %arg1: i32) -> (i32, i32, i32, i32) {
    %c0_i32 = arith.constant 0 : i32
    %c0_i32_0 = arith.constant 0 : i32
    %c0_i32_1 = arith.constant 0 : i32
    return %arg0, %arg1, %c0_i32, %c0_i32_0 : i32, i32, i32, i32
  }
}

</mosaic_0001>

<llo_original>
// kernel: tpu_custom_call.1
$region0: #{tpu_custom_call.1}
  #allocation0 [shape = 'u32[]', space=smem, size = 0x4, offset = 0x4, fixed_abs, tag = 'smem constant byte address 0x4 - core index']
  #allocation1 [shape = 'u32[144,128]{1,0:T(1,128)}', space=vmem, size = 0x12000, scoped, tag = 'internal scratch']
  %s0 = inlined_call_operand.hbm [shape: f32[2,10,8,128], index: 0, kind: input, shape index: {}]
  %s1 = inlined_call_operand.hbm [shape: f32[2,10,8,128], index: 1, kind: input, shape index: {}]
  %s2 = inlined_call_operand.hbm [shape: f32[2,10,8,128], index: 2, kind: input, shape index: {}]
  %s3 = inlined_call_operand.vmem [shape: f32[9,8,24], index: 3, kind: input, shape index: {}]
  %s4 = inlined_call_operand.vmem [shape: f32[80,1], index: 4, kind: input, shape index: {}]
  %s5 = inlined_call_operand.hbm [shape: bf16[2,8,8,80], index: 5, kind: output, shape index: {0}]
  %s6 = inlined_call_operand.vmem [shape: f32[2,2,8,1], index: 6, kind: output, shape index: {1}]
  %s7 = inlined_call_operand.vmem [shape: f32[2,2,8,1], index: 7, kind: output, shape index: {2}]
  %8 = xla_tuple %s5, %s6, %s7
  %s9 = sld [smem:[#allocation0]]
  $region81: #{tpu_custom_call.1} parent=0
    _
  %s11 = ssub.s32 1, %s9
  %s12 = scalar_select 0, %s11, %s9
  $region1: #{tpu_custom_call.1} parent=0
    #allocation2 [shape = 'u8[32768]{0}', space=vmem, size = 0x8000, scoped, tag = 'input window, operand 0']
    #allocation3 [shape = 's32[2]{0}', space=sflag, size = 0x8, scoped, tag = 'scoped memory for tpu_custom_call.1']
    #allocation4 [shape = 's32[2]{0}', space=sflag, size = 0x8, scoped, tag = 'scoped memory for tpu_custom_call.1']
    #allocation5 [shape = 'u8[8192]{0}', space=vmem, size = 0x2000, scoped, tag = 'input window, operand 1']
    #allocation6 [shape = 's32[2]{0}', space=sflag, size = 0x8, scoped, tag = 'scoped memory for tpu_custom_call.1']
    #allocation7 [shape = 'u8[8192]{0}', space=vmem, size = 0x2000, scoped, tag = 'input window, operand 2']
    #allocation8 [shape = 'u8[16384]{0}', space=vmem, size = 0x4000, scoped, tag = 'output window, operand 0']
    %13 = vsyncpa [#allocation3], 0
    %s14 = scalar_lea.sflag [#allocation3], 1
    %15 = vsyncpa %s14, 0
    %16 = vsyncpa [#allocation6], 0
    %s17 = scalar_lea.sflag [#allocation6], 1
    %18 = vsyncpa %s17, 0
    %19 = vsyncpa [#allocation4], 0
    %s20 = scalar_lea.sflag [#allocation4], 1
    %21 = vsyncpa %s20, 0
    loop: start=0, step=1, limit=6
    $region2: #{tpu_custom_call.1} parent=1 // loop_pre_header
      _
    $region3: #{tpu_custom_call.1} parent=1 // loop_header
      %s23 = sphi 0, %s27
      %p24 = scmp.ge.s32.totalorder %s23, 6
      %s30 = sphi 0, %s42
      %s31 = sphi 0, %s38
      %s32 = sphi 0, %s30
      %s33 = sphi 0, %s31
      %s34 = sphi 0, %s32
      %s35 = sphi 0, %s33
      %s47 = sphi 0, %s49
      %s50 = sphi 0, %s47
      %s51 = sphi 0, %s50
      %s67 = sphi 0, %s51
      %s79 = sphi 0, %s81
      %s82 = sphi 0, %s79
      %s83 = sphi 0, %s82
      %s99 = sphi 0, %s83
      %s113 = sphi 0, %s115
      %s116 = sphi 0, %s113
      %s117 = sphi 0, %s116
      %s133 = sphi 0, %s117
      %s137 = sphi 0, %s137
      %s139 = sphi 0, %s137
      %s140 = sphi 0, %s139
      %s154 = sphi 0, %s140
      %s158 = sphi 0, %s158
      %s160 = sphi 0, %s158
      %s161 = sphi 0, %s160
      %s175 = sphi 0, %s161
      %s183 = sphi 0, %s185
      %s186 = sphi 0, %s183
      %s187 = sphi 0, %s186
      %s203 = sphi 0, %s187
      %s211 = sphi 0, %s213
      %s214 = sphi 0, %s211
      %s215 = sphi 0, %s214
      %s231 = sphi 0, %s215
      %s239 = sphi 0, %s241
      %s242 = sphi 0, %s239
      %s243 = sphi 0, %s242
      %s259 = sphi 0, %s243
    $region4: #{tpu_custom_call.1} parent=1 // loop_header_branch
      %26 = sbr.rel (%p24) target = $region8
    $region5: #{tpu_custom_call.1} parent=1 // loop_body
      %s28 = ssub.s32 %s23, 1
      %s29 = ssub.s32 %s23, 2
      %s36 = sadd.s32 1, %s31
      %p37 = scmp.ge.s32.totalorder %s36, 2
      %s38 = scalar_select %p37, 0, %s36
      %s39 = sadd.s32 1, %s30
      %s40 = scalar_select %p37, %s39, %s30
      %p41 = scmp.ge.s32.totalorder %s40, 2
      %s42 = scalar_select %p41, 0, %s40
      %s43 = ssub.s32 %s30, %s42
      %s44 = ssub.s32 %s31, %s38
      %s45 = sor.u32 %s43, %s44
      %p46 = scmp.eq.s32.totalorder %s45, 0
      %s48 = sadd.s32 %s47, 1
      %s49 = scalar_select %p46, %s47, %s48
      %p52 = pneg %p46
      %p53 = scmp.eq.s32.totalorder %s23, 3
      %p54 = por %p52, %p53
      %p55 = scmp.ne.s32.totalorder %s47, %s50
      %p56 = scmp.eq.s32.totalorder %s23, 0
      %p57 = por %p55, %p56
      %p58 = scmp.ne.s32.totalorder %s47, %s50
      %p59 = scmp.eq.s32.totalorder %s28, 3
      %p60 = por %p58, %p59
      %p61 = scmp.ne.s32.totalorder %s50, %s51
      %p62 = scmp.eq.s32.totalorder %s28, 0
      %p63 = por %p61, %p62
      %p64 = scmp.ne.s32.totalorder %s50, %s51
      %p65 = scmp.eq.s32.totalorder %s29, 3
      %p66 = por %p64, %p65
      %p68 = scmp.ne.s32.totalorder %s51, %s67
      %p69 = scmp.eq.s32.totalorder %s29, 0
      %p70 = por %p68, %p69
      %s71 = sadd.s32 %s31, 1
      %s72 = smul.u32 %s71, 4
      %s73 = sadd.s32 %s38, 1
      %s74 = smul.u32 %s73, 4
      %s75 = ssub.s32 %s30, %s42
      %s76 = ssub.s32 %s72, %s74
      %s77 = sor.u32 %s75, %s76
      %p78 = scmp.eq.s32.totalorder %s77, 0
      %s80 = sadd.s32 %s79, 1
      %s81 = scalar_select %p78, %s79, %s80
      %p84 = pneg %p78
      %p85 = scmp.eq.s32.totalorder %s23, 3
      %p86 = por %p84, %p85
      %p87 = scmp.ne.s32.totalorder %s79, %s82
      %p88 = scmp.eq.s32.totalorder %s23, 0
      %p89 = por %p87, %p88
      %p90 = scmp.ne.s32.totalorder %s79, %s82
      %p91 = scmp.eq.s32.totalorder %s28, 3
      %p92 = por %p90, %p91
      %p93 = scmp.ne.s32.totalorder %s82, %s83
      %p94 = scmp.eq.s32.totalorder %s28, 0
      %p95 = por %p93, %p94
      %p96 = scmp.ne.s32.totalorder %s82, %s83
      %p97 = scmp.eq.s32.totalorder %s29, 3
      %p98 = por %p96, %p97
      %p100 = scmp.ne.s32.totalorder %s83, %s99
      %p101 = scmp.eq.s32.totalorder %s29, 0
      %p102 = por %p100, %p101
      %s103 = sadd.s32 %s31, 1
      %s104 = smul.u32 %s103, 4
      %s105 = sadd.s32 %s104, 1
      %s106 = sadd.s32 %s38, 1
      %s107 = smul.u32 %s106, 4
      %s108 = sadd.s32 %s107, 1
      %s109 = ssub.s32 %s30, %s42
      %s110 = ssub.s32 %s105, %s108
      %s111 = sor.u32 %s109, %s110
      %p112 = scmp.eq.s32.totalorder %s111, 0
      %s114 = sadd.s32 %s113, 1
      %s115 = scalar_select %p112, %s113, %s114
      %p118 = pneg %p112
      %p119 = scmp.eq.s32.totalorder %s23, 3
      %p120 = por %p118, %p119
      %p121 = scmp.ne.s32.totalorder %s113, %s116
      %p122 = scmp.eq.s32.totalorder %s23, 0
      %p123 = por %p121, %p122
      %p124 = scmp.ne.s32.totalorder %s113, %s116
      %p125 = scmp.eq.s32.totalorder %s28, 3
      %p126 = por %p124, %p125
      %p127 = scmp.ne.s32.totalorder %s116, %s117
      %p128 = scmp.eq.s32.totalorder %s28, 0
      %p129 = por %p127, %p128
      %p130 = scmp.ne.s32.totalorder %s116, %s117
      %p131 = scmp.eq.s32.totalorder %s29, 3
      %p132 = por %p130, %p131
      %p134 = scmp.ne.s32.totalorder %s117, %s133
      %p135 = scmp.eq.s32.totalorder %s29, 0
      %p136 = por %p134, %p135
      %s138 = sadd.s32 %s137, 1
      %p141 = scmp.eq.s32.totalorder %s23, 3
      %p142 = scmp.ne.s32.totalorder %s137, %s139
      %p143 = scmp.eq.s32.totalorder %s23, 0
      %p144 = por %p142, %p143
      %p145 = scmp.ne.s32.totalorder %s137, %s139
      %p146 = scmp.eq.s32.totalorder %s28, 3
      %p147 = por %p145, %p146
      %p148 = scmp.ne.s32.totalorder %s139, %s140
      %p149 = scmp.eq.s32.totalorder %s28, 0
      %p150 = por %p148, %p149
      %p151 = scmp.ne.s32.totalorder %s139, %s140
      %p152 = scmp.eq.s32.totalorder %s29, 3
      %p153 = por %p151, %p152
      %p155 = scmp.ne.s32.totalorder %s140, %s154
      %p156 = scmp.eq.s32.totalorder %s29, 0
      %p157 = por %p155, %p156
      %s159 = sadd.s32 %s158, 1
      %p162 = scmp.eq.s32.totalorder %s23, 3
      %p163 = scmp.ne.s32.totalorder %s158, %s160
      %p164 = scmp.eq.s32.totalorder %s23, 0
      %p165 = por %p163, %p164
      %p166 = scmp.ne.s32.totalorder %s158, %s160
      %p167 = scmp.eq.s32.totalorder %s28, 3
      %p168 = por %p166, %p167
      %p169 = scmp.ne.s32.totalorder %s160, %s161
      %p170 = scmp.eq.s32.totalorder %s28, 0
      %p171 = por %p169, %p170
      %p172 = scmp.ne.s32.totalorder %s160, %s161
      %p173 = scmp.eq.s32.totalorder %s29, 3
      %p174 = por %p172, %p173
      %p176 = scmp.ne.s32.totalorder %s161, %s175
      %p177 = scmp.eq.s32.totalorder %s29, 0
      %p178 = por %p176, %p177
      %s179 = ssub.s32 %s30, %s42
      %s180 = ssub.s32 %s31, %s38
      %s181 = sor.u32 %s179, %s180
      %p182 = scmp.eq.s32.totalorder %s181, 0
      %s184 = sadd.s32 %s183, 1
      %s185 = scalar_select %p182, %s183, %s184
      %p188 = pneg %p182
      %p189 = scmp.eq.s32.totalorder %s23, 3
      %p190 = por %p188, %p189
      %p191 = scmp.ne.s32.totalorder %s183, %s186
      %p192 = scmp.eq.s32.totalorder %s23, 0
      %p193 = por %p191, %p192
      %p194 = scmp.ne.s32.totalorder %s183, %s186
      %p195 = scmp.eq.s32.totalorder %s28, 3
      %p196 = por %p194, %p195
      %p197 = scmp.ne.s32.totalorder %s186, %s187
      %p198 = scmp.eq.s32.totalorder %s28, 0
      %p199 = por %p197, %p198
      %p200 = scmp.ne.s32.totalorder %s186, %s187
      %p201 = scmp.eq.s32.totalorder %s29, 3
      %p202 = por %p200, %p201
      %p204 = scmp.ne.s32.totalorder %s187, %s203
      %p205 = scmp.eq.s32.totalorder %s29, 0
      %p206 = por %p204, %p205
      %s207 = ssub.s32 %s30, %s42
      %s208 = ssub.s32 %s31, %s38
      %s209 = sor.u32 %s207, %s208
      %p210 = scmp.eq.s32.totalorder %s209, 0
      %s212 = sadd.s32 %s211, 1
      %s213 = scalar_select %p210, %s211, %s212
      %p216 = pneg %p210
      %p217 = scmp.eq.s32.totalorder %s23, 3
      %p218 = por %p216, %p217
      %p219 = scmp.ne.s32.totalorder %s211, %s214
      %p220 = scmp.eq.s32.totalorder %s23, 0
      %p221 = por %p219, %p220
      %p222 = scmp.ne.s32.totalorder %s211, %s214
      %p223 = scmp.eq.s32.totalorder %s28, 3
      %p224 = por %p222, %p223
      %p225 = scmp.ne.s32.totalorder %s214, %s215
      %p226 = scmp.eq.s32.totalorder %s28, 0
      %p227 = por %p225, %p226
      %p228 = scmp.ne.s32.totalorder %s214, %s215
      %p229 = scmp.eq.s32.totalorder %s29, 3
      %p230 = por %p228, %p229
      %p232 = scmp.ne.s32.totalorder %s215, %s231
      %p233 = scmp.eq.s32.totalorder %s29, 0
      %p234 = por %p232, %p233
      %s235 = ssub.s32 %s30, %s42
      %s236 = ssub.s32 %s31, %s38
      %s237 = sor.u32 %s235, %s236
      %p238 = scmp.eq.s32.totalorder %s237, 0
      %s240 = sadd.s32 %s239, 1
      %s241 = scalar_select %p238, %s239, %s240
      %p244 = pneg %p238
      %p245 = scmp.eq.s32.totalorder %s23, 3
      %p246 = por %p244, %p245
      %p247 = scmp.ne.s32.totalorder %s239, %s242
      %p248 = scmp.eq.s32.totalorder %s23, 0
      %p249 = por %p247, %p248
      %p250 = scmp.ne.s32.totalorder %s239, %s242
      %p251 = scmp.eq.s32.totalorder %s28, 3
      %p252 = por %p250, %p251
      %p253 = scmp.ne.s32.totalorder %s242, %s243
      %p254 = scmp.eq.s32.totalorder %s28, 0
      %p255 = por %p253, %p254
      %p256 = scmp.ne.s32.totalorder %s242, %s243
      %p257 = scmp.eq.s32.totalorder %s29, 3
      %p258 = por %p256, %p257
      %p260 = scmp.ne.s32.totalorder %s243, %s259
      %p261 = scmp.eq.s32.totalorder %s29, 0
      %p262 = por %p260, %p261
      %p263 = scmp.le.s32.totalorder 1, %s23
      %p264 = scmp.lt.s32.totalorder %s23, 5
      %p265 = pnand %p263, %p264
      %p266 = pneg %p265
      // Predicated region
      $region9: #{tpu_custom_call.1} parent=5 // pred_check
        _
      $region10: #{tpu_custom_call.1} parent=5 // pred_check_branch
        %268 = sbr.rel (%p265) target = $region12
      $region11: #{tpu_custom_call.1} parent=5 // pred_region
        %s269 = ssub.s32 %s23, 1
        // Predicated region
        $region13: #{tpu_custom_call.1} parent=11 // pred_check
          %p270 = pneg %p150
        $region14: #{tpu_custom_call.1} parent=11 // pred_check_branch
          %272 = sbr.rel (%p270) target = $region16
        $region15: #{tpu_custom_call.1} parent=11 // pred_region
          _
        $region16: #{tpu_custom_call.1} parent=11 // pred_fallthru
          _
        // Predicated region
        $region17: #{tpu_custom_call.1} parent=11 // pred_check
          %p273 = pneg %p171
        $region18: #{tpu_custom_call.1} parent=11 // pred_check_branch
          %275 = sbr.rel (%p273) target = $region20
        $region19: #{tpu_custom_call.1} parent=11 // pred_region
          _
        $region20: #{tpu_custom_call.1} parent=11 // pred_fallthru
          _
      $region12: #{tpu_custom_call.1} parent=5 // pred_fallthru
        _
      %p276 = scmp.lt.s32.totalorder %s23, 4
      // Predicated region
      $region21: #{tpu_custom_call.1} parent=5 // pred_check
        %p277 = pneg %p276
      $region22: #{tpu_custom_call.1} parent=5 // pred_check_branch
        %279 = sbr.rel (%p277) target = $region24
      $region23: #{tpu_custom_call.1} parent=5 // pred_region
        // Predicated region
        $region25: #{tpu_custom_call.1} parent=23 // pred_check
          %p280 = pneg %p57
        $region26: #{tpu_custom_call.1} parent=23 // pred_check_branch
          %282 = sbr.rel (%p280) target = $region28
        $region27: #{tpu_custom_call.1} parent=23 // pred_region
          %s283 = sand.u32 %s47, 1
          %s284 = scalar_lea.sflag [#allocation3], %s283
          %s285 = sand.u32 %s47, 1
          %s286 = smul.addr %s285, 32
          %s287 = scalar_lea.vmem [#allocation2], %s286
          %s288 = smul.u32 4, %s31
          %s289 = ssub.s32 10, %s288
          %p290 = scmp.lt.s32.totalorder %s289, 4
          %s291 = scalar_select %p290, %s289, 4
          %s292 = smul.u32 128, %s291
          %s294 = ssub.s32 512, %s292
          %295 = vsyncadd %s284, %s294
          %p296 = scmp.ne.s32.totalorder 0, %s292
          %s297 = smul.addr %s30, 10
          %s298 = sadd.s32 %s288, %s297
          %s299 = smul.addr %s298, 128
          %s300 = scalar_lea.hbm %s0, %s299
          %s301 = smul.u32 8, %s291
          %s302 = sshll.u32 %s287, 4
          %s303 = int_to_ptr.vmem [resolvable:$true] %s302
          %s304 = sshll.u32 %s301, 4
          %308 = dma.hbm_to_vmem [thread:$0]  (%p296), %s300, %s304, %s303, %s284, 128, 128, 8
        $region28: #{tpu_custom_call.1} parent=23 // pred_fallthru
          _
        // Predicated region
        $region29: #{tpu_custom_call.1} parent=23 // pred_check
          %p309 = pneg %p89
        $region30: #{tpu_custom_call.1} parent=23 // pred_check_branch
          %311 = sbr.rel (%p309) target = $region32
        $region31: #{tpu_custom_call.1} parent=23 // pred_region
          %s312 = sand.u32 %s23, 1
          %s313 = scalar_lea.sflag [#allocation6], %s312
          %s314 = sand.u32 %s79, 1
          %s315 = smul.addr %s314, 8
          %s316 = scalar_lea.vmem [#allocation5], %s315
          %s317 = sadd.s32 %s31, 1
          %s318 = smul.u32 %s317, 4
          %s320 = ssub.s32 128, 128
          %321 = vsyncadd %s313, %s320
          %s322 = smul.addr %s30, 10
          %s323 = sadd.s32 %s318, %s322
          %s324 = smul.addr %s323, 128
          %s325 = scalar_lea.hbm %s1, %s324
          %s327 = sshll.u32 %s316, 4
          %s328 = int_to_ptr.vmem [resolvable:$true] %s327
          %330 = dma.hbm_to_vmem [thread:$0]  %s325, 128, %s328, %s313
        $region32: #{tpu_custom_call.1} parent=23 // pred_fallthru
          _
        // Predicated region
        $region33: #{tpu_custom_call.1} parent=23 // pred_check
          %p331 = pneg %p123
        $region34: #{tpu_custom_call.1} parent=23 // pred_check_branch
          %333 = sbr.rel (%p331) target = $region36
        $region35: #{tpu_custom_call.1} parent=23 // pred_region
          %s334 = sand.u32 %s23, 1
          %s335 = scalar_lea.sflag [#allocation6], %s334
          %s336 = sand.u32 %s113, 1
          %s337 = smul.addr %s336, 8
          %s338 = scalar_lea.vmem [#allocation7], %s337
          %s339 = sadd.s32 %s31, 1
          %s340 = smul.u32 %s339, 4
          %s341 = sadd.s32 %s340, 1
          %s343 = ssub.s32 128, 128
          %344 = vsyncadd %s335, %s343
          %s345 = smul.addr %s30, 10
          %s346 = sadd.s32 %s341, %s345
          %s347 = smul.addr %s346, 128
          %s348 = scalar_lea.hbm %s2, %s347
          %s350 = sshll.u32 %s338, 4
          %s351 = int_to_ptr.vmem [resolvable:$true] %s350
          %353 = dma.hbm_to_vmem [thread:$0]  %s348, 128, %s351, %s335
        $region36: #{tpu_custom_call.1} parent=23 // pred_fallthru
          _
      $region24: #{tpu_custom_call.1} parent=5 // pred_fallthru
        _
      %p354 = scmp.le.s32.totalorder 1, %s23
      %p355 = scmp.lt.s32.totalorder %s23, 5
      %p356 = pnand %p354, %p355
      %p357 = pneg %p356
      // Predicated region
      $region37: #{tpu_custom_call.1} parent=5 // pred_check
        _
      $region38: #{tpu_custom_call.1} parent=5 // pred_check_branch
        %359 = sbr.rel (%p356) target = $region40
      $region39: #{tpu_custom_call.1} parent=5 // pred_region
        %s360 = ssub.s32 %s23, 1
        %s361 = sand.u32 %s50, 1
        %s362 = scalar_lea.sflag [#allocation3], %s361
        %s363 = sand.u32 %s50, 1
        %s364 = smul.addr %s363, 32
        %s365 = scalar_lea.vmem [#allocation2], %s364
        // Predicated region
        $region41: #{tpu_custom_call.1} parent=39 // pred_check
          %p366 = pneg %p63
        $region42: #{tpu_custom_call.1} parent=39 // pred_check_branch
          %368 = sbr.rel (%p366) target = $region44
        $region43: #{tpu_custom_call.1} parent=39 // pred_region
          %369 = dma.done %s362, 512
        $region44: #{tpu_custom_call.1} parent=39 // pred_fallthru
          _
        %s370 = sand.u32 %s28, 1
        %s371 = scalar_lea.sflag [#allocation6], %s370
        %s372 = sand.u32 %s82, 1
        %s373 = smul.addr %s372, 8
        %s374 = scalar_lea.vmem [#allocation5], %s373
        // Predicated region
        $region45: #{tpu_custom_call.1} parent=39 // pred_check
          %p375 = pneg %p95
        $region46: #{tpu_custom_call.1} parent=39 // pred_check_branch
          %377 = sbr.rel (%p375) target = $region48
        $region47: #{tpu_custom_call.1} parent=39 // pred_region
          %378 = dma.done %s371, 128
        $region48: #{tpu_custom_call.1} parent=39 // pred_fallthru
          _
        %s379 = sand.u32 %s28, 1
        %s380 = scalar_lea.sflag [#allocation6], %s379
        %s381 = sand.u32 %s116, 1
        %s382 = smul.addr %s381, 8
        %s383 = scalar_lea.vmem [#allocation7], %s382
        // Predicated region
        $region49: #{tpu_custom_call.1} parent=39 // pred_check
          %p384 = pneg %p129
        $region50: #{tpu_custom_call.1} parent=39 // pred_check_branch
          %386 = sbr.rel (%p384) target = $region52
        $region51: #{tpu_custom_call.1} parent=39 // pred_region
          %387 = dma.done %s380, 128
        $region52: #{tpu_custom_call.1} parent=39 // pred_fallthru
          _
        %s388 = sand.u32 %s50, 1
        %s389 = scalar_lea.sflag [#allocation3], %s388
        %s390 = sand.u32 %s50, 1
        %s391 = smul.addr %s390, 32
        %s392 = scalar_lea.vmem [#allocation2], %s391
        %p393 = pneg %p63
        %p394 = pneg %p60
        %s395 = sand.u32 %s28, 1
        %s396 = scalar_lea.sflag [#allocation6], %s395
        %s397 = sand.u32 %s82, 1
        %s398 = smul.addr %s397, 8
        %s399 = scalar_lea.vmem [#allocation5], %s398
        %p400 = pneg %p95
        %p401 = pneg %p92
        %s402 = sand.u32 %s28, 1
        %s403 = scalar_lea.sflag [#allocation6], %s402
        %s404 = sand.u32 %s116, 1
        %s405 = smul.addr %s404, 8
        %s406 = scalar_lea.vmem [#allocation7], %s405
        %p407 = pneg %p129
        %p408 = pneg %p126
        %p409 = pneg %p150
        %p410 = pneg %p147
        %p411 = pneg %p171
        %p412 = pneg %p168
        %p413 = pneg %p199
        %p414 = pneg %p196
        %s415 = sand.u32 %s186, 1
        %s416 = scalar_lea.sflag [#allocation4], %s415
        %s417 = sand.u32 %s186, 1
        %s418 = smul.addr %s417, 16
        %s419 = scalar_lea.vmem [#allocation8], %s418
        %p420 = pneg %p227
        %p421 = pneg %p224
        %p422 = scmp.lt.s32.totalorder %s32, 1
        %s423 = scalar_select %p422, %s32, 1
        %p424 = scmp.lt.s32.totalorder %s33, 1
        %s425 = scalar_select %p424, %s33, 1
        %s426 = smul.addr %s423, 2
        %s427 = sadd.s32 %s425, %s426
        %s428 = smul.addr %s427, 8
        %s429 = scalar_lea.vmem %s6, %s428
        %p430 = pneg %p255
        %p431 = pneg %p252
        %p432 = scmp.lt.s32.totalorder %s32, 1
        %s433 = scalar_select %p432, %s32, 1
        %p434 = scmp.lt.s32.totalorder %s33, 1
        %s435 = scalar_select %p434, %s33, 1
        %s436 = smul.addr %s433, 2
        %s437 = sadd.s32 %s435, %s436
        %s438 = smul.addr %s437, 8
        %s439 = scalar_lea.vmem %s7, %s438
        %s440 = smul.u32 4, %s33
        %s441 = ssub.s32 10, %s440
        %p442 = scmp.lt.s32.totalorder %s441, 4
        %s443 = scalar_select %p442, %s441, 4
        %s444 = smul.u32 128, %s443
        %s445 = sadd.s32 %s33, 1
        %s446 = smul.u32 %s445, 4
        %s447 = sadd.s32 %s33, 1
        %s448 = smul.u32 %s447, 4
        %s449 = sadd.s32 %s448, 1
        %s450 = smul.u32 4, %s33
        %p451 = scmp.lt.s32.totalorder %s32, 1
        %s452 = scalar_select %p451, %s32, 1
        %p453 = scmp.lt.s32.totalorder %s33, 1
        %s454 = scalar_select %p453, %s33, 1
        %s455 = smul.addr %s452, 2
        %s456 = sadd.s32 %s454, %s455
        %s457 = smul.addr %s456, 8
        %s458 = scalar_lea.vmem %s6, %s457
        %p459 = scmp.lt.s32.totalorder %s32, 1
        %s460 = scalar_select %p459, %s32, 1
        %p461 = scmp.lt.s32.totalorder %s33, 1
        %s462 = scalar_select %p461, %s33, 1
        %s463 = smul.addr %s460, 2
        %s464 = sadd.s32 %s462, %s463
        %s465 = smul.addr %s464, 8
        %s466 = scalar_lea.vmem %s7, %s465
        %v467 = vld [vmem:[%s365] sm:$0xff]
        %s468 = scalar_lea.vmem %s365, 8 [#allocation2]
        %v469 = vld [vmem:[%s468] sm:$0xff]
        %s470 = scalar_lea.vmem %s365, 16 [#allocation2]
        %v471 = vld [vmem:[%s470] sm:$0xff]
        %v472 = vld [vmem:[%s3] sm:$0xff]
        %s473 = scalar_lea.vmem %s3, 8
        %v474 = vld [vmem:[%s473] sm:$0xff]
        %478 = vrot.lane.b32.xlu0 %v467, 127
        %v479 = vpop.permute.xlu0 %478
        %480 = vrot.lane.b32.xlu0 %v469, 127
        %v481 = vpop.permute.xlu0 %480
        %482 = vrot.lane.b32.xlu0 %v471, 127
        %v483 = vpop.permute.xlu0 %482
        %vm487 = vcmask 195584
        %v489 = vsel %vm487, %v474, 0
        %491 = vmatprep.subr.mxu0 0.0
        %492 = vmatpush1.msra.mxu0 %v479
        %493 = vmatprep.subr.mxu0 0.0
        %494 = vmatpush1.msra.mxu0 %v481
        %495 = vmatprep.subr.mxu0 0.0
        %496 = vmatpush1.msra.mxu0 %v483
        %497 = vmatprep.subr.mxu0 0.0
        %498 = vmatpush1.msra.mxu0 0.0
        %499 = vmatprep.subr.mxu0 0.0
        %500 = vmatpush1.msra.mxu0 0.0
        %501 = vmatprep.subr.mxu0 0.0
        %502 = vmatpush1.msra.mxu0 0.0
        %503 = vmatprep.subr.mxu0 0.0
        %504 = vmatpush1.msra.mxu0 0.0
        %505 = vmatprep.subr.mxu0 0.0
        %506 = vmatpush1.msra.mxu0 0.0
        %507 = vmatprep.subr.mxu0 0.0
        %508 = vmatpush1.msra.mxu0 0.0
        %509 = vmatprep.subr.mxu0 0.0
        %510 = vmatpush1.msra.mxu0 0.0
        %511 = vmatprep.subr.mxu0 0.0
        %512 = vmatpush1.msra.mxu0 0.0
        %513 = vmatprep.subr.mxu0 0.0
        %514 = vmatpush1.msra.mxu0 0.0
        %515 = vmatprep.subr.mxu0 0.0
        %516 = vmatpush1.msra.mxu0 0.0
        %517 = vmatprep.subr.mxu0 0.0
        %518 = vmatpush1.msra.mxu0 0.0
        %519 = vmatprep.subr.mxu0 0.0
        %520 = vmatpush1.msra.mxu0 0.0
        %521 = vmatprep.subr.mxu0 0.0
        %522 = vmatpush1.msra.mxu0 0.0
        %523 = vmatprep.subr.mxu0 0.0
        %524 = vmatpush1.msra.mxu0 0.0
        %525 = vmatprep.subr.mxu0 0.0
        %526 = vmatpush1.msra.mxu0 0.0
        %527 = vmatprep.subr.mxu0 0.0
        %528 = vmatpush1.msra.mxu0 0.0
        %529 = vmatprep.subr.mxu0 0.0
        %530 = vmatpush1.msra.mxu0 0.0
        %531 = vmatprep.subr.mxu0 0.0
        %532 = vmatpush1.msra.mxu0 0.0
        %533 = vmatprep.subr.mxu0 0.0
        %534 = vmatpush1.msra.mxu0 0.0
        %535 = vmatprep.subr.mxu0 0.0
        %536 = vmatpush1.msra.mxu0 0.0
        %537 = vmatprep.subr.mxu0 0.0
        %538 = vmatpush1.msra.mxu0 0.0
        %539 = vmatprep.subr.mxu0 0.0
        %540 = vmatpush1.msra.mxu0 0.0
        %541 = vmatprep.subr.mxu0 0.0
        %542 = vmatpush1.msra.mxu0 0.0
        %543 = vmatprep.subr.mxu0 0.0
        %544 = vmatpush1.msra.mxu0 0.0
        %545 = vmatprep.subr.mxu0 0.0
        %546 = vmatpush1.msra.mxu0 0.0
        %547 = vmatprep.subr.mxu0 0.0
        %548 = vmatpush1.msra.mxu0 0.0
        %549 = vmatprep.subr.mxu0 0.0
        %550 = vmatpush1.msra.mxu0 0.0
        %551 = vmatprep.subr.mxu0 0.0
        %552 = vmatpush1.msra.mxu0 0.0
        %553 = vmatprep.subr.mxu0 0.0
        %554 = vmatpush1.msra.mxu0 0.0
        %555 = vmatprep.mubr.f32.mxu0 0.0
        %556 = vmatmul.mubr.f32.gmra.mrb[0].mxu0 %v489
        %v557 = vpop.f32.mrb[0].mxu0
        %v558 = vadd.f32 0.0, %v557
        %v559 = vpop.f32.mrb[0].mxu0
        %560 = vdwg.mxu0
        %v562 = vsel %vm487, %v472, 0
        %564 = vmatprep.subr.mxu0 0.0
        %565 = vmatpush1.msra.mxu0 %v467
        %566 = vmatprep.subr.mxu0 0.0
        %567 = vmatpush1.msra.mxu0 %v469
        %568 = vmatprep.subr.mxu0 0.0
        %569 = vmatpush1.msra.mxu0 %v471
        %570 = vmatprep.subr.mxu0 0.0
        %571 = vmatpush1.msra.mxu0 0.0
        %572 = vmatprep.subr.mxu0 0.0
        %573 = vmatpush1.msra.mxu0 0.0
        %574 = vmatprep.subr.mxu0 0.0
        %575 = vmatpush1.msra.mxu0 0.0
        %576 = vmatprep.subr.mxu0 0.0
        %577 = vmatpush1.msra.mxu0 0.0
        %578 = vmatprep.subr.mxu0 0.0
        %579 = vmatpush1.msra.mxu0 0.0
        %580 = vmatprep.subr.mxu0 0.0
        %581 = vmatpush1.msra.mxu0 0.0
        %582 = vmatprep.subr.mxu0 0.0
        %583 = vmatpush1.msra.mxu0 0.0
        %584 = vmatprep.subr.mxu0 0.0
        %585 = vmatpush1.msra.mxu0 0.0
        %586 = vmatprep.subr.mxu0 0.0
        %587 = vmatpush1.msra.mxu0 0.0
        %588 = vmatprep.subr.mxu0 0.0
        %589 = vmatpush1.msra.mxu0 0.0
        %590 = vmatprep.subr.mxu0 0.0
        %591 = vmatpush1.msra.mxu0 0.0
        %592 = vmatprep.subr.mxu0 0.0
        %593 = vmatpush1.msra.mxu0 0.0
        %594 = vmatprep.subr.mxu0 0.0
        %595 = vmatpush1.msra.mxu0 0.0
        %596 = vmatprep.subr.mxu0 0.0
        %597 = vmatpush1.msra.mxu0 0.0
        %598 = vmatprep.subr.mxu0 0.0
        %599 = vmatpush1.msra.mxu0 0.0
        %600 = vmatprep.subr.mxu0 0.0
        %601 = vmatpush1.msra.mxu0 0.0
        %602 = vmatprep.subr.mxu0 0.0
        %603 = vmatpush1.msra.mxu0 0.0
        %604 = vmatprep.subr.mxu0 0.0
        %605 = vmatpush1.msra.mxu0 0.0
        %606 = vmatprep.subr.mxu0 0.0
        %607 = vmatpush1.msra.mxu0 0.0
        %608 = vmatprep.subr.mxu0 0.0
        %609 = vmatpush1.msra.mxu0 0.0
        %610 = vmatprep.subr.mxu0 0.0
        %611 = vmatpush1.msra.mxu0 0.0
        %612 = vmatprep.subr.mxu0 0.0
        %613 = vmatpush1.msra.mxu0 0.0
        %614 = vmatprep.subr.mxu0 0.0
        %615 = vmatpush1.msra.mxu0 0.0
        %616 = vmatprep.subr.mxu0 0.0
        %617 = vmatpush1.msra.mxu0 0.0
        %618 = vmatprep.subr.mxu0 0.0
        %619 = vmatpush1.msra.mxu0 0.0
        %620 = vmatprep.subr.mxu0 0.0
        %621 = vmatpush1.msra.mxu0 0.0
        %622 = vmatprep.subr.mxu0 0.0
        %623 = vmatpush1.msra.mxu0 0.0
        %624 = vmatprep.subr.mxu0 0.0
        %625 = vmatpush1.msra.mxu0 0.0
        %626 = vmatprep.subr.mxu0 0.0
        %627 = vmatpush1.msra.mxu0 0.0
        %628 = vmatprep.mubr.f32.mxu0 0.0
        %629 = vmatmul.mubr.f32.gmra.mrb[0].mxu0 %v562
        %v630 = vpop.f32.mrb[0].mxu0
        %v631 = vadd.f32 %v558, %v630
        %v632 = vpop.f32.mrb[0].mxu0
        %633 = vdwg.mxu0
        %s634 = scalar_lea.vmem %s3, 16
        %v635 = vld [vmem:[%s634] sm:$0xff]
        %636 = vrot.lane.b32.xlu0 %v467, 126
        %v637 = vpop.permute.xlu0 %636
        %638 = vrot.lane.b32.xlu0 %v469, 126
        %v639 = vpop.permute.xlu0 %638
        %640 = vrot.lane.b32.xlu0 %v471, 126
        %v641 = vpop.permute.xlu0 %640
        %v646 = vsel %vm487, %v635, 0
        %648 = vmatprep.subr.mxu0 0.0
        %649 = vmatpush1.msra.mxu0 %v637
        %650 = vmatprep.subr.mxu0 0.0
        %651 = vmatpush1.msra.mxu0 %v639
        %652 = vmatprep.subr.mxu0 0.0
        %653 = vmatpush1.msra.mxu0 %v641
        %654 = vmatprep.subr.mxu0 0.0
        %655 = vmatpush1.msra.mxu0 0.0
        %656 = vmatprep.subr.mxu0 0.0
        %657 = vmatpush1.msra.mxu0 0.0
        %658 = vmatprep.subr.mxu0 0.0
        %659 = vmatpush1.msra.mxu0 0.0
        %660 = vmatprep.subr.mxu0 0.0
        %661 = vmatpush1.msra.mxu0 0.0
        %662 = vmatprep.subr.mxu0 0.0
        %663 = vmatpush1.msra.mxu0 0.0
        %664 = vmatprep.subr.mxu0 0.0
        %665 = vmatpush1.msra.mxu0 0.0
        %666 = vmatprep.subr.mxu0 0.0
        %667 = vmatpush1.msra.mxu0 0.0
        %668 = vmatprep.subr.mxu0 0.0
        %669 = vmatpush1.msra.mxu0 0.0
        %670 = vmatprep.subr.mxu0 0.0
        %671 = vmatpush1.msra.mxu0 0.0
        %672 = vmatprep.subr.mxu0 0.0
        %673 = vmatpush1.msra.mxu0 0.0
        %674 = vmatprep.subr.mxu0 0.0
        %675 = vmatpush1.msra.mxu0 0.0
        %676 = vmatprep.subr.mxu0 0.0
        %677 = vmatpush1.msra.mxu0 0.0
        %678 = vmatprep.subr.mxu0 0.0
        %679 = vmatpush1.msra.mxu0 0.0
        %680 = vmatprep.subr.mxu0 0.0
        %681 = vmatpush1.msra.mxu0 0.0
        %682 = vmatprep.subr.mxu0 0.0
        %683 = vmatpush1.msra.mxu0 0.0
        %684 = vmatprep.subr.mxu0 0.0
        %685 = vmatpush1.msra.mxu0 0.0
        %686 = vmatprep.subr.mxu0 0.0
        %687 = vmatpush1.msra.mxu0 0.0
        %688 = vmatprep.subr.mxu0 0.0
        %689 = vmatpush1.msra.mxu0 0.0
        %690 = vmatprep.subr.mxu0 0.0
        %691 = vmatpush1.msra.mxu0 0.0
        %692 = vmatprep.subr.mxu0 0.0
        %693 = vmatpush1.msra.mxu0 0.0
        %694 = vmatprep.subr.mxu0 0.0
        %695 = vmatpush1.msra.mxu0 0.0
        %696 = vmatprep.subr.mxu0 0.0
        %697 = vmatpush1.msra.mxu0 0.0
        %698 = vmatprep.subr.mxu0 0.0
        %699 = vmatpush1.msra.mxu0 0.0
        %700 = vmatprep.subr.mxu0 0.0
        %701 = vmatpush1.msra.mxu0 0.0
        %702 = vmatprep.subr.mxu0 0.0
        %703 = vmatpush1.msra.mxu0 0.0
        %704 = vmatprep.subr.mxu0 0.0
        %705 = vmatpush1.msra.mxu0 0.0
        %706 = vmatprep.subr.mxu0 0.0
        %707 = vmatpush1.msra.mxu0 0.0
        %708 = vmatprep.subr.mxu0 0.0
        %709 = vmatpush1.msra.mxu0 0.0
        %710 = vmatprep.subr.mxu0 0.0
        %711 = vmatpush1.msra.mxu0 0.0
        %712 = vmatprep.mubr.f32.mxu0 0.0
        %713 = vmatmul.mubr.f32.gmra.mrb[0].mxu0 %v646
        %v714 = vpop.f32.mrb[0].mxu0
        %v715 = vadd.f32 0.0, %v714
        %v716 = vpop.f32.mrb[0].mxu0
        %717 = vdwg.mxu0
        %v718 = vadd.f32 %v631, %v715
        %s719 = scalar_lea.vmem %s3, 24
        %v720 = vld [vmem:[%s719] sm:$0xff]
        %721 = vrot.lane.b32.xlu0 %v467, 118
        %v722 = vpop.permute.xlu0 %721
        %723 = vrot.lane.b32.xlu0 %v469, 118
        %v724 = vpop.permute.xlu0 %723
        %725 = vrot.lane.b32.xlu0 %v471, 118
        %v726 = vpop.permute.xlu0 %725
        %v731 = vsel %vm487, %v720, 0
        %733 = vmatprep.subr.mxu0 0.0
        %734 = vmatpush1.msra.mxu0 %v722
        %735 = vmatprep.subr.mxu0 0.0
        %736 = vmatpush1.msra.mxu0 %v724
        %737 = vmatprep.subr.mxu0 0.0
        %738 = vmatpush1.msra.mxu0 %v726
        %739 = vmatprep.subr.mxu0 0.0
        %740 = vmatpush1.msra.mxu0 0.0
        %741 = vmatprep.subr.mxu0 0.0
        %742 = vmatpush1.msra.mxu0 0.0
        %743 = vmatprep.subr.mxu0 0.0
        %744 = vmatpush1.msra.mxu0 0.0
        %745 = vmatprep.subr.mxu0 0.0
        %746 = vmatpush1.msra.mxu0 0.0
        %747 = vmatprep.subr.mxu0 0.0
        %748 = vmatpush1.msra.mxu0 0.0
        %749 = vmatprep.subr.mxu0 0.0
        %750 = vmatpush1.msra.mxu0 0.0
        %751 = vmatprep.subr.mxu0 0.0
        %752 = vmatpush1.msra.mxu0 0.0
        %753 = vmatprep.subr.mxu0 0.0
        %754 = vmatpush1.msra.mxu0 0.0
        %755 = vmatprep.subr.mxu0 0.0
        %756 = vmatpush1.msra.mxu0 0.0
        %757 = vmatprep.subr.mxu0 0.0
        %758 = vmatpush1.msra.mxu0 0.0
        %759 = vmatprep.subr.mxu0 0.0
        %760 = vmatpush1.msra.mxu0 0.0
        %761 = vmatprep.subr.mxu0 0.0
        %762 = vmatpush1.msra.mxu0 0.0
        %763 = vmatprep.subr.mxu0 0.0
        %764 = vmatpush1.msra.mxu0 0.0
        %765 = vmatprep.subr.mxu0 0.0
        %766 = vmatpush1.msra.mxu0 0.0
        %767 = vmatprep.subr.mxu0 0.0
        %768 = vmatpush1.msra.mxu0 0.0
        %769 = vmatprep.subr.mxu0 0.0
        %770 = vmatpush1.msra.mxu0 0.0
        %771 = vmatprep.subr.mxu0 0.0
        %772 = vmatpush1.msra.mxu0 0.0
        %773 = vmatprep.subr.mxu0 0.0
        %774 = vmatpush1.msra.mxu0 0.0
        %775 = vmatprep.subr.mxu0 0.0
        %776 = vmatpush1.msra.mxu0 0.0
        %777 = vmatprep.subr.mxu0 0.0
        %778 = vmatpush1.msra.mxu0 0.0
        %779 = vmatprep.subr.mxu0 0.0
        %780 = vmatpush1.msra.mxu0 0.0
        %781 = vmatprep.subr.mxu0 0.0
        %782 = vmatpush1.msra.mxu0 0.0
        %783 = vmatprep.subr.mxu0 0.0
        %784 = vmatpush1.msra.mxu0 0.0
        %785 = vmatprep.subr.mxu0 0.0
        %786 = vmatpush1.msra.mxu0 0.0
        %787 = vmatprep.subr.mxu0 0.0
        %788 = vmatpush1.msra.mxu0 0.0
        %789 = vmatprep.subr.mxu0 0.0
        %790 = vmatpush1.msra.mxu0 0.0
        %791 = vmatprep.subr.mxu0 0.0
        %792 = vmatpush1.msra.mxu0 0.0
        %793 = vmatprep.subr.mxu0 0.0
        %794 = vmatpush1.msra.mxu0 0.0
        %795 = vmatprep.subr.mxu0 0.0
        %796 = vmatpush1.msra.mxu0 0.0
        %797 = vmatprep.mubr.f32.mxu0 0.0
        %798 = vmatmul.mubr.f32.gmra.mrb[0].mxu0 %v731
        %v799 = vpop.f32.mrb[0].mxu0
        %v800 = vadd.f32 0.0, %v799
        %v801 = vpop.f32.mrb[0].mxu0
        %802 = vdwg.mxu0
        %v803 = vadd.f32 %v718, %v800
        %s804 = scalar_lea.vmem %s3, 32
        %v805 = vld [vmem:[%s804] sm:$0xff]
        %806 = vrot.lane.b32.xlu0 %v467, 117
        %v807 = vpop.permute.xlu0 %806
        %808 = vrot.lane.b32.xlu0 %v469, 117
        %v809 = vpop.permute.xlu0 %808
        %810 = vrot.lane.b32.xlu0 %v471, 117
        %v811 = vpop.permute.xlu0 %810
        %v816 = vsel %vm487, %v805, 0
        %818 = vmatprep.subr.mxu0 0.0
        %819 = vmatpush1.msra.mxu0 %v807
        %820 = vmatprep.subr.mxu0 0.0
        %821 = vmatpush1.msra.mxu0 %v809
        %822 = vmatprep.subr.mxu0 0.0
        %823 = vmatpush1.msra.mxu0 %v811
        %824 = vmatprep.subr.mxu0 0.0
        %825 = vmatpush1.msra.mxu0 0.0
        %826 = vmatprep.subr.mxu0 0.0
        %827 = vmatpush1.msra.mxu0 0.0
        %828 = vmatprep.subr.mxu0 0.0
        %829 = vmatpush1.msra.mxu0 0.0
        %830 = vmatprep.subr.mxu0 0.0
        %831 = vmatpush1.msra.mxu0 0.0
        %832 = vmatprep.subr.mxu0 0.0
        %833 = vmatpush1.msra.mxu0 0.0
        %834 = vmatprep.subr.mxu0 0.0
        %835 = vmatpush1.msra.mxu0 0.0
        %836 = vmatprep.subr.mxu0 0.0
        %837 = vmatpush1.msra.mxu0 0.0
        %838 = vmatprep.subr.mxu0 0.0
        %839 = vmatpush1.msra.mxu0 0.0
        %840 = vmatprep.subr.mxu0 0.0
        %841 = vmatpush1.msra.mxu0 0.0
        %842 = vmatprep.subr.mxu0 0.0
        %843 = vmatpush1.msra.mxu0 0.0
        %844 = vmatprep.subr.mxu0 0.0
        %845 = vmatpush1.msra.mxu0 0.0
        %846 = vmatprep.subr.mxu0 0.0
        %847 = vmatpush1.msra.mxu0 0.0
        %848 = vmatprep.subr.mxu0 0.0
        %849 = vmatpush1.msra.mxu0 0.0
        %850 = vmatprep.subr.mxu0 0.0
        %851 = vmatpush1.msra.mxu0 0.0
        %852 = vmatprep.subr.mxu0 0.0
        %853 = vmatpush1.msra.mxu0 0.0
        %854 = vmatprep.subr.mxu0 0.0
        %855 = vmatpush1.msra.mxu0 0.0
        %856 = vmatprep.subr.mxu0 0.0
        %857 = vmatpush1.msra.mxu0 0.0
        %858 = vmatprep.subr.mxu0 0.0
        %859 = vmatpush1.msra.mxu0 0.0
        %860 = vmatprep.subr.mxu0 0.0
        %861 = vmatpush1.msra.mxu0 0.0
        %862 = vmatprep.subr.mxu0 0.0
        %863 = vmatpush1.msra.mxu0 0.0
        %864 = vmatprep.subr.mxu0 0.0
        %865 = vmatpush1.msra.mxu0 0.0
        %866 = vmatprep.subr.mxu0 0.0
        %867 = vmatpush1.msra.mxu0 0.0
        %868 = vmatprep.subr.mxu0 0.0
        %869 = vmatpush1.msra.mxu0 0.0
        %870 = vmatprep.subr.mxu0 0.0
        %871 = vmatpush1.msra.mxu0 0.0
        %872 = vmatprep.subr.mxu0 0.0
        %873 = vmatpush1.msra.mxu0 0.0
        %874 = vmatprep.subr.mxu0 0.0
        %875 = vmatpush1.msra.mxu0 0.0
        %876 = vmatprep.subr.mxu0 0.0
        %877 = vmatpush1.msra.mxu0 0.0
        %878 = vmatprep.subr.mxu0 0.0
        %879 = vmatpush1.msra.mxu0 0.0
        %880 = vmatprep.subr.mxu0 0.0
        %881 = vmatpush1.msra.mxu0 0.0
        %882 = vmatprep.mubr.f32.mxu0 0.0
        %883 = vmatmul.mubr.f32.gmra.mrb[0].mxu0 %v816
        %v884 = vpop.f32.mrb[0].mxu0
        %v885 = vadd.f32 0.0, %v884
        %v886 = vpop.f32.mrb[0].mxu0
        %887 = vdwg.mxu0
        %v888 = vadd.f32 %v803, %v885
        %s889 = scalar_lea.vmem %s3, 40
        %v890 = vld [vmem:[%s889] sm:$0xff]
        %891 = vrot.lane.b32.xlu0 %v467, 116
        %v892 = vpop.permute.xlu0 %891
        %893 = vrot.lane.b32.xlu0 %v469, 116
        %v894 = vpop.permute.xlu0 %893
        %895 = vrot.lane.b32.xlu0 %v471, 116
        %v896 = vpop.permute.xlu0 %895
        %v901 = vsel %vm487, %v890, 0
        %903 = vmatprep.subr.mxu0 0.0
        %904 = vmatpush1.msra.mxu0 %v892
        %905 = vmatprep.subr.mxu0 0.0
        %906 = vmatpush1.msra.mxu0 %v894
        %907 = vmatprep.subr.mxu0 0.0
        %908 = vmatpush1.msra.mxu0 %v896
        %909 = vmatprep.subr.mxu0 0.0
        %910 = vmatpush1.msra.mxu0 0.0
        %911 = vmatprep.subr.mxu0 0.0
        %912 = vmatpush1.msra.mxu0 0.0
        %913 = vmatprep.subr.mxu0 0.0
        %914 = vmatpush1.msra.mxu0 0.0
        %915 = vmatprep.subr.mxu0 0.0
        %916 = vmatpush1.msra.mxu0 0.0
        %917 = vmatprep.subr.mxu0 0.0
        %918 = vmatpush1.msra.mxu0 0.0
        %919 = vmatprep.subr.mxu0 0.0
        %920 = vmatpush1.msra.mxu0 0.0
        %921 = vmatprep.subr.mxu0 0.0
        %922 = vmatpush1.msra.mxu0 0.0
        %923 = vmatprep.subr.mxu0 0.0
        %924 = vmatpush1.msra.mxu0 0.0
        %925 = vmatprep.subr.mxu0 0.0
        %926 = vmatpush1.msra.mxu0 0.0
        %927 = vmatprep.subr.mxu0 0.0
        %928 = vmatpush1.msra.mxu0 0.0
        %929 = vmatprep.subr.mxu0 0.0
        %930 = vmatpush1.msra.mxu0 0.0
        %931 = vmatprep.subr.mxu0 0.0
        %932 = vmatpush1.msra.mxu0 0.0
        %933 = vmatprep.subr.mxu0 0.0
        %934 = vmatpush1.msra.mxu0 0.0
        %935 = vmatprep.subr.mxu0 0.0
        %936 = vmatpush1.msra.mxu0 0.0
        %937 = vmatprep.subr.mxu0 0.0
        %938 = vmatpush1.msra.mxu0 0.0
        %939 = vmatprep.subr.mxu0 0.0
        %940 = vmatpush1.msra.mxu0 0.0
        %941 = vmatprep.subr.mxu0 0.0
        %942 = vmatpush1.msra.mxu0 0.0
        %943 = vmatprep.subr.mxu0 0.0
        %944 = vmatpush1.msra.mxu0 0.0
        %945 = vmatprep.subr.mxu0 0.0
        %946 = vmatpush1.msra.mxu0 0.0
        %947 = vmatprep.subr.mxu0 0.0
        %948 = vmatpush1.msra.mxu0 0.0
        %949 = vmatprep.subr.mxu0 0.0
        %950 = vmatpush1.msra.mxu0 0.0
        %951 = vmatprep.subr.mxu0 0.0
        %952 = vmatpush1.msra.mxu0 0.0
        %953 = vmatprep.subr.mxu0 0.0
        %954 = vmatpush1.msra.mxu0 0.0
        %955 = vmatprep.subr.mxu0 0.0
        %956 = vmatpush1.msra.mxu0 0.0
        %957 = vmatprep.subr.mxu0 0.0
        %958 = vmatpush1.msra.mxu0 0.0
        %959 = vmatprep.subr.mxu0 0.0
        %960 = vmatpush1.msra.mxu0 0.0
        %961 = vmatprep.subr.mxu0 0.0
        %962 = vmatpush1.msra.mxu0 0.0
        %963 = vmatprep.subr.mxu0 0.0
        %964 = vmatpush1.msra.mxu0 0.0
        %965 = vmatprep.subr.mxu0 0.0
        %966 = vmatpush1.msra.mxu0 0.0
        %967 = vmatprep.mubr.f32.mxu0 0.0
        %968 = vmatmul.mubr.f32.gmra.mrb[0].mxu0 %v901
        %v969 = vpop.f32.mrb[0].mxu0
        %v970 = vadd.f32 0.0, %v969
        %v971 = vpop.f32.mrb[0].mxu0
        %972 = vdwg.mxu0
        %v973 = vadd.f32 %v888, %v970
        %s974 = scalar_lea.vmem %s3, 48
        %v975 = vld [vmem:[%s974] sm:$0xff]
        %976 = vrot.lane.b32.xlu0 %v467, 108
        %v977 = vpop.permute.xlu0 %976
        %978 = vrot.lane.b32.xlu0 %v469, 108
        %v979 = vpop.permute.xlu0 %978
        %980 = vrot.lane.b32.xlu0 %v471, 108
        %v981 = vpop.permute.xlu0 %980
        %v986 = vsel %vm487, %v975, 0
        %988 = vmatprep.subr.mxu0 0.0
        %989 = vmatpush1.msra.mxu0 %v977
        %990 = vmatprep.subr.mxu0 0.0
        %991 = vmatpush1.msra.mxu0 %v979
        %992 = vmatprep.subr.mxu0 0.0
        %993 = vmatpush1.msra.mxu0 %v981
        %994 = vmatprep.subr.mxu0 0.0
        %995 = vmatpush1.msra.mxu0 0.0
        %996 = vmatprep.subr.mxu0 0.0
        %997 = vmatpush1.msra.mxu0 0.0
        %998 = vmatprep.subr.mxu0 0.0
        %999 = vmatpush1.msra.mxu0 0.0
        %1000 = vmatprep.subr.mxu0 0.0
        %1001 = vmatpush1.msra.mxu0 0.0
        %1002 = vmatprep.subr.mxu0 0.0
        %1003 = vmatpush1.msra.mxu0 0.0
        %1004 = vmatprep.subr.mxu0 0.0
        %1005 = vmatpush1.msra.mxu0 0.0
        %1006 = vmatprep.subr.mxu0 0.0
        %1007 = vmatpush1.msra.mxu0 0.0
        %1008 = vmatprep.subr.mxu0 0.0
        %1009 = vmatpush1.msra.mxu0 0.0
        %1010 = vmatprep.subr.mxu0 0.0
        %1011 = vmatpush1.msra.mxu0 0.0
        %1012 = vmatprep.subr.mxu0 0.0
        %1013 = vmatpush1.msra.mxu0 0.0
        %1014 = vmatprep.subr.mxu0 0.0
        %1015 = vmatpush1.msra.mxu0 0.0
        %1016 = vmatprep.subr.mxu0 0.0
        %1017 = vmatpush1.msra.mxu0 0.0
        %1018 = vmatprep.subr.mxu0 0.0
        %1019 = vmatpush1.msra.mxu0 0.0
        %1020 = vmatprep.subr.mxu0 0.0
        %1021 = vmatpush1.msra.mxu0 0.0
        %1022 = vmatprep.subr.mxu0 0.0
        %1023 = vmatpush1.msra.mxu0 0.0
        %1024 = vmatprep.subr.mxu0 0.0
        %1025 = vmatpush1.msra.mxu0 0.0
        %1026 = vmatprep.subr.mxu0 0.0
        %1027 = vmatpush1.msra.mxu0 0.0
        %1028 = vmatprep.subr.mxu0 0.0
        %1029 = vmatpush1.msra.mxu0 0.0
        %1030 = vmatprep.subr.mxu0 0.0
        %1031 = vmatpush1.msra.mxu0 0.0
        %1032 = vmatprep.subr.mxu0 0.0
        %1033 = vmatpush1.msra.mxu0 0.0
        %1034 = vmatprep.subr.mxu0 0.0
        %1035 = vmatpush1.msra.mxu0 0.0
        %1036 = vmatprep.subr.mxu0 0.0
        %1037 = vmatpush1.msra.mxu0 0.0
        %1038 = vmatprep.subr.mxu0 0.0
        %1039 = vmatpush1.msra.mxu0 0.0
        %1040 = vmatprep.subr.mxu0 0.0
        %1041 = vmatpush1.msra.mxu0 0.0
        %1042 = vmatprep.subr.mxu0 0.0
        %1043 = vmatpush1.msra.mxu0 0.0
        %1044 = vmatprep.subr.mxu0 0.0
        %1045 = vmatpush1.msra.mxu0 0.0
        %1046 = vmatprep.subr.mxu0 0.0
        %1047 = vmatpush1.msra.mxu0 0.0
        %1048 = vmatprep.subr.mxu0 0.0
        %1049 = vmatpush1.msra.mxu0 0.0
        %1050 = vmatprep.subr.mxu0 0.0
        %1051 = vmatpush1.msra.mxu0 0.0
        %1052 = vmatprep.mubr.f32.mxu0 0.0
        %1053 = vmatmul.mubr.f32.gmra.mrb[0].mxu0 %v986
        %v1054 = vpop.f32.mrb[0].mxu0
        %v1055 = vadd.f32 0.0, %v1054
        %v1056 = vpop.f32.mrb[0].mxu0
        %1057 = vdwg.mxu0
        %v1058 = vadd.f32 %v973, %v1055
        %s1059 = scalar_lea.vmem %s3, 56
        %v1060 = vld [vmem:[%s1059] sm:$0xff]
        %1061 = vrot.lane.b32.xlu0 %v467, 107
        %v1062 = vpop.permute.xlu0 %1061
        %1063 = vrot.lane.b32.xlu0 %v469, 107
        %v1064 = vpop.permute.xlu0 %1063
        %1065 = vrot.lane.b32.xlu0 %v471, 107
        %v1066 = vpop.permute.xlu0 %1065
        %v1071 = vsel %vm487, %v1060, 0
        %1073 = vmatprep.subr.mxu0 0.0
        %1074 = vmatpush1.msra.mxu0 %v1062
        %1075 = vmatprep.subr.mxu0 0.0
        %1076 = vmatpush1.msra.mxu0 %v1064
        %1077 = vmatprep.subr.mxu0 0.0
        %1078 = vmatpush1.msra.mxu0 %v1066
        %1079 = vmatprep.subr.mxu0 0.0
        %1080 = vmatpush1.msra.mxu0 0.0
        %1081 = vmatprep.subr.mxu0 0.0
        %1082 = vmatpush1.msra.mxu0 0.0
        %1083 = vmatprep.subr.mxu0 0.0
        %1084 = vmatpush1.msra.mxu0 0.0
        %1085 = vmatprep.subr.mxu0 0.0
        %1086 = vmatpush1.msra.mxu0 0.0
        %1087 = vmatprep.subr.mxu0 0.0
        %1088 = vmatpush1.msra.mxu0 0.0
        %1089 = vmatprep.subr.mxu0 0.0
        %1090 = vmatpush1.msra.mxu0 0.0
        %1091 = vmatprep.subr.mxu0 0.0
        %1092 = vmatpush1.msra.mxu0 0.0
        %1093 = vmatprep.subr.mxu0 0.0
        %1094 = vmatpush1.msra.mxu0 0.0
        %1095 = vmatprep.subr.mxu0 0.0
        %1096 = vmatpush1.msra.mxu0 0.0
        %1097 = vmatprep.subr.mxu0 0.0
        %1098 = vmatpush1.msra.mxu0 0.0
        %1099 = vmatprep.subr.mxu0 0.0
        %1100 = vmatpush1.msra.mxu0 0.0
        %1101 = vmatprep.subr.mxu0 0.0
        %1102 = vmatpush1.msra.mxu0 0.0
        %1103 = vmatprep.subr.mxu0 0.0
        %1104 = vmatpush1.msra.mxu0 0.0
        %1105 = vmatprep.subr.mxu0 0.0
        %1106 = vmatpush1.msra.mxu0 0.0
        %1107 = vmatprep.subr.mxu0 0.0
        %1108 = vmatpush1.msra.mxu0 0.0
        %1109 = vmatprep.subr.mxu0 0.0
        %1110 = vmatpush1.msra.mxu0 0.0
        %1111 = vmatprep.subr.mxu0 0.0
        %1112 = vmatpush1.msra.mxu0 0.0
        %1113 = vmatprep.subr.mxu0 0.0
        %1114 = vmatpush1.msra.mxu0 0.0
        %1115 = vmatprep.subr.mxu0 0.0
        %1116 = vmatpush1.msra.mxu0 0.0
        %1117 = vmatprep.subr.mxu0 0.0
        %1118 = vmatpush1.msra.mxu0 0.0
        %1119 = vmatprep.subr.mxu0 0.0
        %1120 = vmatpush1.msra.mxu0 0.0
        %1121 = vmatprep.subr.mxu0 0.0
        %1122 = vmatpush1.msra.mxu0 0.0
        %1123 = vmatprep.subr.mxu0 0.0
        %1124 = vmatpush1.msra.mxu0 0.0
        %1125 = vmatprep.subr.mxu0 0.0
        %1126 = vmatpush1.msra.mxu0 0.0
        %1127 = vmatprep.subr.mxu0 0.0
        %1128 = vmatpush1.msra.mxu0 0.0
        %1129 = vmatprep.subr.mxu0 0.0
        %1130 = vmatpush1.msra.mxu0 0.0
        %1131 = vmatprep.subr.mxu0 0.0
        %1132 = vmatpush1.msra.mxu0 0.0
        %1133 = vmatprep.subr.mxu0 0.0
        %1134 = vmatpush1.msra.mxu0 0.0
        %1135 = vmatprep.subr.mxu0 0.0
        %1136 = vmatpush1.msra.mxu0 0.0
        %1137 = vmatprep.mubr.f32.mxu0 0.0
        %1138 = vmatmul.mubr.f32.gmra.mrb[0].mxu0 %v1071
        %v1139 = vpop.f32.mrb[0].mxu0
        %v1140 = vadd.f32 0.0, %v1139
        %v1141 = vpop.f32.mrb[0].mxu0
        %1142 = vdwg.mxu0
        %v1143 = vadd.f32 %v1058, %v1140
        %s1144 = scalar_lea.vmem %s3, 64
        %v1145 = vld [vmem:[%s1144] sm:$0xff]
        %1146 = vrot.lane.b32.xlu0 %v467, 106
        %v1147 = vpop.permute.xlu0 %1146
        %1148 = vrot.lane.b32.xlu0 %v469, 106
        %v1149 = vpop.permute.xlu0 %1148
        %1150 = vrot.lane.b32.xlu0 %v471, 106
        %v1151 = vpop.permute.xlu0 %1150
        %v1156 = vsel %vm487, %v1145, 0
        %1158 = vmatprep.subr.mxu0 0.0
        %1159 = vmatpush1.msra.mxu0 %v1147
        %1160 = vmatprep.subr.mxu0 0.0
        %1161 = vmatpush1.msra.mxu0 %v1149
        %1162 = vmatprep.subr.mxu0 0.0
        %1163 = vmatpush1.msra.mxu0 %v1151
        %1164 = vmatprep.subr.mxu0 0.0
        %1165 = vmatpush1.msra.mxu0 0.0
        %1166 = vmatprep.subr.mxu0 0.0
        %1167 = vmatpush1.msra.mxu0 0.0
        %1168 = vmatprep.subr.mxu0 0.0
        %1169 = vmatpush1.msra.mxu0 0.0
        %1170 = vmatprep.subr.mxu0 0.0
        %1171 = vmatpush1.msra.mxu0 0.0
        %1172 = vmatprep.subr.mxu0 0.0
        %1173 = vmatpush1.msra.mxu0 0.0
        %1174 = vmatprep.subr.mxu0 0.0
        %1175 = vmatpush1.msra.mxu0 0.0
        %1176 = vmatprep.subr.mxu0 0.0
        %1177 = vmatpush1.msra.mxu0 0.0
        %1178 = vmatprep.subr.mxu0 0.0
        %1179 = vmatpush1.msra.mxu0 0.0
        %1180 = vmatprep.subr.mxu0 0.0
        %1181 = vmatpush1.msra.mxu0 0.0
        %1182 = vmatprep.subr.mxu0 0.0
        %1183 = vmatpush1.msra.mxu0 0.0
        %1184 = vmatprep.subr.mxu0 0.0
        %1185 = vmatpush1.msra.mxu0 0.0
        %1186 = vmatprep.subr.mxu0 0.0
        %1187 = vmatpush1.msra.mxu0 0.0
        %1188 = vmatprep.subr.mxu0 0.0
        %1189 = vmatpush1.msra.mxu0 0.0
        %1190 = vmatprep.subr.mxu0 0.0
        %1191 = vmatpush1.msra.mxu0 0.0
        %1192 = vmatprep.subr.mxu0 0.0
        %1193 = vmatpush1.msra.mxu0 0.0
        %1194 = vmatprep.subr.mxu0 0.0
        %1195 = vmatpush1.msra.mxu0 0.0
        %1196 = vmatprep.subr.mxu0 0.0
        %1197 = vmatpush1.msra.mxu0 0.0
        %1198 = vmatprep.subr.mxu0 0.0
        %1199 = vmatpush1.msra.mxu0 0.0
        %1200 = vmatprep.subr.mxu0 0.0
        %1201 = vmatpush1.msra.mxu0 0.0
        %1202 = vmatprep.subr.mxu0 0.0
        %1203 = vmatpush1.msra.mxu0 0.0
        %1204 = vmatprep.subr.mxu0 0.0
        %1205 = vmatpush1.msra.mxu0 0.0
        %1206 = vmatprep.subr.mxu0 0.0
        %1207 = vmatpush1.msra.mxu0 0.0
        %1208 = vmatprep.subr.mxu0 0.0
        %1209 = vmatpush1.msra.mxu0 0.0
        %1210 = vmatprep.subr.mxu0 0.0
        %1211 = vmatpush1.msra.mxu0 0.0
        %1212 = vmatprep.subr.mxu0 0.0
        %1213 = vmatpush1.msra.mxu0 0.0
        %1214 = vmatprep.subr.mxu0 0.0
        %1215 = vmatpush1.msra.mxu0 0.0
        %1216 = vmatprep.subr.mxu0 0.0
        %1217 = vmatpush1.msra.mxu0 0.0
        %1218 = vmatprep.subr.mxu0 0.0
        %1219 = vmatpush1.msra.mxu0 0.0
        %1220 = vmatprep.subr.mxu0 0.0
        %1221 = vmatpush1.msra.mxu0 0.0
        %1222 = vmatprep.mubr.f32.mxu0 0.0
        %1223 = vmatmul.mubr.f32.gmra.mrb[0].mxu0 %v1156
        %v1224 = vpop.f32.mrb[0].mxu0
        %v1225 = vadd.f32 0.0, %v1224
        %v1226 = vpop.f32.mrb[0].mxu0
        %1227 = vdwg.mxu0
        %v1228 = vadd.f32 %v1143, %v1225
        %v1229 = vadd.f32 %v1228, 0.0
        %v1230 = vmul.f32 %v1228, %v1228
        %v1231 = vadd.f32 %v1230, 0.0
        %v1232 = vpack.c.bf16 %v1228, %v1228
        %vm1233 = vcmask 650240
        %1234 = vst.msk [vmem:[%s419] sm:$0xf] %vm1233, %v1232
        %v1235 = vld [vmem:[%s468] sm:$0xff]
        %v1236 = vld [vmem:[%s470] sm:$0xff]
        %s1237 = scalar_lea.vmem %s365, 24 [#allocation2]
        %v1238 = vld [vmem:[%s1237] sm:$0xff]
        %v1239 = vld [vmem:[%s3] sm:$0xff]
        %v1240 = vld [vmem:[%s473] sm:$0xff]
        %1244 = vrot.lane.b32.xlu0 %v1235, 127
        %v1245 = vpop.permute.xlu0 %1244
        %1246 = vrot.lane.b32.xlu0 %v1236, 127
        %v1247 = vpop.permute.xlu0 %1246
        %1248 = vrot.lane.b32.xlu0 %v1238, 127
        %v1249 = vpop.permute.xlu0 %1248
        %v1254 = vsel %vm487, %v1240, 0
        %1256 = vmatprep.subr.mxu0 0.0
        %1257 = vmatpush1.msra.mxu0 %v1245
        %1258 = vmatprep.subr.mxu0 0.0
        %1259 = vmatpush1.msra.mxu0 %v1247
        %1260 = vmatprep.subr.mxu0 0.0
        %1261 = vmatpush1.msra.mxu0 %v1249
        %1262 = vmatprep.subr.mxu0 0.0
        %1263 = vmatpush1.msra.mxu0 0.0
        %1264 = vmatprep.subr.mxu0 0.0
        %1265 = vmatpush1.msra.mxu0 0.0
        %1266 = vmatprep.subr.mxu0 0.0
        %1267 = vmatpush1.msra.mxu0 0.0
        %1268 = vmatprep.subr.mxu0 0.0
        %1269 = vmatpush1.msra.mxu0 0.0
        %1270 = vmatprep.subr.mxu0 0.0
        %1271 = vmatpush1.msra.mxu0 0.0
        %1272 = vmatprep.subr.mxu0 0.0
        %1273 = vmatpush1.msra.mxu0 0.0
        %1274 = vmatprep.subr.mxu0 0.0
        %1275 = vmatpush1.msra.mxu0 0.0
        %1276 = vmatprep.subr.mxu0 0.0
        %1277 = vmatpush1.msra.mxu0 0.0
        %1278 = vmatprep.subr.mxu0 0.0
        %1279 = vmatpush1.msra.mxu0 0.0
        %1280 = vmatprep.subr.mxu0 0.0
        %1281 = vmatpush1.msra.mxu0 0.0
        %1282 = vmatprep.subr.mxu0 0.0
        %1283 = vmatpush1.msra.mxu0 0.0
        %1284 = vmatprep.subr.mxu0 0.0
        %1285 = vmatpush1.msra.mxu0 0.0
        %1286 = vmatprep.subr.mxu0 0.0
        %1287 = vmatpush1.msra.mxu0 0.0
        %1288 = vmatprep.subr.mxu0 0.0
        %1289 = vmatpush1.msra.mxu0 0.0
        %1290 = vmatprep.subr.mxu0 0.0
        %1291 = vmatpush1.msra.mxu0 0.0
        %1292 = vmatprep.subr.mxu0 0.0
        %1293 = vmatpush1.msra.mxu0 0.0
        %1294 = vmatprep.subr.mxu0 0.0
        %1295 = vmatpush1.msra.mxu0 0.0
        %1296 = vmatprep.subr.mxu0 0.0
        %1297 = vmatpush1.msra.mxu0 0.0
        %1298 = vmatprep.subr.mxu0 0.0
        %1299 = vmatpush1.msra.mxu0 0.0
        %1300 = vmatprep.subr.mxu0 0.0
        %1301 = vmatpush1.msra.mxu0 0.0
        %1302 = vmatprep.subr.mxu0 0.0
        %1303 = vmatpush1.msra.mxu0 0.0
        %1304 = vmatprep.subr.mxu0 0.0
        %1305 = vmatpush1.msra.mxu0 0.0
        %1306 = vmatprep.subr.mxu0 0.0
        %1307 = vmatpush1.msra.mxu0 0.0
        %1308 = vmatprep.subr.mxu0 0.0
        %1309 = vmatpush1.msra.mxu0 0.0
        %1310 = vmatprep.subr.mxu0 0.0
        %1311 = vmatpush1.msra.mxu0 0.0
        %1312 = vmatprep.subr.mxu0 0.0
        %1313 = vmatpush1.msra.mxu0 0.0
        %1314 = vmatprep.subr.mxu0 0.0
        %1315 = vmatpush1.msra.mxu0 0.0
        %1316 = vmatprep.subr.mxu0 0.0
        %1317 = vmatpush1.msra.mxu0 0.0
        %1318 = vmatprep.subr.mxu0 0.0
        %1319 = vmatpush1.msra.mxu0 0.0
        %1320 = vmatprep.mubr.f32.mxu0 0.0
        %1321 = vmatmul.mubr.f32.gmra.mrb[0].mxu0 %v1254
        %v1322 = vpop.f32.mrb[0].mxu0
        %v1323 = vadd.f32 0.0, %v1322
        %v1324 = vpop.f32.mrb[0].mxu0
        %1325 = vdwg.mxu0
        %v1327 = vsel %vm487, %v1239, 0
        %1329 = vmatprep.subr.mxu0 0.0
        %1330 = vmatpush1.msra.mxu0 %v1235
        %1331 = vmatprep.subr.mxu0 0.0
        %1332 = vmatpush1.msra.mxu0 %v1236
        %1333 = vmatprep.subr.mxu0 0.0
        %1334 = vmatpush1.msra.mxu0 %v1238
        %1335 = vmatprep.subr.mxu0 0.0
        %1336 = vmatpush1.msra.mxu0 0.0
        %1337 = vmatprep.subr.mxu0 0.0
        %1338 = vmatpush1.msra.mxu0 0.0
        %1339 = vmatprep.subr.mxu0 0.0
        %1340 = vmatpush1.msra.mxu0 0.0
        %1341 = vmatprep.subr.mxu0 0.0
        %1342 = vmatpush1.msra.mxu0 0.0
        %1343 = vmatprep.subr.mxu0 0.0
        %1344 = vmatpush1.msra.mxu0 0.0
        %1345 = vmatprep.subr.mxu0 0.0
        %1346 = vmatpush1.msra.mxu0 0.0
        %1347 = vmatprep.subr.mxu0 0.0
        %1348 = vmatpush1.msra.mxu0 0.0
        %1349 = vmatprep.subr.mxu0 0.0
        %1350 = vmatpush1.msra.mxu0 0.0
        %1351 = vmatprep.subr.mxu0 0.0
        %1352 = vmatpush1.msra.mxu0 0.0
        %1353 = vmatprep.subr.mxu0 0.0
        %1354 = vmatpush1.msra.mxu0 0.0
        %1355 = vmatprep.subr.mxu0 0.0
        %1356 = vmatpush1.msra.mxu0 0.0
        %1357 = vmatprep.subr.mxu0 0.0
        %1358 = vmatpush1.msra.mxu0 0.0
        %1359 = vmatprep.subr.mxu0 0.0
        %1360 = vmatpush1.msra.mxu0 0.0
        %1361 = vmatprep.subr.mxu0 0.0
        %1362 = vmatpush1.msra.mxu0 0.0
        %1363 = vmatprep.subr.mxu0 0.0
        %1364 = vmatpush1.msra.mxu0 0.0
        %1365 = vmatprep.subr.mxu0 0.0
        %1366 = vmatpush1.msra.mxu0 0.0
        %1367 = vmatprep.subr.mxu0 0.0
        %1368 = vmatpush1.msra.mxu0 0.0
        %1369 = vmatprep.subr.mxu0 0.0
        %1370 = vmatpush1.msra.mxu0 0.0
        %1371 = vmatprep.subr.mxu0 0.0
        %1372 = vmatpush1.msra.mxu0 0.0
        %1373 = vmatprep.subr.mxu0 0.0
        %1374 = vmatpush1.msra.mxu0 0.0
        %1375 = vmatprep.subr.mxu0 0.0
        %1376 = vmatpush1.msra.mxu0 0.0
        %1377 = vmatprep.subr.mxu0 0.0
        %1378 = vmatpush1.msra.mxu0 0.0
        %1379 = vmatprep.subr.mxu0 0.0
        %1380 = vmatpush1.msra.mxu0 0.0
        %1381 = vmatprep.subr.mxu0 0.0
        %1382 = vmatpush1.msra.mxu0 0.0
        %1383 = vmatprep.subr.mxu0 0.0
        %1384 = vmatpush1.msra.mxu0 0.0
        %1385 = vmatprep.subr.mxu0 0.0
        %1386 = vmatpush1.msra.mxu0 0.0
        %1387 = vmatprep.subr.mxu0 0.0
        %1388 = vmatpush1.msra.mxu0 0.0
        %1389 = vmatprep.subr.mxu0 0.0
        %1390 = vmatpush1.msra.mxu0 0.0
        %1391 = vmatprep.subr.mxu0 0.0
        %1392 = vmatpush1.msra.mxu0 0.0
        %1393 = vmatprep.mubr.f32.mxu0 0.0
        %1394 = vmatmul.mubr.f32.gmra.mrb[0].mxu0 %v1327
        %v1395 = vpop.f32.mrb[0].mxu0
        %v1396 = vadd.f32 %v1323, %v1395
        %v1397 = vpop.f32.mrb[0].mxu0
        %1398 = vdwg.mxu0
        %v1399 = vld [vmem:[%s634] sm:$0xff]
        %1400 = vrot.lane.b32.xlu0 %v1235, 126
        %v1401 = vpop.permute.xlu0 %1400
        %1402 = vrot.lane.b32.xlu0 %v1236, 126
        %v1403 = vpop.permute.xlu0 %1402
        %1404 = vrot.lane.b32.xlu0 %v1238, 126
        %v1405 = vpop.permute.xlu0 %1404
        %v1410 = vsel %vm487, %v1399, 0
        %1412 = vmatprep.subr.mxu0 0.0
        %1413 = vmatpush1.msra.mxu0 %v1401
        %1414 = vmatprep.subr.mxu0 0.0
        %1415 = vmatpush1.msra.mxu0 %v1403
        %1416 = vmatprep.subr.mxu0 0.0
        %1417 = vmatpush1.msra.mxu0 %v1405
        %1418 = vmatprep.subr.mxu0 0.0
        %1419 = vmatpush1.msra.mxu0 0.0
        %1420 = vmatprep.subr.mxu0 0.0
        %1421 = vmatpush1.msra.mxu0 0.0
        %1422 = vmatprep.subr.mxu0 0.0
        %1423 = vmatpush1.msra.mxu0 0.0
        %1424 = vmatprep.subr.mxu0 0.0
        %1425 = vmatpush1.msra.mxu0 0.0
        %1426 = vmatprep.subr.mxu0 0.0
        %1427 = vmatpush1.msra.mxu0 0.0
        %1428 = vmatprep.subr.mxu0 0.0
        %1429 = vmatpush1.msra.mxu0 0.0
        %1430 = vmatprep.subr.mxu0 0.0
        %1431 = vmatpush1.msra.mxu0 0.0
        %1432 = vmatprep.subr.mxu0 0.0
        %1433 = vmatpush1.msra.mxu0 0.0
        %1434 = vmatprep.subr.mxu0 0.0
        %1435 = vmatpush1.msra.mxu0 0.0
        %1436 = vmatprep.subr.mxu0 0.0
        %1437 = vmatpush1.msra.mxu0 0.0
        %1438 = vmatprep.subr.mxu0 0.0
        %1439 = vmatpush1.msra.mxu0 0.0
        %1440 = vmatprep.subr.mxu0 0.0
        %1441 = vmatpush1.msra.mxu0 0.0
        %1442 = vmatprep.subr.mxu0 0.0
        %1443 = vmatpush1.msra.mxu0 0.0
        %1444 = vmatprep.subr.mxu0 0.0
        %1445 = vmatpush1.msra.mxu0 0.0
        %1446 = vmatprep.subr.mxu0 0.0
        %1447 = vmatpush1.msra.mxu0 0.0
        %1448 = vmatprep.subr.mxu0 0.0
        %1449 = vmatpush1.msra.mxu0 0.0
        %1450 = vmatprep.subr.mxu0 0.0
        %1451 = vmatpush1.msra.mxu0 0.0
        %1452 = vmatprep.subr.mxu0 0.0
        %1453 = vmatpush1.msra.mxu0 0.0
        %1454 = vmatprep.subr.mxu0 0.0
        %1455 = vmatpush1.msra.mxu0 0.0
        %1456 = vmatprep.subr.mxu0 0.0
        %1457 = vmatpush1.msra.mxu0 0.0
        %1458 = vmatprep.subr.mxu0 0.0
        %1459 = vmatpush1.msra.mxu0 0.0
        %1460 = vmatprep.subr.mxu0 0.0
        %1461 = vmatpush1.msra.mxu0 0.0
        %1462 = vmatprep.subr.mxu0 0.0
        %1463 = vmatpush1.msra.mxu0 0.0
        %1464 = vmatprep.subr.mxu0 0.0
        %1465 = vmatpush1.msra.mxu0 0.0
        %1466 = vmatprep.subr.mxu0 0.0
        %1467 = vmatpush1.msra.mxu0 0.0
        %1468 = vmatprep.subr.mxu0 0.0
        %1469 = vmatpush1.msra.mxu0 0.0
        %1470 = vmatprep.subr.mxu0 0.0
        %1471 = vmatpush1.msra.mxu0 0.0
        %1472 = vmatprep.subr.mxu0 0.0
        %1473 = vmatpush1.msra.mxu0 0.0
        %1474 = vmatprep.subr.mxu0 0.0
        %1475 = vmatpush1.msra.mxu0 0.0
        %1476 = vmatprep.mubr.f32.mxu0 0.0
        %1477 = vmatmul.mubr.f32.gmra.mrb[0].mxu0 %v1410
        %v1478 = vpop.f32.mrb[0].mxu0
        %v1479 = vadd.f32 0.0, %v1478
        %v1480 = vpop.f32.mrb[0].mxu0
        %1481 = vdwg.mxu0
        %v1482 = vadd.f32 %v1396, %v1479
        %v1483 = vld [vmem:[%s719] sm:$0xff]
        %1484 = vrot.lane.b32.xlu0 %v1235, 118
        %v1485 = vpop.permute.xlu0 %1484
        %1486 = vrot.lane.b32.xlu0 %v1236, 118
        %v1487 = vpop.permute.xlu0 %1486
        %1488 = vrot.lane.b32.xlu0 %v1238, 118
        %v1489 = vpop.permute.xlu0 %1488
        %v1494 = vsel %vm487, %v1483, 0
        %1496 = vmatprep.subr.mxu0 0.0
        %1497 = vmatpush1.msra.mxu0 %v1485
        %1498 = vmatprep.subr.mxu0 0.0
        %1499 = vmatpush1.msra.mxu0 %v1487
        %1500 = vmatprep.subr.mxu0 0.0
        %1501 = vmatpush1.msra.mxu0 %v1489
        %1502 = vmatprep.subr.mxu0 0.0
        %1503 = vmatpush1.msra.mxu0 0.0
        %1504 = vmatprep.subr.mxu0 0.0
        %1505 = vmatpush1.msra.mxu0 0.0
        %1506 = vmatprep.subr.mxu0 0.0
        %1507 = vmatpush1.msra.mxu0 0.0
        %1508 = vmatprep.subr.mxu0 0.0
        %1509 = vmatpush1.msra.mxu0 0.0
        %1510 = vmatprep.subr.mxu0 0.0
        %1511 = vmatpush1.msra.mxu0 0.0
        %1512 = vmatprep.subr.mxu0 0.0
        %1513 = vmatpush1.msra.mxu0 0.0
        %1514 = vmatprep.subr.mxu0 0.0
        %1515 = vmatpush1.msra.mxu0 0.0
        %1516 = vmatprep.subr.mxu0 0.0
        %1517 = vmatpush1.msra.mxu0 0.0
        %1518 = vmatprep.subr.mxu0 0.0
        %1519 = vmatpush1.msra.mxu0 0.0
        %1520 = vmatprep.subr.mxu0 0.0
        %1521 = vmatpush1.msra.mxu0 0.0
        %1522 = vmatprep.subr.mxu0 0.0
        %1523 = vmatpush1.msra.mxu0 0.0
        %1524 = vmatprep.subr.mxu0 0.0
        %1525 = vmatpush1.msra.mxu0 0.0
        %1526 = vmatprep.subr.mxu0 0.0
        %1527 = vmatpush1.msra.mxu0 0.0
        %1528 = vmatprep.subr.mxu0 0.0
        %1529 = vmatpush1.msra.mxu0 0.0
        %1530 = vmatprep.subr.mxu0 0.0
        %1531 = vmatpush1.msra.mxu0 0.0
        %1532 = vmatprep.subr.mxu0 0.0
        %1533 = vmatpush1.msra.mxu0 0.0
        %1534 = vmatprep.subr.mxu0 0.0
        %1535 = vmatpush1.msra.mxu0 0.0
        %1536 = vmatprep.subr.mxu0 0.0
        %1537 = vmatpush1.msra.mxu0 0.0
        %1538 = vmatprep.subr.mxu0 0.0
        %1539 = vmatpush1.msra.mxu0 0.0
        %1540 = vmatprep.subr.mxu0 0.0
        %1541 = vmatpush1.msra.mxu0 0.0
        %1542 = vmatprep.subr.mxu0 0.0
        %1543 = vmatpush1.msra.mxu0 0.0
        %1544 = vmatprep.subr.mxu0 0.0
        %1545 = vmatpush1.msra.mxu0 0.0
        %1546 = vmatprep.subr.mxu0 0.0
        %1547 = vmatpush1.msra.mxu0 0.0
        %1548 = vmatprep.subr.mxu0 0.0
        %1549 = vmatpush1.msra.mxu0 0.0
        %1550 = vmatprep.subr.mxu0 0.0
        %1551 = vmatpush1.msra.mxu0 0.0
        %1552 = vmatprep.subr.mxu0 0.0
        %1553 = vmatpush1.msra.mxu0 0.0
        %1554 = vmatprep.subr.mxu0 0.0
        %1555 = vmatpush1.msra.mxu0 0.0
        %1556 = vmatprep.subr.mxu0 0.0
        %1557 = vmatpush1.msra.mxu0 0.0
        %1558 = vmatprep.subr.mxu0 0.0
        %1559 = vmatpush1.msra.mxu0 0.0
        %1560 = vmatprep.mubr.f32.mxu0 0.0
        %1561 = vmatmul.mubr.f32.gmra.mrb[0].mxu0 %v1494
        %v1562 = vpop.f32.mrb[0].mxu0
        %v1563 = vadd.f32 0.0, %v1562
        %v1564 = vpop.f32.mrb[0].mxu0
        %1565 = vdwg.mxu0
        %v1566 = vadd.f32 %v1482, %v1563
        %v1567 = vld [vmem:[%s804] sm:$0xff]
        %1568 = vrot.lane.b32.xlu0 %v1235, 117
        %v1569 = vpop.permute.xlu0 %1568
        %1570 = vrot.lane.b32.xlu0 %v1236, 117
        %v1571 = vpop.permute.xlu0 %1570
        %1572 = vrot.lane.b32.xlu0 %v1238, 117
        %v1573 = vpop.permute.xlu0 %1572
        %v1578 = vsel %vm487, %v1567, 0
        %1580 = vmatprep.subr.mxu0 0.0
        %1581 = vmatpush1.msra.mxu0 %v1569
        %1582 = vmatprep.subr.mxu0 0.0
        %1583 = vmatpush1.msra.mxu0 %v1571
        %1584 = vmatprep.subr.mxu0 0.0
        %1585 = vmatpush1.msra.mxu0 %v1573
        %1586 = vmatprep.subr.mxu0 0.0
        %1587 = vmatpush1.msra.mxu0 0.0
        %1588 = vmatprep.subr.mxu0 0.0
        %1589 = vmatpush1.msra.mxu0 0.0
        %1590 = vmatprep.subr.mxu0 0.0
        %1591 = vmatpush1.msra.mxu0 0.0
        %1592 = vmatprep.subr.mxu0 0.0
        %1593 = vmatpush1.msra.mxu0 0.0
        %1594 = vmatprep.subr.mxu0 0.0
        %1595 = vmatpush1.msra.mxu0 0.0
        %1596 = vmatprep.subr.mxu0 0.0
        %1597 = vmatpush1.msra.mxu0 0.0
        %1598 = vmatprep.subr.mxu0 0.0
        %1599 = vmatpush1.msra.mxu0 0.0
        %1600 = vmatprep.subr.mxu0 0.0
        %1601 = vmatpush1.msra.mxu0 0.0
        %1602 = vmatprep.subr.mxu0 0.0
        %1603 = vmatpush1.msra.mxu0 0.0
        %1604 = vmatprep.subr.mxu0 0.0
        %1605 = vmatpush1.msra.mxu0 0.0
        %1606 = vmatprep.subr.mxu0 0.0
        %1607 = vmatpush1.msra.mxu0 0.0
        %1608 = vmatprep.subr.mxu0 0.0
        %1609 = vmatpush1.msra.mxu0 0.0
        %1610 = vmatprep.subr.mxu0 0.0
        %1611 = vmatpush1.msra.mxu0 0.0
        %1612 = vmatprep.subr.mxu0 0.0
        %1613 = vmatpush1.msra.mxu0 0.0
        %1614 = vmatprep.subr.mxu0 0.0
        %1615 = vmatpush1.msra.mxu0 0.0
        %1616 = vmatprep.subr.mxu0 0.0
        %1617 = vmatpush1.msra.mxu0 0.0
        %1618 = vmatprep.subr.mxu0 0.0
        %1619 = vmatpush1.msra.mxu0 0.0
        %1620 = vmatprep.subr.mxu0 0.0
        %1621 = vmatpush1.msra.mxu0 0.0
        %1622 = vmatprep.subr.mxu0 0.0
        %1623 = vmatpush1.msra.mxu0 0.0
        %1624 = vmatprep.subr.mxu0 0.0
        %1625 = vmatpush1.msra.mxu0 0.0
        %1626 = vmatprep.subr.mxu0 0.0
        %1627 = vmatpush1.msra.mxu0 0.0
        %1628 = vmatprep.subr.mxu0 0.0
        %1629 = vmatpush1.msra.mxu0 0.0
        %1630 = vmatprep.subr.mxu0 0.0
        %1631 = vmatpush1.msra.mxu0 0.0
        %1632 = vmatprep.subr.mxu0 0.0
        %1633 = vmatpush1.msra.mxu0 0.0
        %1634 = vmatprep.subr.mxu0 0.0
        %1635 = vmatpush1.msra.mxu0 0.0
        %1636 = vmatprep.subr.mxu0 0.0
        %1637 = vmatpush1.msra.mxu0 0.0
        %1638 = vmatprep.subr.mxu0 0.0
        %1639 = vmatpush1.msra.mxu0 0.0
        %1640 = vmatprep.subr.mxu0 0.0
        %1641 = vmatpush1.msra.mxu0 0.0
        %1642 = vmatprep.subr.mxu0 0.0
        %1643 = vmatpush1.msra.mxu0 0.0
        %1644 = vmatprep.mubr.f32.mxu0 0.0
        %1645 = vmatmul.mubr.f32.gmra.mrb[0].mxu0 %v1578
        %v1646 = vpop.f32.mrb[0].mxu0
        %v1647 = vadd.f32 0.0, %v1646
        %v1648 = vpop.f32.mrb[0].mxu0
        %1649 = vdwg.mxu0
        %v1650 = vadd.f32 %v1566, %v1647
        %v1651 = vld [vmem:[%s889] sm:$0xff]
        %1652 = vrot.lane.b32.xlu0 %v1235, 116
        %v1653 = vpop.permute.xlu0 %1652
        %1654 = vrot.lane.b32.xlu0 %v1236, 116
        %v1655 = vpop.permute.xlu0 %1654
        %1656 = vrot.lane.b32.xlu0 %v1238, 116
        %v1657 = vpop.permute.xlu0 %1656
        %v1662 = vsel %vm487, %v1651, 0
        %1664 = vmatprep.subr.mxu0 0.0
        %1665 = vmatpush1.msra.mxu0 %v1653
        %1666 = vmatprep.subr.mxu0 0.0
        %1667 = vmatpush1.msra.mxu0 %v1655
        %1668 = vmatprep.subr.mxu0 0.0
        %1669 = vmatpush1.msra.mxu0 %v1657
        %1670 = vmatprep.subr.mxu0 0.0
        %1671 = vmatpush1.msra.mxu0 0.0
        %1672 = vmatprep.subr.mxu0 0.0
        %1673 = vmatpush1.msra.mxu0 0.0
        %1674 = vmatprep.subr.mxu0 0.0
        %1675 = vmatpush1.msra.mxu0 0.0
        %1676 = vmatprep.subr.mxu0 0.0
        %1677 = vmatpush1.msra.mxu0 0.0
        %1678 = vmatprep.subr.mxu0 0.0
        %1679 = vmatpush1.msra.mxu0 0.0
        %1680 = vmatprep.subr.mxu0 0.0
        %1681 = vmatpush1.msra.mxu0 0.0
        %1682 = vmatprep.subr.mxu0 0.0
        %1683 = vmatpush1.msra.mxu0 0.0
        %1684 = vmatprep.subr.mxu0 0.0
        %1685 = vmatpush1.msra.mxu0 0.0
        %1686 = vmatprep.subr.mxu0 0.0
        %1687 = vmatpush1.msra.mxu0 0.0
        %1688 = vmatprep.subr.mxu0 0.0
        %1689 = vmatpush1.msra.mxu0 0.0
        %1690 = vmatprep.subr.mxu0 0.0
        %1691 = vmatpush1.msra.mxu0 0.0
        %1692 = vmatprep.subr.mxu0 0.0
        %1693 = vmatpush1.msra.mxu0 0.0
        %1694 = vmatprep.subr.mxu0 0.0
        %1695 = vmatpush1.msra.mxu0 0.0
        %1696 = vmatprep.subr.mxu0 0.0
        %1697 = vmatpush1.msra.mxu0 0.0
        %1698 = vmatprep.subr.mxu0 0.0
        %1699 = vmatpush1.msra.mxu0 0.0
        %1700 = vmatprep.subr.mxu0 0.0
        %1701 = vmatpush1.msra.mxu0 0.0
        %1702 = vmatprep.subr.mxu0 0.0
        %1703 = vmatpush1.msra.mxu0 0.0
        %1704 = vmatprep.subr.mxu0 0.0
        %1705 = vmatpush1.msra.mxu0 0.0
        %1706 = vmatprep.subr.mxu0 0.0
        %1707 = vmatpush1.msra.mxu0 0.0
        %1708 = vmatprep.subr.mxu0 0.0
        %1709 = vmatpush1.msra.mxu0 0.0
        %1710 = vmatprep.subr.mxu0 0.0
        %1711 = vmatpush1.msra.mxu0 0.0
        %1712 = vmatprep.subr.mxu0 0.0
        %1713 = vmatpush1.msra.mxu0 0.0
        %1714 = vmatprep.subr.mxu0 0.0
        %1715 = vmatpush1.msra.mxu0 0.0
        %1716 = vmatprep.subr.mxu0 0.0
        %1717 = vmatpush1.msra.mxu0 0.0
        %1718 = vmatprep.subr.mxu0 0.0
        %1719 = vmatpush1.msra.mxu0 0.0
        %1720 = vmatprep.subr.mxu0 0.0
        %1721 = vmatpush1.msra.mxu0 0.0
        %1722 = vmatprep.subr.mxu0 0.0
        %1723 = vmatpush1.msra.mxu0 0.0
        %1724 = vmatprep.subr.mxu0 0.0
        %1725 = vmatpush1.msra.mxu0 0.0
        %1726 = vmatprep.subr.mxu0 0.0
        %1727 = vmatpush1.msra.mxu0 0.0
        %1728 = vmatprep.mubr.f32.mxu0 0.0
        %1729 = vmatmul.mubr.f32.gmra.mrb[0].mxu0 %v1662
        %v1730 = vpop.f32.mrb[0].mxu0
        %v1731 = vadd.f32 0.0, %v1730
        %v1732 = vpop.f32.mrb[0].mxu0
        %1733 = vdwg.mxu0
        %v1734 = vadd.f32 %v1650, %v1731
        %v1735 = vld [vmem:[%s974] sm:$0xff]
        %1736 = vrot.lane.b32.xlu0 %v1235, 108
        %v1737 = vpop.permute.xlu0 %1736
        %1738 = vrot.lane.b32.xlu0 %v1236, 108
        %v1739 = vpop.permute.xlu0 %1738
        %1740 = vrot.lane.b32.xlu0 %v1238, 108
        %v1741 = vpop.permute.xlu0 %1740
        %v1746 = vsel %vm487, %v1735, 0
        %1748 = vmatprep.subr.mxu0 0.0
        %1749 = vmatpush1.msra.mxu0 %v1737
        %1750 = vmatprep.subr.mxu0 0.0
        %1751 = vmatpush1.msra.mxu0 %v1739
        %1752 = vmatprep.subr.mxu0 0.0
        %1753 = vmatpush1.msra.mxu0 %v1741
        %1754 = vmatprep.subr.mxu0 0.0
        %1755 = vmatpush1.msra.mxu0 0.0
        %1756 = vmatprep.subr.mxu0 0.0
        %1757 = vmatpush1.msra.mxu0 0.0
        %1758 = vmatprep.subr.mxu0 0.0
        %1759 = vmatpush1.msra.mxu0 0.0
        %1760 = vmatprep.subr.mxu0 0.0
        %1761 = vmatpush1.msra.mxu0 0.0
        %1762 = vmatprep.subr.mxu0 0.0
        %1763 = vmatpush1.msra.mxu0 0.0
        %1764 = vmatprep.subr.mxu0 0.0
        %1765 = vmatpush1.msra.mxu0 0.0
        %1766 = vmatprep.subr.mxu0 0.0
        %1767 = vmatpush1.msra.mxu0 0.0
        %1768 = vmatprep.subr.mxu0 0.0
        %1769 = vmatpush1.msra.mxu0 0.0
        %1770 = vmatprep.subr.mxu0 0.0
        %1771 = vmatpush1.msra.mxu0 0.0
        %1772 = vmatprep.subr.mxu0 0.0
        %1773 = vmatpush1.msra.mxu0 0.0
        %1774 = vmatprep.subr.mxu0 0.0
        %1775 = vmatpush1.msra.mxu0 0.0
        %1776 = vmatprep.subr.mxu0 0.0
        %1777 = vmatpush1.msra.mxu0 0.0
        %1778 = vmatprep.subr.mxu0 0.0
        %1779 = vmatpush1.msra.mxu0 0.0
        %1780 = vmatprep.subr.mxu0 0.0
        %1781 = vmatpush1.msra.mxu0 0.0
        %1782 = vmatprep.subr.mxu0 0.0
        %1783 = vmatpush1.msra.mxu0 0.0
        %1784 = vmatprep.subr.mxu0 0.0
        %1785 = vmatpush1.msra.mxu0 0.0
        %1786 = vmatprep.subr.mxu0 0.0
        %1787 = vmatpush1.msra.mxu0 0.0
        %1788 = vmatprep.subr.mxu0 0.0
        %1789 = vmatpush1.msra.mxu0 0.0
        %1790 = vmatprep.subr.mxu0 0.0
        %1791 = vmatpush1.msra.mxu0 0.0
        %1792 = vmatprep.subr.mxu0 0.0
        %1793 = vmatpush1.msra.mxu0 0.0
        %1794 = vmatprep.subr.mxu0 0.0
        %1795 = vmatpush1.msra.mxu0 0.0
        %1796 = vmatprep.subr.mxu0 0.0
        %1797 = vmatpush1.msra.mxu0 0.0
        %1798 = vmatprep.subr.mxu0 0.0
        %1799 = vmatpush1.msra.mxu0 0.0
        %1800 = vmatprep.subr.mxu0 0.0
        %1801 = vmatpush1.msra.mxu0 0.0
        %1802 = vmatprep.subr.mxu0 0.0
        %1803 = vmatpush1.msra.mxu0 0.0
        %1804 = vmatprep.subr.mxu0 0.0
        %1805 = vmatpush1.msra.mxu0 0.0
        %1806 = vmatprep.subr.mxu0 0.0
        %1807 = vmatpush1.msra.mxu0 0.0
        %1808 = vmatprep.subr.mxu0 0.0
        %1809 = vmatpush1.msra.mxu0 0.0
        %1810 = vmatprep.subr.mxu0 0.0
        %1811 = vmatpush1.msra.mxu0 0.0
        %1812 = vmatprep.mubr.f32.mxu0 0.0
        %1813 = vmatmul.mubr.f32.gmra.mrb[0].mxu0 %v1746
        %v1814 = vpop.f32.mrb[0].mxu0
        %v1815 = vadd.f32 0.0, %v1814
        %v1816 = vpop.f32.mrb[0].mxu0
        %1817 = vdwg.mxu0
        %v1818 = vadd.f32 %v1734, %v1815
        %v1819 = vld [vmem:[%s1059] sm:$0xff]
        %1820 = vrot.lane.b32.xlu0 %v1235, 107
        %v1821 = vpop.permute.xlu0 %1820
        %1822 = vrot.lane.b32.xlu0 %v1236, 107
        %v1823 = vpop.permute.xlu0 %1822
        %1824 = vrot.lane.b32.xlu0 %v1238, 107
        %v1825 = vpop.permute.xlu0 %1824
        %v1830 = vsel %vm487, %v1819, 0
        %1832 = vmatprep.subr.mxu0 0.0
        %1833 = vmatpush1.msra.mxu0 %v1821
        %1834 = vmatprep.subr.mxu0 0.0
        %1835 = vmatpush1.msra.mxu0 %v1823
        %1836 = vmatprep.subr.mxu0 0.0
        %1837 = vmatpush1.msra.mxu0 %v1825
        %1838 = vmatprep.subr.mxu0 0.0
        %1839 = vmatpush1.msra.mxu0 0.0
        %1840 = vmatprep.subr.mxu0 0.0
        %1841 = vmatpush1.msra.mxu0 0.0
        %1842 = vmatprep.subr.mxu0 0.0
        %1843 = vmatpush1.msra.mxu0 0.0
        %1844 = vmatprep.subr.mxu0 0.0
        %1845 = vmatpush1.msra.mxu0 0.0
        %1846 = vmatprep.subr.mxu0 0.0
        %1847 = vmatpush1.msra.mxu0 0.0
        %1848 = vmatprep.subr.mxu0 0.0
        %1849 = vmatpush1.msra.mxu0 0.0
        %1850 = vmatprep.subr.mxu0 0.0
        %1851 = vmatpush1.msra.mxu0 0.0
        %1852 = vmatprep.subr.mxu0 0.0
        %1853 = vmatpush1.msra.mxu0 0.0
        %1854 = vmatprep.subr.mxu0 0.0
        %1855 = vmatpush1.msra.mxu0 0.0
        %1856 = vmatprep.subr.mxu0 0.0
        %1857 = vmatpush1.msra.mxu0 0.0
        %1858 = vmatprep.subr.mxu0 0.0
        %1859 = vmatpush1.msra.mxu0 0.0
        %1860 = vmatprep.subr.mxu0 0.0
        %1861 = vmatpush1.msra.mxu0 0.0
        %1862 = vmatprep.subr.mxu0 0.0
        %1863 = vmatpush1.msra.mxu0 0.0
        %1864 = vmatprep.subr.mxu0 0.0
        %1865 = vmatpush1.msra.mxu0 0.0
        %1866 = vmatprep.subr.mxu0 0.0
        %1867 = vmatpush1.msra.mxu0 0.0
        %1868 = vmatprep.subr.mxu0 0.0
        %1869 = vmatpush1.msra.mxu0 0.0
        %1870 = vmatprep.subr.mxu0 0.0
        %1871 = vmatpush1.msra.mxu0 0.0
        %1872 = vmatprep.subr.mxu0 0.0
        %1873 = vmatpush1.msra.mxu0 0.0
        %1874 = vmatprep.subr.mxu0 0.0
        %1875 = vmatpush1.msra.mxu0 0.0
        %1876 = vmatprep.subr.mxu0 0.0
        %1877 = vmatpush1.msra.mxu0 0.0
        %1878 = vmatprep.subr.mxu0 0.0
        %1879 = vmatpush1.msra.mxu0 0.0
        %1880 = vmatprep.subr.mxu0 0.0
        %1881 = vmatpush1.msra.mxu0 0.0
        %1882 = vmatprep.subr.mxu0 0.0
        %1883 = vmatpush1.msra.mxu0 0.0
        %1884 = vmatprep.subr.mxu0 0.0
        %1885 = vmatpush1.msra.mxu0 0.0
        %1886 = vmatprep.subr.mxu0 0.0
        %1887 = vmatpush1.msra.mxu0 0.0
        %1888 = vmatprep.subr.mxu0 0.0
        %1889 = vmatpush1.msra.mxu0 0.0
        %1890 = vmatprep.subr.mxu0 0.0
        %1891 = vmatpush1.msra.mxu0 0.0
        %1892 = vmatprep.subr.mxu0 0.0
        %1893 = vmatpush1.msra.mxu0 0.0
        %1894 = vmatprep.subr.mxu0 0.0
        %1895 = vmatpush1.msra.mxu0 0.0
        %1896 = vmatprep.mubr.f32.mxu0 0.0
        %1897 = vmatmul.mubr.f32.gmra.mrb[0].mxu0 %v1830
        %v1898 = vpop.f32.mrb[0].mxu0
        %v1899 = vadd.f32 0.0, %v1898
        %v1900 = vpop.f32.mrb[0].mxu0
        %1901 = vdwg.mxu0
        %v1902 = vadd.f32 %v1818, %v1899
        %v1903 = vld [vmem:[%s1144] sm:$0xff]
        %1904 = vrot.lane.b32.xlu0 %v1235, 106
        %v1905 = vpop.permute.xlu0 %1904
        %1906 = vrot.lane.b32.xlu0 %v1236, 106
        %v1907 = vpop.permute.xlu0 %1906
        %1908 = vrot.lane.b32.xlu0 %v1238, 106
        %v1909 = vpop.permute.xlu0 %1908
        %v1914 = vsel %vm487, %v1903, 0
        %1916 = vmatprep.subr.mxu0 0.0
        %1917 = vmatpush1.msra.mxu0 %v1905
        %1918 = vmatprep.subr.mxu0 0.0
        %1919 = vmatpush1.msra.mxu0 %v1907
        %1920 = vmatprep.subr.mxu0 0.0
        %1921 = vmatpush1.msra.mxu0 %v1909
        %1922 = vmatprep.subr.mxu0 0.0
        %1923 = vmatpush1.msra.mxu0 0.0
        %1924 = vmatprep.subr.mxu0 0.0
        %1925 = vmatpush1.msra.mxu0 0.0
        %1926 = vmatprep.subr.mxu0 0.0
        %1927 = vmatpush1.msra.mxu0 0.0
        %1928 = vmatprep.subr.mxu0 0.0
        %1929 = vmatpush1.msra.mxu0 0.0
        %1930 = vmatprep.subr.mxu0 0.0
        %1931 = vmatpush1.msra.mxu0 0.0
        %1932 = vmatprep.subr.mxu0 0.0
        %1933 = vmatpush1.msra.mxu0 0.0
        %1934 = vmatprep.subr.mxu0 0.0
        %1935 = vmatpush1.msra.mxu0 0.0
        %1936 = vmatprep.subr.mxu0 0.0
        %1937 = vmatpush1.msra.mxu0 0.0
        %1938 = vmatprep.subr.mxu0 0.0
        %1939 = vmatpush1.msra.mxu0 0.0
        %1940 = vmatprep.subr.mxu0 0.0
        %1941 = vmatpush1.msra.mxu0 0.0
        %1942 = vmatprep.subr.mxu0 0.0
        %1943 = vmatpush1.msra.mxu0 0.0
        %1944 = vmatprep.subr.mxu0 0.0
        %1945 = vmatpush1.msra.mxu0 0.0
        %1946 = vmatprep.subr.mxu0 0.0
        %1947 = vmatpush1.msra.mxu0 0.0
        %1948 = vmatprep.subr.mxu0 0.0
        %1949 = vmatpush1.msra.mxu0 0.0
        %1950 = vmatprep.subr.mxu0 0.0
        %1951 = vmatpush1.msra.mxu0 0.0
        %1952 = vmatprep.subr.mxu0 0.0
        %1953 = vmatpush1.msra.mxu0 0.0
        %1954 = vmatprep.subr.mxu0 0.0
        %1955 = vmatpush1.msra.mxu0 0.0
        %1956 = vmatprep.subr.mxu0 0.0
        %1957 = vmatpush1.msra.mxu0 0.0
        %1958 = vmatprep.subr.mxu0 0.0
        %1959 = vmatpush1.msra.mxu0 0.0
        %1960 = vmatprep.subr.mxu0 0.0
        %1961 = vmatpush1.msra.mxu0 0.0
        %1962 = vmatprep.subr.mxu0 0.0
        %1963 = vmatpush1.msra.mxu0 0.0
        %1964 = vmatprep.subr.mxu0 0.0
        %1965 = vmatpush1.msra.mxu0 0.0
        %1966 = vmatprep.subr.mxu0 0.0
        %1967 = vmatpush1.msra.mxu0 0.0
        %1968 = vmatprep.subr.mxu0 0.0
        %1969 = vmatpush1.msra.mxu0 0.0
        %1970 = vmatprep.subr.mxu0 0.0
        %1971 = vmatpush1.msra.mxu0 0.0
        %1972 = vmatprep.subr.mxu0 0.0
        %1973 = vmatpush1.msra.mxu0 0.0
        %1974 = vmatprep.subr.mxu0 0.0
        %1975 = vmatpush1.msra.mxu0 0.0
        %1976 = vmatprep.subr.mxu0 0.0
        %1977 = vmatpush1.msra.mxu0 0.0
        %1978 = vmatprep.subr.mxu0 0.0
        %1979 = vmatpush1.msra.mxu0 0.0
        %1980 = vmatprep.mubr.f32.mxu0 0.0
        %1981 = vmatmul.mubr.f32.gmra.mrb[0].mxu0 %v1914
        %v1982 = vpop.f32.mrb[0].mxu0
        %v1983 = vadd.f32 0.0, %v1982
        %v1984 = vpop.f32.mrb[0].mxu0
        %1985 = vdwg.mxu0
        %v1986 = vadd.f32 %v1902, %v1983
        %v1987 = vadd.f32 %v1229, %v1986
        %v1988 = vmul.f32 %v1986, %v1986
        %v1989 = vadd.f32 %v1231, %v1988
        %v1990 = vpack.c.bf16 %v1986, %v1986
        %s1991 = scalar_lea.vmem %s419, 4 [#allocation8]
        %1992 = vst.msk [vmem:[%s1991] sm:$0xf] %vm1233, %v1990
        %v1993 = vld [vmem:[%s470] sm:$0xff]
        %v1994 = vld [vmem:[%s1237] sm:$0xff]
        %v1995 = vld [vmem:[%s374] sm:$0xff]
        %v1996 = vld [vmem:[%s3] sm:$0xff]
        %v1997 = vld [vmem:[%s473] sm:$0xff]
        %2001 = vrot.lane.b32.xlu0 %v1993, 127
        %v2002 = vpop.permute.xlu0 %2001
        %2003 = vrot.lane.b32.xlu0 %v1994, 127
        %v2004 = vpop.permute.xlu0 %2003
        %2005 = vrot.lane.b32.xlu0 %v1995, 127
        %v2006 = vpop.permute.xlu0 %2005
        %v2011 = vsel %vm487, %v1997, 0
        %2013 = vmatprep.subr.mxu0 0.0
        %2014 = vmatpush1.msra.mxu0 %v2002
        %2015 = vmatprep.subr.mxu0 0.0
        %2016 = vmatpush1.msra.mxu0 %v2004
        %2017 = vmatprep.subr.mxu0 0.0
        %2018 = vmatpush1.msra.mxu0 %v2006
        %2019 = vmatprep.subr.mxu0 0.0
        %2020 = vmatpush1.msra.mxu0 0.0
        %2021 = vmatprep.subr.mxu0 0.0
        %2022 = vmatpush1.msra.mxu0 0.0
        %2023 = vmatprep.subr.mxu0 0.0
        %2024 = vmatpush1.msra.mxu0 0.0
        %2025 = vmatprep.subr.mxu0 0.0
        %2026 = vmatpush1.msra.mxu0 0.0
        %2027 = vmatprep.subr.mxu0 0.0
        %2028 = vmatpush1.msra.mxu0 0.0
        %2029 = vmatprep.subr.mxu0 0.0
        %2030 = vmatpush1.msra.mxu0 0.0
        %2031 = vmatprep.subr.mxu0 0.0
        %2032 = vmatpush1.msra.mxu0 0.0
        %2033 = vmatprep.subr.mxu0 0.0
        %2034 = vmatpush1.msra.mxu0 0.0
        %2035 = vmatprep.subr.mxu0 0.0
        %2036 = vmatpush1.msra.mxu0 0.0
        %2037 = vmatprep.subr.mxu0 0.0
        %2038 = vmatpush1.msra.mxu0 0.0
        %2039 = vmatprep.subr.mxu0 0.0
        %2040 = vmatpush1.msra.mxu0 0.0
        %2041 = vmatprep.subr.mxu0 0.0
        %2042 = vmatpush1.msra.mxu0 0.0
        %2043 = vmatprep.subr.mxu0 0.0
        %2044 = vmatpush1.msra.mxu0 0.0
        %2045 = vmatprep.subr.mxu0 0.0
        %2046 = vmatpush1.msra.mxu0 0.0
        %2047 = vmatprep.subr.mxu0 0.0
        %2048 = vmatpush1.msra.mxu0 0.0
        %2049 = vmatprep.subr.mxu0 0.0
        %2050 = vmatpush1.msra.mxu0 0.0
        %2051 = vmatprep.subr.mxu0 0.0
        %2052 = vmatpush1.msra.mxu0 0.0
        %2053 = vmatprep.subr.mxu0 0.0
        %2054 = vmatpush1.msra.mxu0 0.0
        %2055 = vmatprep.subr.mxu0 0.0
        %2056 = vmatpush1.msra.mxu0 0.0
        %2057 = vmatprep.subr.mxu0 0.0
        %2058 = vmatpush1.msra.mxu0 0.0
        %2059 = vmatprep.subr.mxu0 0.0
        %2060 = vmatpush1.msra.mxu0 0.0
        %2061 = vmatprep.subr.mxu0 0.0
        %2062 = vmatpush1.msra.mxu0 0.0
        %2063 = vmatprep.subr.mxu0 0.0
        %2064 = vmatpush1.msra.mxu0 0.0
        %2065 = vmatprep.subr.mxu0 0.0
        %2066 = vmatpush1.msra.mxu0 0.0
        %2067 = vmatprep.subr.mxu0 0.0
        %2068 = vmatpush1.msra.mxu0 0.0
        %2069 = vmatprep.subr.mxu0 0.0
        %2070 = vmatpush1.msra.mxu0 0.0
        %2071 = vmatprep.subr.mxu0 0.0
        %2072 = vmatpush1.msra.mxu0 0.0
        %2073 = vmatprep.subr.mxu0 0.0
        %2074 = vmatpush1.msra.mxu0 0.0
        %2075 = vmatprep.subr.mxu0 0.0
        %2076 = vmatpush1.msra.mxu0 0.0
        %2077 = vmatprep.mubr.f32.mxu0 0.0
        %2078 = vmatmul.mubr.f32.gmra.mrb[0].mxu0 %v2011
        %v2079 = vpop.f32.mrb[0].mxu0
        %v2080 = vadd.f32 0.0, %v2079
        %v2081 = vpop.f32.mrb[0].mxu0
        %2082 = vdwg.mxu0
        %v2084 = vsel %vm487, %v1996, 0
        %2086 = vmatprep.subr.mxu0 0.0
        %2087 = vmatpush1.msra.mxu0 %v1993
        %2088 = vmatprep.subr.mxu0 0.0
        %2089 = vmatpush1.msra.mxu0 %v1994
        %2090 = vmatprep.subr.mxu0 0.0
        %2091 = vmatpush1.msra.mxu0 %v1995
        %2092 = vmatprep.subr.mxu0 0.0
        %2093 = vmatpush1.msra.mxu0 0.0
        %2094 = vmatprep.subr.mxu0 0.0
        %2095 = vmatpush1.msra.mxu0 0.0
        %2096 = vmatprep.subr.mxu0 0.0
        %2097 = vmatpush1.msra.mxu0 0.0
        %2098 = vmatprep.subr.mxu0 0.0
        %2099 = vmatpush1.msra.mxu0 0.0
        %2100 = vmatprep.subr.mxu0 0.0
        %2101 = vmatpush1.msra.mxu0 0.0
        %2102 = vmatprep.subr.mxu0 0.0
        %2103 = vmatpush1.msra.mxu0 0.0
        %2104 = vmatprep.subr.mxu0 0.0
        %2105 = vmatpush1.msra.mxu0 0.0
        %2106 = vmatprep.subr.mxu0 0.0
        %2107 = vmatpush1.msra.mxu0 0.0
        %2108 = vmatprep.subr.mxu0 0.0
        %2109 = vmatpush1.msra.mxu0 0.0
        %2110 = vmatprep.subr.mxu0 0.0
        %2111 = vmatpush1.msra.mxu0 0.0
        %2112 = vmatprep.subr.mxu0 0.0
        %2113 = vmatpush1.msra.mxu0 0.0
        %2114 = vmatprep.subr.mxu0 0.0
        %2115 = vmatpush1.msra.mxu0 0.0
        %2116 = vmatprep.subr.mxu0 0.0
        %2117 = vmatpush1.msra.mxu0 0.0
        %2118 = vmatprep.subr.mxu0 0.0
        %2119 = vmatpush1.msra.mxu0 0.0
        %2120 = vmatprep.subr.mxu0 0.0
        %2121 = vmatpush1.msra.mxu0 0.0
        %2122 = vmatprep.subr.mxu0 0.0
        %2123 = vmatpush1.msra.mxu0 0.0
        %2124 = vmatprep.subr.mxu0 0.0
        %2125 = vmatpush1.msra.mxu0 0.0
        %2126 = vmatprep.subr.mxu0 0.0
        %2127 = vmatpush1.msra.mxu0 0.0
        %2128 = vmatprep.subr.mxu0 0.0
        %2129 = vmatpush1.msra.mxu0 0.0
        %2130 = vmatprep.subr.mxu0 0.0
        %2131 = vmatpush1.msra.mxu0 0.0
        %2132 = vmatprep.subr.mxu0 0.0
        %2133 = vmatpush1.msra.mxu0 0.0
        %2134 = vmatprep.subr.mxu0 0.0
        %2135 = vmatpush1.msra.mxu0 0.0
        %2136 = vmatprep.subr.mxu0 0.0
        %2137 = vmatpush1.msra.mxu0 0.0
        %2138 = vmatprep.subr.mxu0 0.0
        %2139 = vmatpush1.msra.mxu0 0.0
        %2140 = vmatprep.subr.mxu0 0.0
        %2141 = vmatpush1.msra.mxu0 0.0
        %2142 = vmatprep.subr.mxu0 0.0
        %2143 = vmatpush1.msra.mxu0 0.0
        %2144 = vmatprep.subr.mxu0 0.0
        %2145 = vmatpush1.msra.mxu0 0.0
        %2146 = vmatprep.subr.mxu0 0.0
        %2147 = vmatpush1.msra.mxu0 0.0
        %2148 = vmatprep.subr.mxu0 0.0
        %2149 = vmatpush1.msra.mxu0 0.0
        %2150 = vmatprep.mubr.f32.mxu0 0.0
        %2151 = vmatmul.mubr.f32.gmra.mrb[0].mxu0 %v2084
        %v2152 = vpop.f32.mrb[0].mxu0
        %v2153 = vadd.f32 %v2080, %v2152
        %v2154 = vpop.f32.mrb[0].mxu0
        %2155 = vdwg.mxu0
        %v2156 = vld [vmem:[%s634] sm:$0xff]
        %2157 = vrot.lane.b32.xlu0 %v1993, 126
        %v2158 = vpop.permute.xlu0 %2157
        %2159 = vrot.lane.b32.xlu0 %v1994, 126
        %v2160 = vpop.permute.xlu0 %2159
        %2161 = vrot.lane.b32.xlu0 %v1995, 126
        %v2162 = vpop.permute.xlu0 %2161
        %v2167 = vsel %vm487, %v2156, 0
        %2169 = vmatprep.subr.mxu0 0.0
        %2170 = vmatpush1.msra.mxu0 %v2158
        %2171 = vmatprep.subr.mxu0 0.0
        %2172 = vmatpush1.msra.mxu0 %v2160
        %2173 = vmatprep.subr.mxu0 0.0
        %2174 = vmatpush1.msra.mxu0 %v2162
        %2175 = vmatprep.subr.mxu0 0.0
        %2176 = vmatpush1.msra.mxu0 0.0
        %2177 = vmatprep.subr.mxu0 0.0
        %2178 = vmatpush1.msra.mxu0 0.0
        %2179 = vmatprep.subr.mxu0 0.0
        %2180 = vmatpush1.msra.mxu0 0.0
        %2181 = vmatprep.subr.mxu0 0.0
        %2182 = vmatpush1.msra.mxu0 0.0
        %2183 = vmatprep.subr.mxu0 0.0
        %2184 = vmatpush1.msra.mxu0 0.0
        %2185 = vmatprep.subr.mxu0 0.0
        %2186 = vmatpush1.msra.mxu0 0.0
        %2187 = vmatprep.subr.mxu0 0.0
        %2188 = vmatpush1.msra.mxu0 0.0
        %2189 = vmatprep.subr.mxu0 0.0
        %2190 = vmatpush1.msra.mxu0 0.0
        %2191 = vmatprep.subr.mxu0 0.0
        %2192 = vmatpush1.msra.mxu0 0.0
        %2193 = vmatprep.subr.mxu0 0.0
        %2194 = vmatpush1.msra.mxu0 0.0
        %2195 = vmatprep.subr.mxu0 0.0
        %2196 = vmatpush1.msra.mxu0 0.0
        %2197 = vmatprep.subr.mxu0 0.0
        %2198 = vmatpush1.msra.mxu0 0.0
        %2199 = vmatprep.subr.mxu0 0.0
        %2200 = vmatpush1.msra.mxu0 0.0
        %2201 = vmatprep.subr.mxu0 0.0
        %2202 = vmatpush1.msra.mxu0 0.0
        %2203 = vmatprep.subr.mxu0 0.0
        %2204 = vmatpush1.msra.mxu0 0.0
        %2205 = vmatprep.subr.mxu0 0.0
        %2206 = vmatpush1.msra.mxu0 0.0
        %2207 = vmatprep.subr.mxu0 0.0
        %2208 = vmatpush1.msra.mxu0 0.0
        %2209 = vmatprep.subr.mxu0 0.0
        %2210 = vmatpush1.msra.mxu0 0.0
        %2211 = vmatprep.subr.mxu0 0.0
        %2212 = vmatpush1.msra.mxu0 0.0
        %2213 = vmatprep.subr.mxu0 0.0
        %2214 = vmatpush1.msra.mxu0 0.0
        %2215 = vmatprep.subr.mxu0 0.0
        %2216 = vmatpush1.msra.mxu0 0.0
        %2217 = vmatprep.subr.mxu0 0.0
        %2218 = vmatpush1.msra.mxu0 0.0
        %2219 = vmatprep.subr.mxu0 0.0
        %2220 = vmatpush1.msra.mxu0 0.0
        %2221 = vmatprep.subr.mxu0 0.0
        %2222 = vmatpush1.msra.mxu0 0.0
        %2223 = vmatprep.subr.mxu0 0.0
        %2224 = vmatpush1.msra.mxu0 0.0
        %2225 = vmatprep.subr.mxu0 0.0
        %2226 = vmatpush1.msra.mxu0 0.0
        %2227 = vmatprep.subr.mxu0 0.0
        %2228 = vmatpush1.msra.mxu0 0.0
        %2229 = vmatprep.subr.mxu0 0.0
        %2230 = vmatpush1.msra.mxu0 0.0
        %2231 = vmatprep.subr.mxu0 0.0
        %2232 = vmatpush1.msra.mxu0 0.0
        %2233 = vmatprep.mubr.f32.mxu0 0.0
        %2234 = vmatmul.mubr.f32.gmra.mrb[0].mxu0 %v2167
        %v2235 = vpop.f32.mrb[0].mxu0
        %v2236 = vadd.f32 0.0, %v2235
        %v2237 = vpop.f32.mrb[0].mxu0
        %2238 = vdwg.mxu0
        %v2239 = vadd.f32 %v2153, %v2236
        %v2240 = vld [vmem:[%s719] sm:$0xff]
        %2241 = vrot.lane.b32.xlu0 %v1993, 118
        %v2242 = vpop.permute.xlu0 %2241
        %2243 = vrot.lane.b32.xlu0 %v1994, 118
        %v2244 = vpop.permute.xlu0 %2243
        %2245 = vrot.lane.b32.xlu0 %v1995, 118
        %v2246 = vpop.permute.xlu0 %2245
        %v2251 = vsel %vm487, %v2240, 0
        %2253 = vmatprep.subr.mxu0 0.0
        %2254 = vmatpush1.msra.mxu0 %v2242
        %2255 = vmatprep.subr.mxu0 0.0
        %2256 = vmatpush1.msra.mxu0 %v2244
        %2257 = vmatprep.subr.mxu0 0.0
        %2258 = vmatpush1.msra.mxu0 %v2246
        %2259 = vmatprep.subr.mxu0 0.0
        %2260 = vmatpush1.msra.mxu0 0.0
        %2261 = vmatprep.subr.mxu0 0.0
        %2262 = vmatpush1.msra.mxu0 0.0
        %2263 = vmatprep.subr.mxu0 0.0
        %2264 = vmatpush1.msra.mxu0 0.0
        %2265 = vmatprep.subr.mxu0 0.0
        %2266 = vmatpush1.msra.mxu0 0.0
        %2267 = vmatprep.subr.mxu0 0.0
        %2268 = vmatpush1.msra.mxu0 0.0
        %2269 = vmatprep.subr.mxu0 0.0
        %2270 = vmatpush1.msra.mxu0 0.0
        %2271 = vmatprep.subr.mxu0 0.0
        %2272 = vmatpush1.msra.mxu0 0.0
        %2273 = vmatprep.subr.mxu0 0.0
        %2274 = vmatpush1.msra.mxu0 0.0
        %2275 = vmatprep.subr.mxu0 0.0
        %2276 = vmatpush1.msra.mxu0 0.0
        %2277 = vmatprep.subr.mxu0 0.0
        %2278 = vmatpush1.msra.mxu0 0.0
        %2279 = vmatprep.subr.mxu0 0.0
        %2280 = vmatpush1.msra.mxu0 0.0
        %2281 = vmatprep.subr.mxu0 0.0
        %2282 = vmatpush1.msra.mxu0 0.0
        %2283 = vmatprep.subr.mxu0 0.0
        %2284 = vmatpush1.msra.mxu0 0.0
        %2285 = vmatprep.subr.mxu0 0.0
        %2286 = vmatpush1.msra.mxu0 0.0
        %2287 = vmatprep.subr.mxu0 0.0
        %2288 = vmatpush1.msra.mxu0 0.0
        %2289 = vmatprep.subr.mxu0 0.0
        %2290 = vmatpush1.msra.mxu0 0.0
        %2291 = vmatprep.subr.mxu0 0.0
        %2292 = vmatpush1.msra.mxu0 0.0
        %2293 = vmatprep.subr.mxu0 0.0
        %2294 = vmatpush1.msra.mxu0 0.0
        %2295 = vmatprep.subr.mxu0 0.0
        %2296 = vmatpush1.msra.mxu0 0.0
        %2297 = vmatprep.subr.mxu0 0.0
        %2298 = vmatpush1.msra.mxu0 0.0
        %2299 = vmatprep.subr.mxu0 0.0
        %2300 = vmatpush1.msra.mxu0 0.0
        %2301 = vmatprep.subr.mxu0 0.0
        %2302 = vmatpush1.msra.mxu0 0.0
        %2303 = vmatprep.subr.mxu0 0.0
        %2304 = vmatpush1.msra.mxu0 0.0
        %2305 = vmatprep.subr.mxu0 0.0
        %2306 = vmatpush1.msra.mxu0 0.0
        %2307 = vmatprep.subr.mxu0 0.0
        %2308 = vmatpush1.msra.mxu0 0.0
        %2309 = vmatprep.subr.mxu0 0.0
        %2310 = vmatpush1.msra.mxu0 0.0
        %2311 = vmatprep.subr.mxu0 0.0
        %2312 = vmatpush1.msra.mxu0 0.0
        %2313 = vmatprep.subr.mxu0 0.0
        %2314 = vmatpush1.msra.mxu0 0.0
        %2315 = vmatprep.subr.mxu0 0.0
        %2316 = vmatpush1.msra.mxu0 0.0
        %2317 = vmatprep.mubr.f32.mxu0 0.0
        %2318 = vmatmul.mubr.f32.gmra.mrb[0].mxu0 %v2251
        %v2319 = vpop.f32.mrb[0].mxu0
        %v2320 = vadd.f32 0.0, %v2319
        %v2321 = vpop.f32.mrb[0].mxu0
        %2322 = vdwg.mxu0
        %v2323 = vadd.f32 %v2239, %v2320
        %v2324 = vld [vmem:[%s804] sm:$0xff]
        %2325 = vrot.lane.b32.xlu0 %v1993, 117
        %v2326 = vpop.permute.xlu0 %2325
        %2327 = vrot.lane.b32.xlu0 %v1994, 117
        %v2328 = vpop.permute.xlu0 %2327
        %2329 = vrot.lane.b32.xlu0 %v1995, 117
        %v2330 = vpop.permute.xlu0 %2329
        %v2335 = vsel %vm487, %v2324, 0
        %2337 = vmatprep.subr.mxu0 0.0
        %2338 = vmatpush1.msra.mxu0 %v2326
        %2339 = vmatprep.subr.mxu0 0.0
        %2340 = vmatpush1.msra.mxu0 %v2328
        %2341 = vmatprep.subr.mxu0 0.0
        %2342 = vmatpush1.msra.mxu0 %v2330
        %2343 = vmatprep.subr.mxu0 0.0
        %2344 = vmatpush1.msra.mxu0 0.0
        %2345 = vmatprep.subr.mxu0 0.0
        %2346 = vmatpush1.msra.mxu0 0.0
        %2347 = vmatprep.subr.mxu0 0.0
        %2348 = vmatpush1.msra.mxu0 0.0
        %2349 = vmatprep.subr.mxu0 0.0
        %2350 = vmatpush1.msra.mxu0 0.0
        %2351 = vmatprep.subr.mxu0 0.0
        %2352 = vmatpush1.msra.mxu0 0.0
        %2353 = vmatprep.subr.mxu0 0.0
        %2354 = vmatpush1.msra.mxu0 0.0
        %2355 = vmatprep.subr.mxu0 0.0
        %2356 = vmatpush1.msra.mxu0 0.0
        %2357 = vmatprep.subr.mxu0 0.0
        %2358 = vmatpush1.msra.mxu0 0.0
        %2359 = vmatprep.subr.mxu0 0.0
        %2360 = vmatpush1.msra.mxu0 0.0
        %2361 = vmatprep.subr.mxu0 0.0
        %2362 = vmatpush1.msra.mxu0 0.0
        %2363 = vmatprep.subr.mxu0 0.0
        %2364 = vmatpush1.msra.mxu0 0.0
        %2365 = vmatprep.subr.mxu0 0.0
        %2366 = vmatpush1.msra.mxu0 0.0
        %2367 = vmatprep.subr.mxu0 0.0
        %2368 = vmatpush1.msra.mxu0 0.0
        %2369 = vmatprep.subr.mxu0 0.0
        %2370 = vmatpush1.msra.mxu0 0.0
        %2371 = vmatprep.subr.mxu0 0.0
        %2372 = vmatpush1.msra.mxu0 0.0
        %2373 = vmatprep.subr.mxu0 0.0
        %2374 = vmatpush1.msra.mxu0 0.0
        %2375 = vmatprep.subr.mxu0 0.0
        %2376 = vmatpush1.msra.mxu0 0.0
        %2377 = vmatprep.subr.mxu0 0.0
        %2378 = vmatpush1.msra.mxu0 0.0
        %2379 = vmatprep.subr.mxu0 0.0
        %2380 = vmatpush1.msra.mxu0 0.0
        %2381 = vmatprep.subr.mxu0 0.0
        %2382 = vmatpush1.msra.mxu0 0.0
        %2383 = vmatprep.subr.mxu0 0.0
        %2384 = vmatpush1.msra.mxu0 0.0
        %2385 = vmatprep.subr.mxu0 0.0
        %2386 = vmatpush1.msra.mxu0 0.0
        %2387 = vmatprep.subr.mxu0 0.0
        %2388 = vmatpush1.msra.mxu0 0.0
        %2389 = vmatprep.subr.mxu0 0.0
        %2390 = vmatpush1.msra.mxu0 0.0
        %2391 = vmatprep.subr.mxu0 0.0
        %2392 = vmatpush1.msra.mxu0 0.0
        %2393 = vmatprep.subr.mxu0 0.0
        %2394 = vmatpush1.msra.mxu0 0.0
        %2395 = vmatprep.subr.mxu0 0.0
        %2396 = vmatpush1.msra.mxu0 0.0
        %2397 = vmatprep.subr.mxu0 0.0
        %2398 = vmatpush1.msra.mxu0 0.0
        %2399 = vmatprep.subr.mxu0 0.0
        %2400 = vmatpush1.msra.mxu0 0.0
        %2401 = vmatprep.mubr.f32.mxu0 0.0
        %2402 = vmatmul.mubr.f32.gmra.mrb[0].mxu0 %v2335
        %v2403 = vpop.f32.mrb[0].mxu0
        %v2404 = vadd.f32 0.0, %v2403
        %v2405 = vpop.f32.mrb[0].mxu0
        %2406 = vdwg.mxu0
        %v2407 = vadd.f32 %v2323, %v2404
        %v2408 = vld [vmem:[%s889] sm:$0xff]
        %2409 = vrot.lane.b32.xlu0 %v1993, 116
        %v2410 = vpop.permute.xlu0 %2409
        %2411 = vrot.lane.b32.xlu0 %v1994, 116
        %v2412 = vpop.permute.xlu0 %2411
        %2413 = vrot.lane.b32.xlu0 %v1995, 116
        %v2414 = vpop.permute.xlu0 %2413
        %v2419 = vsel %vm487, %v2408, 0
        %2421 = vmatprep.subr.mxu0 0.0
        %2422 = vmatpush1.msra.mxu0 %v2410
        %2423 = vmatprep.subr.mxu0 0.0
        %2424 = vmatpush1.msra.mxu0 %v2412
        %2425 = vmatprep.subr.mxu0 0.0
        %2426 = vmatpush1.msra.mxu0 %v2414
        %2427 = vmatprep.subr.mxu0 0.0
        %2428 = vmatpush1.msra.mxu0 0.0
        %2429 = vmatprep.subr.mxu0 0.0
        %2430 = vmatpush1.msra.mxu0 0.0
        %2431 = vmatprep.subr.mxu0 0.0
        %2432 = vmatpush1.msra.mxu0 0.0
        %2433 = vmatprep.subr.mxu0 0.0
        %2434 = vmatpush1.msra.mxu0 0.0
        %2435 = vmatprep.subr.mxu0 0.0
        %2436 = vmatpush1.msra.mxu0 0.0
        %2437 = vmatprep.subr.mxu0 0.0
        %2438 = vmatpush1.msra.mxu0 0.0
        %2439 = vmatprep.subr.mxu0 0.0
        %2440 = vmatpush1.msra.mxu0 0.0
        %2441 = vmatprep.subr.mxu0 0.0
        %2442 = vmatpush1.msra.mxu0 0.0
        %2443 = vmatprep.subr.mxu0 0.0
        %2444 = vmatpush1.msra.mxu0 0.0
        %2445 = vmatprep.subr.mxu0 0.0
        %2446 = vmatpush1.msra.mxu0 0.0
        %2447 = vmatprep.subr.mxu0 0.0
        %2448 = vmatpush1.msra.mxu0 0.0
        %2449 = vmatprep.subr.mxu0 0.0
        %2450 = vmatpush1.msra.mxu0 0.0
        %2451 = vmatprep.subr.mxu0 0.0
        %2452 = vmatpush1.msra.mxu0 0.0
        %2453 = vmatprep.subr.mxu0 0.0
        %2454 = vmatpush1.msra.mxu0 0.0
        %2455 = vmatprep.subr.mxu0 0.0
        %2456 = vmatpush1.msra.mxu0 0.0
        %2457 = vmatprep.subr.mxu0 0.0
        %2458 = vmatpush1.msra.mxu0 0.0
        %2459 = vmatprep.subr.mxu0 0.0
        %2460 = vmatpush1.msra.mxu0 0.0
        %2461 = vmatprep.subr.mxu0 0.0
        %2462 = vmatpush1.msra.mxu0 0.0
        %2463 = vmatprep.subr.mxu0 0.0
        %2464 = vmatpush1.msra.mxu0 0.0
        %2465 = vmatprep.subr.mxu0 0.0
        %2466 = vmatpush1.msra.mxu0 0.0
        %2467 = vmatprep.subr.mxu0 0.0
        %2468 = vmatpush1.msra.mxu0 0.0
        %2469 = vmatprep.subr.mxu0 0.0
        %2470 = vmatpush1.msra.mxu0 0.0
        %2471 = vmatprep.subr.mxu0 0.0
        %2472 = vmatpush1.msra.mxu0 0.0
        %2473 = vmatprep.subr.mxu0 0.0
        %2474 = vmatpush1.msra.mxu0 0.0
        %2475 = vmatprep.subr.mxu0 0.0
        %2476 = vmatpush1.msra.mxu0 0.0
        %2477 = vmatprep.subr.mxu0 0.0
        %2478 = vmatpush1.msra.mxu0 0.0
        %2479 = vmatprep.subr.mxu0 0.0
        %2480 = vmatpush1.msra.mxu0 0.0
        %2481 = vmatprep.subr.mxu0 0.0
        %2482 = vmatpush1.msra.mxu0 0.0
        %2483 = vmatprep.subr.mxu0 0.0
        %2484 = vmatpush1.msra.mxu0 0.0
        %2485 = vmatprep.mubr.f32.mxu0 0.0
        %2486 = vmatmul.mubr.f32.gmra.mrb[0].mxu0 %v2419
        %v2487 = vpop.f32.mrb[0].mxu0
        %v2488 = vadd.f32 0.0, %v2487
        %v2489 = vpop.f32.mrb[0].mxu0
        %2490 = vdwg.mxu0
        %v2491 = vadd.f32 %v2407, %v2488
        %v2492 = vld [vmem:[%s974] sm:$0xff]
        %2493 = vrot.lane.b32.xlu0 %v1993, 108
        %v2494 = vpop.permute.xlu0 %2493
        %2495 = vrot.lane.b32.xlu0 %v1994, 108
        %v2496 = vpop.permute.xlu0 %2495
        %2497 = vrot.lane.b32.xlu0 %v1995, 108
        %v2498 = vpop.permute.xlu0 %2497
        %v2503 = vsel %vm487, %v2492, 0
        %2505 = vmatprep.subr.mxu0 0.0
        %2506 = vmatpush1.msra.mxu0 %v2494
        %2507 = vmatprep.subr.mxu0 0.0
        %2508 = vmatpush1.msra.mxu0 %v2496
        %2509 = vmatprep.subr.mxu0 0.0
        %2510 = vmatpush1.msra.mxu0 %v2498
        %2511 = vmatprep.subr.mxu0 0.0
        %2512 = vmatpush1.msra.mxu0 0.0
        %2513 = vmatprep.subr.mxu0 0.0
        %2514 = vmatpush1.msra.mxu0 0.0
        %2515 = vmatprep.subr.mxu0 0.0
        %2516 = vmatpush1.msra.mxu0 0.0
        %2517 = vmatprep.subr.mxu0 0.0
        %2518 = vmatpush1.msra.mxu0 0.0
        %2519 = vmatprep.subr.mxu0 0.0
        %2520 = vmatpush1.msra.mxu0 0.0
        %2521 = vmatprep.subr.mxu0 0.0
        %2522 = vmatpush1.msra.mxu0 0.0
        %2523 = vmatprep.subr.mxu0 0.0
        %2524 = vmatpush1.msra.mxu0 0.0
        %2525 = vmatprep.subr.mxu0 0.0
        %2526 = vmatpush1.msra.mxu0 0.0
        %2527 = vmatprep.subr.mxu0 0.0
        %2528 = vmatpush1.msra.mxu0 0.0
        %2529 = vmatprep.subr.mxu0 0.0
        %2530 = vmatpush1.msra.mxu0 0.0
        %2531 = vmatprep.subr.mxu0 0.0
        %2532 = vmatpush1.msra.mxu0 0.0
        %2533 = vmatprep.subr.mxu0 0.0
        %2534 = vmatpush1.msra.mxu0 0.0
        %2535 = vmatprep.subr.mxu0 0.0
        %2536 = vmatpush1.msra.mxu0 0.0
        %2537 = vmatprep.subr.mxu0 0.0
        %2538 = vmatpush1.msra.mxu0 0.0
        %2539 = vmatprep.subr.mxu0 0.0
        %2540 = vmatpush1.msra.mxu0 0.0
        %2541 = vmatprep.subr.mxu0 0.0
        %2542 = vmatpush1.msra.mxu0 0.0
        %2543 = vmatprep.subr.mxu0 0.0
        %2544 = vmatpush1.msra.mxu0 0.0
        %2545 = vmatprep.subr.mxu0 0.0
        %2546 = vmatpush1.msra.mxu0 0.0
        %2547 = vmatprep.subr.mxu0 0.0
        %2548 = vmatpush1.msra.mxu0 0.0
        %2549 = vmatprep.subr.mxu0 0.0
        %2550 = vmatpush1.msra.mxu0 0.0
        %2551 = vmatprep.subr.mxu0 0.0
        %2552 = vmatpush1.msra.mxu0 0.0
        %2553 = vmatprep.subr.mxu0 0.0
        %2554 = vmatpush1.msra.mxu0 0.0
        %2555 = vmatprep.subr.mxu0 0.0
        %2556 = vmatpush1.msra.mxu0 0.0
        %2557 = vmatprep.subr.mxu0 0.0
        %2558 = vmatpush1.msra.mxu0 0.0
        %2559 = vmatprep.subr.mxu0 0.0
        %2560 = vmatpush1.msra.mxu0 0.0
        %2561 = vmatprep.subr.mxu0 0.0
        %2562 = vmatpush1.msra.mxu0 0.0
        %2563 = vmatprep.subr.mxu0 0.0
        %2564 = vmatpush1.msra.mxu0 0.0
        %2565 = vmatprep.subr.mxu0 0.0
        %2566 = vmatpush1.msra.mxu0 0.0
        %2567 = vmatprep.subr.mxu0 0.0
        %2568 = vmatpush1.msra.mxu0 0.0
        %2569 = vmatprep.mubr.f32.mxu0 0.0
        %2570 = vmatmul.mubr.f32.gmra.mrb[0].mxu0 %v2503
        %v2571 = vpop.f32.mrb[0].mxu0
        %v2572 = vadd.f32 0.0, %v2571
        %v2573 = vpop.f32.mrb[0].mxu0
        %2574 = vdwg.mxu0
        %v2575 = vadd.f32 %v2491, %v2572
        %v2576 = vld [vmem:[%s1059] sm:$0xff]
        %2577 = vrot.lane.b32.xlu0 %v1993, 107
        %v2578 = vpop.permute.xlu0 %2577
        %2579 = vrot.lane.b32.xlu0 %v1994, 107
        %v2580 = vpop.permute.xlu0 %2579
        %2581 = vrot.lane.b32.xlu0 %v1995, 107
        %v2582 = vpop.permute.xlu0 %2581
        %v2587 = vsel %vm487, %v2576, 0
        %2589 = vmatprep.subr.mxu0 0.0
        %2590 = vmatpush1.msra.mxu0 %v2578
        %2591 = vmatprep.subr.mxu0 0.0
        %2592 = vmatpush1.msra.mxu0 %v2580
        %2593 = vmatprep.subr.mxu0 0.0
        %2594 = vmatpush1.msra.mxu0 %v2582
        %2595 = vmatprep.subr.mxu0 0.0
        %2596 = vmatpush1.msra.mxu0 0.0
        %2597 = vmatprep.subr.mxu0 0.0
        %2598 = vmatpush1.msra.mxu0 0.0
        %2599 = vmatprep.subr.mxu0 0.0
        %2600 = vmatpush1.msra.mxu0 0.0
        %2601 = vmatprep.subr.mxu0 0.0
        %2602 = vmatpush1.msra.mxu0 0.0
        %2603 = vmatprep.subr.mxu0 0.0
        %2604 = vmatpush1.msra.mxu0 0.0
        %2605 = vmatprep.subr.mxu0 0.0
        %2606 = vmatpush1.msra.mxu0 0.0
        %2607 = vmatprep.subr.mxu0 0.0
        %2608 = vmatpush1.msra.mxu0 0.0
        %2609 = vmatprep.subr.mxu0 0.0
        %2610 = vmatpush1.msra.mxu0 0.0
        %2611 = vmatprep.subr.mxu0 0.0
        %2612 = vmatpush1.msra.mxu0 0.0
        %2613 = vmatprep.subr.mxu0 0.0
        %2614 = vmatpush1.msra.mxu0 0.0
        %2615 = vmatprep.subr.mxu0 0.0
        %2616 = vmatpush1.msra.mxu0 0.0
        %2617 = vmatprep.subr.mxu0 0.0
        %2618 = vmatpush1.msra.mxu0 0.0
        %2619 = vmatprep.subr.mxu0 0.0
        %2620 = vmatpush1.msra.mxu0 0.0
        %2621 = vmatprep.subr.mxu0 0.0
        %2622 = vmatpush1.msra.mxu0 0.0
        %2623 = vmatprep.subr.mxu0 0.0
        %2624 = vmatpush1.msra.mxu0 0.0
        %2625 = vmatprep.subr.mxu0 0.0
        %2626 = vmatpush1.msra.mxu0 0.0
        %2627 = vmatprep.subr.mxu0 0.0
        %2628 = vmatpush1.msra.mxu0 0.0
        %2629 = vmatprep.subr.mxu0 0.0
        %2630 = vmatpush1.msra.mxu0 0.0
        %2631 = vmatprep.subr.mxu0 0.0
        %2632 = vmatpush1.msra.mxu0 0.0
        %2633 = vmatprep.subr.mxu0 0.0
        %2634 = vmatpush1.msra.mxu0 0.0
        %2635 = vmatprep.subr.mxu0 0.0
        %2636 = vmatpush1.msra.mxu0 0.0
        %2637 = vmatprep.subr.mxu0 0.0
        %2638 = vmatpush1.msra.mxu0 0.0
        %2639 = vmatprep.subr.mxu0 0.0
        %2640 = vmatpush1.msra.mxu0 0.0
        %2641 = vmatprep.subr.mxu0 0.0
        %2642 = vmatpush1.msra.mxu0 0.0
        %2643 = vmatprep.subr.mxu0 0.0
        %2644 = vmatpush1.msra.mxu0 0.0
        %2645 = vmatprep.subr.mxu0 0.0
        %2646 = vmatpush1.msra.mxu0 0.0
        %2647 = vmatprep.subr.mxu0 0.0
        %2648 = vmatpush1.msra.mxu0 0.0
        %2649 = vmatprep.subr.mxu0 0.0
        %2650 = vmatpush1.msra.mxu0 0.0
        %2651 = vmatprep.subr.mxu0 0.0
        %2652 = vmatpush1.msra.mxu0 0.0
        %2653 = vmatprep.mubr.f32.mxu0 0.0
        %2654 = vmatmul.mubr.f32.gmra.mrb[0].mxu0 %v2587
        %v2655 = vpop.f32.mrb[0].mxu0
        %v2656 = vadd.f32 0.0, %v2655
        %v2657 = vpop.f32.mrb[0].mxu0
        %2658 = vdwg.mxu0
        %v2659 = vadd.f32 %v2575, %v2656
        %v2660 = vld [vmem:[%s1144] sm:$0xff]
        %2661 = vrot.lane.b32.xlu0 %v1993, 106
        %v2662 = vpop.permute.xlu0 %2661
        %2663 = vrot.lane.b32.xlu0 %v1994, 106
        %v2664 = vpop.permute.xlu0 %2663
        %2665 = vrot.lane.b32.xlu0 %v1995, 106
        %v2666 = vpop.permute.xlu0 %2665
        %v2671 = vsel %vm487, %v2660, 0
        %2673 = vmatprep.subr.mxu0 0.0
        %2674 = vmatpush1.msra.mxu0 %v2662
        %2675 = vmatprep.subr.mxu0 0.0
        %2676 = vmatpush1.msra.mxu0 %v2664
        %2677 = vmatprep.subr.mxu0 0.0
        %2678 = vmatpush1.msra.mxu0 %v2666
        %2679 = vmatprep.subr.mxu0 0.0
        %2680 = vmatpush1.msra.mxu0 0.0
        %2681 = vmatprep.subr.mxu0 0.0
        %2682 = vmatpush1.msra.mxu0 0.0
        %2683 = vmatprep.subr.mxu0 0.0
        %2684 = vmatpush1.msra.mxu0 0.0
        %2685 = vmatprep.subr.mxu0 0.0
        %2686 = vmatpush1.msra.mxu0 0.0
        %2687 = vmatprep.subr.mxu0 0.0
        %2688 = vmatpush1.msra.mxu0 0.0
        %2689 = vmatprep.subr.mxu0 0.0
        %2690 = vmatpush1.msra.mxu0 0.0
        %2691 = vmatprep.subr.mxu0 0.0
        %2692 = vmatpush1.msra.mxu0 0.0
        %2693 = vmatprep.subr.mxu0 0.0
        %2694 = vmatpush1.msra.mxu0 0.0
        %2695 = vmatprep.subr.mxu0 0.0
        %2696 = vmatpush1.msra.mxu0 0.0
        %2697 = vmatprep.subr.mxu0 0.0
        %2698 = vmatpush1.msra.mxu0 0.0
        %2699 = vmatprep.subr.mxu0 0.0
        %2700 = vmatpush1.msra.mxu0 0.0
        %2701 = vmatprep.subr.mxu0 0.0
        %2702 = vmatpush1.msra.mxu0 0.0
        %2703 = vmatprep.subr.mxu0 0.0
        %2704 = vmatpush1.msra.mxu0 0.0
        %2705 = vmatprep.subr.mxu0 0.0
        %2706 = vmatpush1.msra.mxu0 0.0
        %2707 = vmatprep.subr.mxu0 0.0
        %2708 = vmatpush1.msra.mxu0 0.0
        %2709 = vmatprep.subr.mxu0 0.0
        %2710 = vmatpush1.msra.mxu0 0.0
        %2711 = vmatprep.subr.mxu0 0.0
        %2712 = vmatpush1.msra.mxu0 0.0
        %2713 = vmatprep.subr.mxu0 0.0
        %2714 = vmatpush1.msra.mxu0 0.0
        %2715 = vmatprep.subr.mxu0 0.0
        %2716 = vmatpush1.msra.mxu0 0.0
        %2717 = vmatprep.subr.mxu0 0.0
        %2718 = vmatpush1.msra.mxu0 0.0
        %2719 = vmatprep.subr.mxu0 0.0
        %2720 = vmatpush1.msra.mxu0 0.0
        %2721 = vmatprep.subr.mxu0 0.0
        %2722 = vmatpush1.msra.mxu0 0.0
        %2723 = vmatprep.subr.mxu0 0.0
        %2724 = vmatpush1.msra.mxu0 0.0
        %2725 = vmatprep.subr.mxu0 0.0
        %2726 = vmatpush1.msra.mxu0 0.0
        %2727 = vmatprep.subr.mxu0 0.0
        %2728 = vmatpush1.msra.mxu0 0.0
        %2729 = vmatprep.subr.mxu0 0.0
        %2730 = vmatpush1.msra.mxu0 0.0
        %2731 = vmatprep.subr.mxu0 0.0
        %2732 = vmatpush1.msra.mxu0 0.0
        %2733 = vmatprep.subr.mxu0 0.0
        %2734 = vmatpush1.msra.mxu0 0.0
        %2735 = vmatprep.subr.mxu0 0.0
        %2736 = vmatpush1.msra.mxu0 0.0
        %2737 = vmatprep.mubr.f32.mxu0 0.0
        %2738 = vmatmul.mubr.f32.gmra.mrb[0].mxu0 %v2671
        %v2739 = vpop.f32.mrb[0].mxu0
        %v2740 = vadd.f32 0.0, %v2739
        %v2741 = vpop.f32.mrb[0].mxu0
        %2742 = vdwg.mxu0
        %v2743 = vadd.f32 %v2659, %v2740
        %v2744 = vadd.f32 %v1987, %v2743
        %v2745 = vmul.f32 %v2743, %v2743
        %v2746 = vadd.f32 %v1989, %v2745
        %v2747 = vpack.c.bf16 %v2743, %v2743
        %s2748 = scalar_lea.vmem %s419, 8 [#allocation8]
        %2749 = vst.msk [vmem:[%s2748] sm:$0xf] %vm1233, %v2747
        %v2750 = vld [vmem:[%s1237] sm:$0xff]
        %v2751 = vld [vmem:[%s374] sm:$0xff]
        %v2752 = vld [vmem:[%s383] sm:$0xff]
        %v2753 = vld [vmem:[%s3] sm:$0xff]
        %v2754 = vld [vmem:[%s473] sm:$0xff]
        %2758 = vrot.lane.b32.xlu0 %v2750, 127
        %v2759 = vpop.permute.xlu0 %2758
        %2760 = vrot.lane.b32.xlu0 %v2751, 127
        %v2761 = vpop.permute.xlu0 %2760
        %2762 = vrot.lane.b32.xlu0 %v2752, 127
        %v2763 = vpop.permute.xlu0 %2762
        %v2768 = vsel %vm487, %v2754, 0
        %2770 = vmatprep.subr.mxu0 0.0
        %2771 = vmatpush1.msra.mxu0 %v2759
        %2772 = vmatprep.subr.mxu0 0.0
        %2773 = vmatpush1.msra.mxu0 %v2761
        %2774 = vmatprep.subr.mxu0 0.0
        %2775 = vmatpush1.msra.mxu0 %v2763
        %2776 = vmatprep.subr.mxu0 0.0
        %2777 = vmatpush1.msra.mxu0 0.0
        %2778 = vmatprep.subr.mxu0 0.0
        %2779 = vmatpush1.msra.mxu0 0.0
        %2780 = vmatprep.subr.mxu0 0.0
        %2781 = vmatpush1.msra.mxu0 0.0
        %2782 = vmatprep.subr.mxu0 0.0
        %2783 = vmatpush1.msra.mxu0 0.0
        %2784 = vmatprep.subr.mxu0 0.0
        %2785 = vmatpush1.msra.mxu0 0.0
        %2786 = vmatprep.subr.mxu0 0.0
        %2787 = vmatpush1.msra.mxu0 0.0
        %2788 = vmatprep.subr.mxu0 0.0
        %2789 = vmatpush1.msra.mxu0 0.0
        %2790 = vmatprep.subr.mxu0 0.0
        %2791 = vmatpush1.msra.mxu0 0.0
        %2792 = vmatprep.subr.mxu0 0.0
        %2793 = vmatpush1.msra.mxu0 0.0
        %2794 = vmatprep.subr.mxu0 0.0
        %2795 = vmatpush1.msra.mxu0 0.0
        %2796 = vmatprep.subr.mxu0 0.0
        %2797 = vmatpush1.msra.mxu0 0.0
        %2798 = vmatprep.subr.mxu0 0.0
        %2799 = vmatpush1.msra.mxu0 0.0
        %2800 = vmatprep.subr.mxu0 0.0
        %2801 = vmatpush1.msra.mxu0 0.0
        %2802 = vmatprep.subr.mxu0 0.0
        %2803 = vmatpush1.msra.mxu0 0.0
        %2804 = vmatprep.subr.mxu0 0.0
        %2805 = vmatpush1.msra.mxu0 0.0
        %2806 = vmatprep.subr.mxu0 0.0
        %2807 = vmatpush1.msra.mxu0 0.0
        %2808 = vmatprep.subr.mxu0 0.0
        %2809 = vmatpush1.msra.mxu0 0.0
        %2810 = vmatprep.subr.mxu0 0.0
        %2811 = vmatpush1.msra.mxu0 0.0
        %2812 = vmatprep.subr.mxu0 0.0
        %2813 = vmatpush1.msra.mxu0 0.0
        %2814 = vmatprep.subr.mxu0 0.0
        %2815 = vmatpush1.msra.mxu0 0.0
        %2816 = vmatprep.subr.mxu0 0.0
        %2817 = vmatpush1.msra.mxu0 0.0
        %2818 = vmatprep.subr.mxu0 0.0
        %2819 = vmatpush1.msra.mxu0 0.0
        %2820 = vmatprep.subr.mxu0 0.0
        %2821 = vmatpush1.msra.mxu0 0.0
        %2822 = vmatprep.subr.mxu0 0.0
        %2823 = vmatpush1.msra.mxu0 0.0
        %2824 = vmatprep.subr.mxu0 0.0
        %2825 = vmatpush1.msra.mxu0 0.0
        %2826 = vmatprep.subr.mxu0 0.0
        %2827 = vmatpush1.msra.mxu0 0.0
        %2828 = vmatprep.subr.mxu0 0.0
        %2829 = vmatpush1.msra.mxu0 0.0
        %2830 = vmatprep.subr.mxu0 0.0
        %2831 = vmatpush1.msra.mxu0 0.0
        %2832 = vmatprep.subr.mxu0 0.0
        %2833 = vmatpush1.msra.mxu0 0.0
        %2834 = vmatprep.mubr.f32.mxu0 0.0
        %2835 = vmatmul.mubr.f32.gmra.mrb[0].mxu0 %v2768
        %v2836 = vpop.f32.mrb[0].mxu0
        %v2837 = vadd.f32 0.0, %v2836
        %v2838 = vpop.f32.mrb[0].mxu0
        %2839 = vdwg.mxu0
        %v2841 = vsel %vm487, %v2753, 0
        %2843 = vmatprep.subr.mxu0 0.0
        %2844 = vmatpush1.msra.mxu0 %v2750
        %2845 = vmatprep.subr.mxu0 0.0
        %2846 = vmatpush1.msra.mxu0 %v2751
        %2847 = vmatprep.subr.mxu0 0.0
        %2848 = vmatpush1.msra.mxu0 %v2752
        %2849 = vmatprep.subr.mxu0 0.0
        %2850 = vmatpush1.msra.mxu0 0.0
        %2851 = vmatprep.subr.mxu0 0.0
        %2852 = vmatpush1.msra.mxu0 0.0
        %2853 = vmatprep.subr.mxu0 0.0
        %2854 = vmatpush1.msra.mxu0 0.0
        %2855 = vmatprep.subr.mxu0 0.0
        %2856 = vmatpush1.msra.mxu0 0.0
        %2857 = vmatprep.subr.mxu0 0.0
        %2858 = vmatpush1.msra.mxu0 0.0
        %2859 = vmatprep.subr.mxu0 0.0
        %2860 = vmatpush1.msra.mxu0 0.0
        %2861 = vmatprep.subr.mxu0 0.0
        %2862 = vmatpush1.msra.mxu0 0.0
        %2863 = vmatprep.subr.mxu0 0.0
        %2864 = vmatpush1.msra.mxu0 0.0
        %2865 = vmatprep.subr.mxu0 0.0
        %2866 = vmatpush1.msra.mxu0 0.0
        %2867 = vmatprep.subr.mxu0 0.0
        %2868 = vmatpush1.msra.mxu0 0.0
        %2869 = vmatprep.subr.mxu0 0.0
        %2870 = vmatpush1.msra.mxu0 0.0
        %2871 = vmatprep.subr.mxu0 0.0
        %2872 = vmatpush1.msra.mxu0 0.0
        %2873 = vmatprep.subr.mxu0 0.0
        %2874 = vmatpush1.msra.mxu0 0.0
        %2875 = vmatprep.subr.mxu0 0.0
        %2876 = vmatpush1.msra.mxu0 0.0
        %2877 = vmatprep.subr.mxu0 0.0
        %2878 = vmatpush1.msra.mxu0 0.0
        %2879 = vmatprep.subr.mxu0 0.0
        %2880 = vmatpush1.msra.mxu0 0.0
        %2881 = vmatprep.subr.mxu0 0.0
        %2882 = vmatpush1.msra.mxu0 0.0
        %2883 = vmatprep.subr.mxu0 0.0
        %2884 = vmatpush1.msra.mxu0 0.0
        %2885 = vmatprep.subr.mxu0 0.0
        %2886 = vmatpush1.msra.mxu0 0.0
        %2887 = vmatprep.subr.mxu0 0.0
        %2888 = vmatpush1.msra.mxu0 0.0
        %2889 = vmatprep.subr.mxu0 0.0
        %2890 = vmatpush1.msra.mxu0 0.0
        %2891 = vmatprep.subr.mxu0 0.0
        %2892 = vmatpush1.msra.mxu0 0.0
        %2893 = vmatprep.subr.mxu0 0.0
        %2894 = vmatpush1.msra.mxu0 0.0
        %2895 = vmatprep.subr.mxu0 0.0
        %2896 = vmatpush1.msra.mxu0 0.0
        %2897 = vmatprep.subr.mxu0 0.0
        %2898 = vmatpush1.msra.mxu0 0.0
        %2899 = vmatprep.subr.mxu0 0.0
        %2900 = vmatpush1.msra.mxu0 0.0
        %2901 = vmatprep.subr.mxu0 0.0
        %2902 = vmatpush1.msra.mxu0 0.0
        %2903 = vmatprep.subr.mxu0 0.0
        %2904 = vmatpush1.msra.mxu0 0.0
        %2905 = vmatprep.subr.mxu0 0.0
        %2906 = vmatpush1.msra.mxu0 0.0
        %2907 = vmatprep.mubr.f32.mxu0 0.0
        %2908 = vmatmul.mubr.f32.gmra.mrb[0].mxu0 %v2841
        %v2909 = vpop.f32.mrb[0].mxu0
        %v2910 = vadd.f32 %v2837, %v2909
        %v2911 = vpop.f32.mrb[0].mxu0
        %2912 = vdwg.mxu0
        %v2913 = vld [vmem:[%s634] sm:$0xff]
        %2914 = vrot.lane.b32.xlu0 %v2750, 126
        %v2915 = vpop.permute.xlu0 %2914
        %2916 = vrot.lane.b32.xlu0 %v2751, 126
        %v2917 = vpop.permute.xlu0 %2916
        %2918 = vrot.lane.b32.xlu0 %v2752, 126
        %v2919 = vpop.permute.xlu0 %2918
        %v2924 = vsel %vm487, %v2913, 0
        %2926 = vmatprep.subr.mxu0 0.0
        %2927 = vmatpush1.msra.mxu0 %v2915
        %2928 = vmatprep.subr.mxu0 0.0
        %2929 = vmatpush1.msra.mxu0 %v2917
        %2930 = vmatprep.subr.mxu0 0.0
        %2931 = vmatpush1.msra.mxu0 %v2919
        %2932 = vmatprep.subr.mxu0 0.0
        %2933 = vmatpush1.msra.mxu0 0.0
        %2934 = vmatprep.subr.mxu0 0.0
        %2935 = vmatpush1.msra.mxu0 0.0
        %2936 = vmatprep.subr.mxu0 0.0
        %2937 = vmatpush1.msra.mxu0 0.0
        %2938 = vmatprep.subr.mxu0 0.0
        %2939 = vmatpush1.msra.mxu0 0.0
        %2940 = vmatprep.subr.mxu0 0.0
        %2941 = vmatpush1.msra.mxu0 0.0
        %2942 = vmatprep.subr.mxu0 0.0
        %2943 = vmatpush1.msra.mxu0 0.0
        %2944 = vmatprep.subr.mxu0 0.0
        %2945 = vmatpush1.msra.mxu0 0.0
        %2946 = vmatprep.subr.mxu0 0.0
        %2947 = vmatpush1.msra.mxu0 0.0
        %2948 = vmatprep.subr.mxu0 0.0
        %2949 = vmatpush1.msra.mxu0 0.0
        %2950 = vmatprep.subr.mxu0 0.0
        %2951 = vmatpush1.msra.mxu0 0.0
        %2952 = vmatprep.subr.mxu0 0.0
        %2953 = vmatpush1.msra.mxu0 0.0
        %2954 = vmatprep.subr.mxu0 0.0
        %2955 = vmatpush1.msra.mxu0 0.0
        %2956 = vmatprep.subr.mxu0 0.0
        %2957 = vmatpush1.msra.mxu0 0.0
        %2958 = vmatprep.subr.mxu0 0.0
        %2959 = vmatpush1.msra.mxu0 0.0
        %2960 = vmatprep.subr.mxu0 0.0
        %2961 = vmatpush1.msra.mxu0 0.0
        %2962 = vmatprep.subr.mxu0 0.0
        %2963 = vmatpush1.msra.mxu0 0.0
        %2964 = vmatprep.subr.mxu0 0.0
        %2965 = vmatpush1.msra.mxu0 0.0
        %2966 = vmatprep.subr.mxu0 0.0
        %2967 = vmatpush1.msra.mxu0 0.0
        %2968 = vmatprep.subr.mxu0 0.0
        %2969 = vmatpush1.msra.mxu0 0.0
        %2970 = vmatprep.subr.mxu0 0.0
        %2971 = vmatpush1.msra.mxu0 0.0
        %2972 = vmatprep.subr.mxu0 0.0
        %2973 = vmatpush1.msra.mxu0 0.0
        %2974 = vmatprep.subr.mxu0 0.0
        %2975 = vmatpush1.msra.mxu0 0.0
        %2976 = vmatprep.subr.mxu0 0.0
        %2977 = vmatpush1.msra.mxu0 0.0
        %2978 = vmatprep.subr.mxu0 0.0
        %2979 = vmatpush1.msra.mxu0 0.0
        %2980 = vmatprep.subr.mxu0 0.0
        %2981 = vmatpush1.msra.mxu0 0.0
        %2982 = vmatprep.subr.mxu0 0.0
        %2983 = vmatpush1.msra.mxu0 0.0
        %2984 = vmatprep.subr.mxu0 0.0
        %2985 = vmatpush1.msra.mxu0 0.0
        %2986 = vmatprep.subr.mxu0 0.0
        %2987 = vmatpush1.msra.mxu0 0.0
        %2988 = vmatprep.subr.mxu0 0.0
        %2989 = vmatpush1.msra.mxu0 0.0
        %2990 = vmatprep.mubr.f32.mxu0 0.0
        %2991 = vmatmul.mubr.f32.gmra.mrb[0].mxu0 %v2924
        %v2992 = vpop.f32.mrb[0].mxu0
        %v2993 = vadd.f32 0.0, %v2992
        %v2994 = vpop.f32.mrb[0].mxu0
        %2995 = vdwg.mxu0
        %v2996 = vadd.f32 %v2910, %v2993
        %v2997 = vld [vmem:[%s719] sm:$0xff]
        %2998 = vrot.lane.b32.xlu0 %v2750, 118
        %v2999 = vpop.permute.xlu0 %2998
        %3000 = vrot.lane.b32.xlu0 %v2751, 118
        %v3001 = vpop.permute.xlu0 %3000
        %3002 = vrot.lane.b32.xlu0 %v2752, 118
        %v3003 = vpop.permute.xlu0 %3002
        %v3008 = vsel %vm487, %v2997, 0
        %3010 = vmatprep.subr.mxu0 0.0
        %3011 = vmatpush1.msra.mxu0 %v2999
        %3012 = vmatprep.subr.mxu0 0.0
        %3013 = vmatpush1.msra.mxu0 %v3001
        %3014 = vmatprep.subr.mxu0 0.0
        %3015 = vmatpush1.msra.mxu0 %v3003
        %3016 = vmatprep.subr.mxu0 0.0
        %3017 = vmatpush1.msra.mxu0 0.0
        %3018 = vmatprep.subr.mxu0 0.0
        %3019 = vmatpush1.msra.mxu0 0.0
        %3020 = vmatprep.subr.mxu0 0.0
        %3021 = vmatpush1.msra.mxu0 0.0
        %3022 = vmatprep.subr.mxu0 0.0
        %3023 = vmatpush1.msra.mxu0 0.0
        %3024 = vmatprep.subr.mxu0 0.0
        %3025 = vmatpush1.msra.mxu0 0.0
        %3026 = vmatprep.subr.mxu0 0.0
        %3027 = vmatpush1.msra.mxu0 0.0
        %3028 = vmatprep.subr.mxu0 0.0
        %3029 = vmatpush1.msra.mxu0 0.0
        %3030 = vmatprep.subr.mxu0 0.0
        %3031 = vmatpush1.msra.mxu0 0.0
        %3032 = vmatprep.subr.mxu0 0.0
        %3033 = vmatpush1.msra.mxu0 0.0
        %3034 = vmatprep.subr.mxu0 0.0
        %3035 = vmatpush1.msra.mxu0 0.0
        %3036 = vmatprep.subr.mxu0 0.0
        %3037 = vmatpush1.msra.mxu0 0.0
        %3038 = vmatprep.subr.mxu0 0.0
        %3039 = vmatpush1.msra.mxu0 0.0
        %3040 = vmatprep.subr.mxu0 0.0
        %3041 = vmatpush1.msra.mxu0 0.0
        %3042 = vmatprep.subr.mxu0 0.0
        %3043 = vmatpush1.msra.mxu0 0.0
        %3044 = vmatprep.subr.mxu0 0.0
        %3045 = vmatpush1.msra.mxu0 0.0
        %3046 = vmatprep.subr.mxu0 0.0
        %3047 = vmatpush1.msra.mxu0 0.0
        %3048 = vmatprep.subr.mxu0 0.0
        %3049 = vmatpush1.msra.mxu0 0.0
        %3050 = vmatprep.subr.mxu0 0.0
        %3051 = vmatpush1.msra.mxu0 0.0
        %3052 = vmatprep.subr.mxu0 0.0
        %3053 = vmatpush1.msra.mxu0 0.0
        %3054 = vmatprep.subr.mxu0 0.0
        %3055 = vmatpush1.msra.mxu0 0.0
        %3056 = vmatprep.subr.mxu0 0.0
        %3057 = vmatpush1.msra.mxu0 0.0
        %3058 = vmatprep.subr.mxu0 0.0
        %3059 = vmatpush1.msra.mxu0 0.0
        %3060 = vmatprep.subr.mxu0 0.0
        %3061 = vmatpush1.msra.mxu0 0.0
        %3062 = vmatprep.subr.mxu0 0.0
        %3063 = vmatpush1.msra.mxu0 0.0
        %3064 = vmatprep.subr.mxu0 0.0
        %3065 = vmatpush1.msra.mxu0 0.0
        %3066 = vmatprep.subr.mxu0 0.0
        %3067 = vmatpush1.msra.mxu0 0.0
        %3068 = vmatprep.subr.mxu0 0.0
        %3069 = vmatpush1.msra.mxu0 0.0
        %3070 = vmatprep.subr.mxu0 0.0
        %3071 = vmatpush1.msra.mxu0 0.0
        %3072 = vmatprep.subr.mxu0 0.0
        %3073 = vmatpush1.msra.mxu0 0.0
        %3074 = vmatprep.mubr.f32.mxu0 0.0
        %3075 = vmatmul.mubr.f32.gmra.mrb[0].mxu0 %v3008
        %v3076 = vpop.f32.mrb[0].mxu0
        %v3077 = vadd.f32 0.0, %v3076
        %v3078 = vpop.f32.mrb[0].mxu0
        %3079 = vdwg.mxu0
        %v3080 = vadd.f32 %v2996, %v3077
        %v3081 = vld [vmem:[%s804] sm:$0xff]
        %3082 = vrot.lane.b32.xlu0 %v2750, 117
        %v3083 = vpop.permute.xlu0 %3082
        %3084 = vrot.lane.b32.xlu0 %v2751, 117
        %v3085 = vpop.permute.xlu0 %3084
        %3086 = vrot.lane.b32.xlu0 %v2752, 117
        %v3087 = vpop.permute.xlu0 %3086
        %v3092 = vsel %vm487, %v3081, 0
        %3094 = vmatprep.subr.mxu0 0.0
        %3095 = vmatpush1.msra.mxu0 %v3083
        %3096 = vmatprep.subr.mxu0 0.0
        %3097 = vmatpush1.msra.mxu0 %v3085
        %3098 = vmatprep.subr.mxu0 0.0
        %3099 = vmatpush1.msra.mxu0 %v3087
        %3100 = vmatprep.subr.mxu0 0.0
        %3101 = vmatpush1.msra.mxu0 0.0
        %3102 = vmatprep.subr.mxu0 0.0
        %3103 = vmatpush1.msra.mxu0 0.0
        %3104 = vmatprep.subr.mxu0 0.0
        %3105 = vmatpush1.msra.mxu0 0.0
        %3106 = vmatprep.subr.mxu0 0.0
        %3107 = vmatpush1.msra.mxu0 0.0
        %3108 = vmatprep.subr.mxu0 0.0
        %3109 = vmatpush1.msra.mxu0 0.0
        %3110 = vmatprep.subr.mxu0 0.0
        %3111 = vmatpush1.msra.mxu0 0.0
        %3112 = vmatprep.subr.mxu0 0.0
        %3113 = vmatpush1.msra.mxu0 0.0
        %3114 = vmatprep.subr.mxu0 0.0
        %3115 = vmatpush1.msra.mxu0 0.0
        %3116 = vmatprep.subr.mxu0 0.0
        %3117 = vmatpush1.msra.mxu0 0.0
        %3118 = vmatprep.subr.mxu0 0.0
        %3119 = vmatpush1.msra.mxu0 0.0
        %3120 = vmatprep.subr.mxu0 0.0
        %3121 = vmatpush1.msra.mxu0 0.0
        %3122 = vmatprep.subr.mxu0 0.0
        %3123 = vmatpush1.msra.mxu0 0.0
        %3124 = vmatprep.subr.mxu0 0.0
        %3125 = vmatpush1.msra.mxu0 0.0
        %3126 = vmatprep.subr.mxu0 0.0
        %3127 = vmatpush1.msra.mxu0 0.0
        %3128 = vmatprep.subr.mxu0 0.0
        %3129 = vmatpush1.msra.mxu0 0.0
        %3130 = vmatprep.subr.mxu0 0.0
        %3131 = vmatpush1.msra.mxu0 0.0
        %3132 = vmatprep.subr.mxu0 0.0
        %3133 = vmatpush1.msra.mxu0 0.0
        %3134 = vmatprep.subr.mxu0 0.0
        %3135 = vmatpush1.msra.mxu0 0.0
        %3136 = vmatprep.subr.mxu0 0.0
        %3137 = vmatpush1.msra.mxu0 0.0
        %3138 = vmatprep.subr.mxu0 0.0
        %3139 = vmatpush1.msra.mxu0 0.0
        %3140 = vmatprep.subr.mxu0 0.0
        %3141 = vmatpush1.msra.mxu0 0.0
        %3142 = vmatprep.subr.mxu0 0.0
        %3143 = vmatpush1.msra.mxu0 0.0
        %3144 = vmatprep.subr.mxu0 0.0
        %3145 = vmatpush1.msra.mxu0 0.0
        %3146 = vmatprep.subr.mxu0 0.0
        %3147 = vmatpush1.msra.mxu0 0.0
        %3148 = vmatprep.subr.mxu0 0.0
        %3149 = vmatpush1.msra.mxu0 0.0
        %3150 = vmatprep.subr.mxu0 0.0
        %3151 = vmatpush1.msra.mxu0 0.0
        %3152 = vmatprep.subr.mxu0 0.0
        %3153 = vmatpush1.msra.mxu0 0.0
        %3154 = vmatprep.subr.mxu0 0.0
        %3155 = vmatpush1.msra.mxu0 0.0
        %3156 = vmatprep.subr.mxu0 0.0
        %3157 = vmatpush1.msra.mxu0 0.0
        %3158 = vmatprep.mubr.f32.mxu0 0.0
        %3159 = vmatmul.mubr.f32.gmra.mrb[0].mxu0 %v3092
        %v3160 = vpop.f32.mrb[0].mxu0
        %v3161 = vadd.f32 0.0, %v3160
        %v3162 = vpop.f32.mrb[0].mxu0
        %3163 = vdwg.mxu0
        %v3164 = vadd.f32 %v3080, %v3161
        %v3165 = vld [vmem:[%s889] sm:$0xff]
        %3166 = vrot.lane.b32.xlu0 %v2750, 116
        %v3167 = vpop.permute.xlu0 %3166
        %3168 = vrot.lane.b32.xlu0 %v2751, 116
        %v3169 = vpop.permute.xlu0 %3168
        %3170 = vrot.lane.b32.xlu0 %v2752, 116
        %v3171 = vpop.permute.xlu0 %3170
        %v3176 = vsel %vm487, %v3165, 0
        %3178 = vmatprep.subr.mxu0 0.0
        %3179 = vmatpush1.msra.mxu0 %v3167
        %3180 = vmatprep.subr.mxu0 0.0
        %3181 = vmatpush1.msra.mxu0 %v3169
        %3182 = vmatprep.subr.mxu0 0.0
        %3183 = vmatpush1.msra.mxu0 %v3171
        %3184 = vmatprep.subr.mxu0 0.0
        %3185 = vmatpush1.msra.mxu0 0.0
        %3186 = vmatprep.subr.mxu0 0.0
        %3187 = vmatpush1.msra.mxu0 0.0
        %3188 = vmatprep.subr.mxu0 0.0
        %3189 = vmatpush1.msra.mxu0 0.0
        %3190 = vmatprep.subr.mxu0 0.0
        %3191 = vmatpush1.msra.mxu0 0.0
        %3192 = vmatprep.subr.mxu0 0.0
        %3193 = vmatpush1.msra.mxu0 0.0
        %3194 = vmatprep.subr.mxu0 0.0
        %3195 = vmatpush1.msra.mxu0 0.0
        %3196 = vmatprep.subr.mxu0 0.0
        %3197 = vmatpush1.msra.mxu0 0.0
        %3198 = vmatprep.subr.mxu0 0.0
        %3199 = vmatpush1.msra.mxu0 0.0
        %3200 = vmatprep.subr.mxu0 0.0
        %3201 = vmatpush1.msra.mxu0 0.0
        %3202 = vmatprep.subr.mxu0 0.0
        %3203 = vmatpush1.msra.mxu0 0.0
        %3204 = vmatprep.subr.mxu0 0.0
        %3205 = vmatpush1.msra.mxu0 0.0
        %3206 = vmatprep.subr.mxu0 0.0
        %3207 = vmatpush1.msra.mxu0 0.0
        %3208 = vmatprep.subr.mxu0 0.0
        %3209 = vmatpush1.msra.mxu0 0.0
        %3210 = vmatprep.subr.mxu0 0.0
        %3211 = vmatpush1.msra.mxu0 0.0
        %3212 = vmatprep.subr.mxu0 0.0
        %3213 = vmatpush1.msra.mxu0 0.0
        %3214 = vmatprep.subr.mxu0 0.0
        %3215 = vmatpush1.msra.mxu0 0.0
        %3216 = vmatprep.subr.mxu0 0.0
        %3217 = vmatpush1.msra.mxu0 0.0
        %3218 = vmatprep.subr.mxu0 0.0
        %3219 = vmatpush1.msra.mxu0 0.0
        %3220 = vmatprep.subr.mxu0 0.0
        %3221 = vmatpush1.msra.mxu0 0.0
        %3222 = vmatprep.subr.mxu0 0.0
        %3223 = vmatpush1.msra.mxu0 0.0
        %3224 = vmatprep.subr.mxu0 0.0
        %3225 = vmatpush1.msra.mxu0 0.0
        %3226 = vmatprep.subr.mxu0 0.0
        %3227 = vmatpush1.msra.mxu0 0.0
        %3228 = vmatprep.subr.mxu0 0.0
        %3229 = vmatpush1.msra.mxu0 0.0
        %3230 = vmatprep.subr.mxu0 0.0
        %3231 = vmatpush1.msra.mxu0 0.0
        %3232 = vmatprep.subr.mxu0 0.0
        %3233 = vmatpush1.msra.mxu0 0.0
        %3234 = vmatprep.subr.mxu0 0.0
        %3235 = vmatpush1.msra.mxu0 0.0
        %3236 = vmatprep.subr.mxu0 0.0
        %3237 = vmatpush1.msra.mxu0 0.0
        %3238 = vmatprep.subr.mxu0 0.0
        %3239 = vmatpush1.msra.mxu0 0.0
        %3240 = vmatprep.subr.mxu0 0.0
        %3241 = vmatpush1.msra.mxu0 0.0
        %3242 = vmatprep.mubr.f32.mxu0 0.0
        %3243 = vmatmul.mubr.f32.gmra.mrb[0].mxu0 %v3176
        %v3244 = vpop.f32.mrb[0].mxu0
        %v3245 = vadd.f32 0.0, %v3244
        %v3246 = vpop.f32.mrb[0].mxu0
        %3247 = vdwg.mxu0
        %v3248 = vadd.f32 %v3164, %v3245
        %v3249 = vld [vmem:[%s974] sm:$0xff]
        %3250 = vrot.lane.b32.xlu0 %v2750, 108
        %v3251 = vpop.permute.xlu0 %3250
        %3252 = vrot.lane.b32.xlu0 %v2751, 108
        %v3253 = vpop.permute.xlu0 %3252
        %3254 = vrot.lane.b32.xlu0 %v2752, 108
        %v3255 = vpop.permute.xlu0 %3254
        %v3260 = vsel %vm487, %v3249, 0
        %3262 = vmatprep.subr.mxu0 0.0
        %3263 = vmatpush1.msra.mxu0 %v3251
        %3264 = vmatprep.subr.mxu0 0.0
        %3265 = vmatpush1.msra.mxu0 %v3253
        %3266 = vmatprep.subr.mxu0 0.0
        %3267 = vmatpush1.msra.mxu0 %v3255
        %3268 = vmatprep.subr.mxu0 0.0
        %3269 = vmatpush1.msra.mxu0 0.0
        %3270 = vmatprep.subr.mxu0 0.0
        %3271 = vmatpush1.msra.mxu0 0.0
        %3272 = vmatprep.subr.mxu0 0.0
        %3273 = vmatpush1.msra.mxu0 0.0
        %3274 = vmatprep.subr.mxu0 0.0
        %3275 = vmatpush1.msra.mxu0 0.0
        %3276 = vmatprep.subr.mxu0 0.0
        %3277 = vmatpush1.msra.mxu0 0.0
        %3278 = vmatprep.subr.mxu0 0.0
        %3279 = vmatpush1.msra.mxu0 0.0
        %3280 = vmatprep.subr.mxu0 0.0
        %3281 = vmatpush1.msra.mxu0 0.0
        %3282 = vmatprep.subr.mxu0 0.0
        %3283 = vmatpush1.msra.mxu0 0.0
        %3284 = vmatprep.subr.mxu0 0.0
        %3285 = vmatpush1.msra.mxu0 0.0
        %3286 = vmatprep.subr.mxu0 0.0
        %3287 = vmatpush1.msra.mxu0 0.0
        %3288 = vmatprep.subr.mxu0 0.0
        %3289 = vmatpush1.msra.mxu0 0.0
        %3290 = vmatprep.subr.mxu0 0.0
        %3291 = vmatpush1.msra.mxu0 0.0
        %3292 = vmatprep.subr.mxu0 0.0
        %3293 = vmatpush1.msra.mxu0 0.0
        %3294 = vmatprep.subr.mxu0 0.0
        %3295 = vmatpush1.msra.mxu0 0.0
        %3296 = vmatprep.subr.mxu0 0.0
        %3297 = vmatpush1.msra.mxu0 0.0
        %3298 = vmatprep.subr.mxu0 0.0
        %3299 = vmatpush1.msra.mxu0 0.0
        %3300 = vmatprep.subr.mxu0 0.0
        %3301 = vmatpush1.msra.mxu0 0.0
        %3302 = vmatprep.subr.mxu0 0.0
        %3303 = vmatpush1.msra.mxu0 0.0
        %3304 = vmatprep.subr.mxu0 0.0
        %3305 = vmatpush1.msra.mxu0 0.0
        %3306 = vmatprep.subr.mxu0 0.0
        %3307 = vmatpush1.msra.mxu0 0.0
        %3308 = vmatprep.subr.mxu0 0.0
        %3309 = vmatpush1.msra.mxu0 0.0
        %3310 = vmatprep.subr.mxu0 0.0
        %3311 = vmatpush1.msra.mxu0 0.0
        %3312 = vmatprep.subr.mxu0 0.0
        %3313 = vmatpush1.msra.mxu0 0.0
        %3314 = vmatprep.subr.mxu0 0.0
        %3315 = vmatpush1.msra.mxu0 0.0
        %3316 = vmatprep.subr.mxu0 0.0
        %3317 = vmatpush1.msra.mxu0 0.0
        %3318 = vmatprep.subr.mxu0 0.0
        %3319 = vmatpush1.msra.mxu0 0.0
        %3320 = vmatprep.subr.mxu0 0.0
        %3321 = vmatpush1.msra.mxu0 0.0
        %3322 = vmatprep.subr.mxu0 0.0
        %3323 = vmatpush1.msra.mxu0 0.0
        %3324 = vmatprep.subr.mxu0 0.0
        %3325 = vmatpush1.msra.mxu0 0.0
        %3326 = vmatprep.mubr.f32.mxu0 0.0
        %3327 = vmatmul.mubr.f32.gmra.mrb[0].mxu0 %v3260
        %v3328 = vpop.f32.mrb[0].mxu0
        %v3329 = vadd.f32 0.0, %v3328
        %v3330 = vpop.f32.mrb[0].mxu0
        %3331 = vdwg.mxu0
        %v3332 = vadd.f32 %v3248, %v3329
        %v3333 = vld [vmem:[%s1059] sm:$0xff]
        %3334 = vrot.lane.b32.xlu0 %v2750, 107
        %v3335 = vpop.permute.xlu0 %3334
        %3336 = vrot.lane.b32.xlu0 %v2751, 107
        %v3337 = vpop.permute.xlu0 %3336
        %3338 = vrot.lane.b32.xlu0 %v2752, 107
        %v3339 = vpop.permute.xlu0 %3338
        %v3344 = vsel %vm487, %v3333, 0
        %3346 = vmatprep.subr.mxu0 0.0
        %3347 = vmatpush1.msra.mxu0 %v3335
        %3348 = vmatprep.subr.mxu0 0.0
        %3349 = vmatpush1.msra.mxu0 %v3337
        %3350 = vmatprep.subr.mxu0 0.0
        %3351 = vmatpush1.msra.mxu0 %v3339
        %3352 = vmatprep.subr.mxu0 0.0
        %3353 = vmatpush1.msra.mxu0 0.0
        %3354 = vmatprep.subr.mxu0 0.0
        %3355 = vmatpush1.msra.mxu0 0.0
        %3356 = vmatprep.subr.mxu0 0.0
        %3357 = vmatpush1.msra.mxu0 0.0
        %3358 = vmatprep.subr.mxu0 0.0
        %3359 = vmatpush1.msra.mxu0 0.0
        %3360 = vmatprep.subr.mxu0 0.0
        %3361 = vmatpush1.msra.mxu0 0.0
        %3362 = vmatprep.subr.mxu0 0.0
        %3363 = vmatpush1.msra.mxu0 0.0
        %3364 = vmatprep.subr.mxu0 0.0
        %3365 = vmatpush1.msra.mxu0 0.0
        %3366 = vmatprep.subr.mxu0 0.0
        %3367 = vmatpush1.msra.mxu0 0.0
        %3368 = vmatprep.subr.mxu0 0.0
        %3369 = vmatpush1.msra.mxu0 0.0
        %3370 = vmatprep.subr.mxu0 0.0
        %3371 = vmatpush1.msra.mxu0 0.0
        %3372 = vmatprep.subr.mxu0 0.0
        %3373 = vmatpush1.msra.mxu0 0.0
        %3374 = vmatprep.subr.mxu0 0.0
        %3375 = vmatpush1.msra.mxu0 0.0
        %3376 = vmatprep.subr.mxu0 0.0
        %3377 = vmatpush1.msra.mxu0 0.0
        %3378 = vmatprep.subr.mxu0 0.0
        %3379 = vmatpush1.msra.mxu0 0.0
        %3380 = vmatprep.subr.mxu0 0.0
        %3381 = vmatpush1.msra.mxu0 0.0
        %3382 = vmatprep.subr.mxu0 0.0
        %3383 = vmatpush1.msra.mxu0 0.0
        %3384 = vmatprep.subr.mxu0 0.0
        %3385 = vmatpush1.msra.mxu0 0.0
        %3386 = vmatprep.subr.mxu0 0.0
        %3387 = vmatpush1.msra.mxu0 0.0
        %3388 = vmatprep.subr.mxu0 0.0
        %3389 = vmatpush1.msra.mxu0 0.0
        %3390 = vmatprep.subr.mxu0 0.0
        %3391 = vmatpush1.msra.mxu0 0.0
        %3392 = vmatprep.subr.mxu0 0.0
        %3393 = vmatpush1.msra.mxu0 0.0
        %3394 = vmatprep.subr.mxu0 0.0
        %3395 = vmatpush1.msra.mxu0 0.0
        %3396 = vmatprep.subr.mxu0 0.0
        %3397 = vmatpush1.msra.mxu0 0.0
        %3398 = vmatprep.subr.mxu0 0.0
        %3399 = vmatpush1.msra.mxu0 0.0
        %3400 = vmatprep.subr.mxu0 0.0
        %3401 = vmatpush1.msra.mxu0 0.0
        %3402 = vmatprep.subr.mxu0 0.0
        %3403 = vmatpush1.msra.mxu0 0.0
        %3404 = vmatprep.subr.mxu0 0.0
        %3405 = vmatpush1.msra.mxu0 0.0
        %3406 = vmatprep.subr.mxu0 0.0
        %3407 = vmatpush1.msra.mxu0 0.0
        %3408 = vmatprep.subr.mxu0 0.0
        %3409 = vmatpush1.msra.mxu0 0.0
        %3410 = vmatprep.mubr.f32.mxu0 0.0
        %3411 = vmatmul.mubr.f32.gmra.mrb[0].mxu0 %v3344
        %v3412 = vpop.f32.mrb[0].mxu0
        %v3413 = vadd.f32 0.0, %v3412
        %v3414 = vpop.f32.mrb[0].mxu0
        %3415 = vdwg.mxu0
        %v3416 = vadd.f32 %v3332, %v3413
        %v3417 = vld [vmem:[%s1144] sm:$0xff]
        %3418 = vrot.lane.b32.xlu0 %v2750, 106
        %v3419 = vpop.permute.xlu0 %3418
        %3420 = vrot.lane.b32.xlu0 %v2751, 106
        %v3421 = vpop.permute.xlu0 %3420
        %3422 = vrot.lane.b32.xlu0 %v2752, 106
        %v3423 = vpop.permute.xlu0 %3422
        %v3428 = vsel %vm487, %v3417, 0
        %3430 = vmatprep.subr.mxu0 0.0
        %3431 = vmatpush1.msra.mxu0 %v3419
        %3432 = vmatprep.subr.mxu0 0.0
        %3433 = vmatpush1.msra.mxu0 %v3421
        %3434 = vmatprep.subr.mxu0 0.0
        %3435 = vmatpush1.msra.mxu0 %v3423
        %3436 = vmatprep.subr.mxu0 0.0
        %3437 = vmatpush1.msra.mxu0 0.0
        %3438 = vmatprep.subr.mxu0 0.0
        %3439 = vmatpush1.msra.mxu0 0.0
        %3440 = vmatprep.subr.mxu0 0.0
        %3441 = vmatpush1.msra.mxu0 0.0
        %3442 = vmatprep.subr.mxu0 0.0
        %3443 = vmatpush1.msra.mxu0 0.0
        %3444 = vmatprep.subr.mxu0 0.0
        %3445 = vmatpush1.msra.mxu0 0.0
        %3446 = vmatprep.subr.mxu0 0.0
        %3447 = vmatpush1.msra.mxu0 0.0
        %3448 = vmatprep.subr.mxu0 0.0
        %3449 = vmatpush1.msra.mxu0 0.0
        %3450 = vmatprep.subr.mxu0 0.0
        %3451 = vmatpush1.msra.mxu0 0.0
        %3452 = vmatprep.subr.mxu0 0.0
        %3453 = vmatpush1.msra.mxu0 0.0
        %3454 = vmatprep.subr.mxu0 0.0
        %3455 = vmatpush1.msra.mxu0 0.0
        %3456 = vmatprep.subr.mxu0 0.0
        %3457 = vmatpush1.msra.mxu0 0.0
        %3458 = vmatprep.subr.mxu0 0.0
        %3459 = vmatpush1.msra.mxu0 0.0
        %3460 = vmatprep.subr.mxu0 0.0
        %3461 = vmatpush1.msra.mxu0 0.0
        %3462 = vmatprep.subr.mxu0 0.0
        %3463 = vmatpush1.msra.mxu0 0.0
        %3464 = vmatprep.subr.mxu0 0.0
        %3465 = vmatpush1.msra.mxu0 0.0
        %3466 = vmatprep.subr.mxu0 0.0
        %3467 = vmatpush1.msra.mxu0 0.0
        %3468 = vmatprep.subr.mxu0 0.0
        %3469 = vmatpush1.msra.mxu0 0.0
        %3470 = vmatprep.subr.mxu0 0.0
        %3471 = vmatpush1.msra.mxu0 0.0
        %3472 = vmatprep.subr.mxu0 0.0
        %3473 = vmatpush1.msra.mxu0 0.0
        %3474 = vmatprep.subr.mxu0 0.0
        %3475 = vmatpush1.msra.mxu0 0.0
        %3476 = vmatprep.subr.mxu0 0.0
        %3477 = vmatpush1.msra.mxu0 0.0
        %3478 = vmatprep.subr.mxu0 0.0
        %3479 = vmatpush1.msra.mxu0 0.0
        %3480 = vmatprep.subr.mxu0 0.0
        %3481 = vmatpush1.msra.mxu0 0.0
        %3482 = vmatprep.subr.mxu0 0.0
        %3483 = vmatpush1.msra.mxu0 0.0
        %3484 = vmatprep.subr.mxu0 0.0
        %3485 = vmatpush1.msra.mxu0 0.0
        %3486 = vmatprep.subr.mxu0 0.0
        %3487 = vmatpush1.msra.mxu0 0.0
        %3488 = vmatprep.subr.mxu0 0.0
        %3489 = vmatpush1.msra.mxu0 0.0
        %3490 = vmatprep.subr.mxu0 0.0
        %3491 = vmatpush1.msra.mxu0 0.0
        %3492 = vmatprep.subr.mxu0 0.0
        %3493 = vmatpush1.msra.mxu0 0.0
        %3494 = vmatprep.mubr.f32.mxu0 0.0
        %3495 = vmatmul.mubr.f32.gmra.mrb[0].mxu0 %v3428
        %v3496 = vpop.f32.mrb[0].mxu0
        %v3497 = vadd.f32 0.0, %v3496
        %v3498 = vpop.f32.mrb[0].mxu0
        %3499 = vdwg.mxu0
        %v3500 = vadd.f32 %v3416, %v3497
        %v3501 = vadd.f32 %v2744, %v3500
        %v3502 = vmul.f32 %v3500, %v3500
        %v3503 = vadd.f32 %v2746, %v3502
        %v3504 = vpack.c.bf16 %v3500, %v3500
        %s3505 = scalar_lea.vmem %s419, 12 [#allocation8]
        %3506 = vst.msk [vmem:[%s3505] sm:$0xf] %vm1233, %v3504
        %v3507 = vld [vmem:[%s4] sm:$0xff]
        %v3508 = vld [vmem:[%s4 + $0x8] sm:$0xff]
        %v3509 = vld [vmem:[%s4 + $0x10] sm:$0xff]
        %v3510 = vld [vmem:[%s4 + $0x18] sm:$0xff]
        %v3511 = vld [vmem:[%s4 + $0x20] sm:$0xff]
        %v3512 = vld [vmem:[%s4 + $0x28] sm:$0xff]
        %v3513 = vld [vmem:[%s4 + $0x30] sm:$0xff]
        %v3514 = vld [vmem:[%s4 + $0x38] sm:$0xff]
        %v3515 = vld [vmem:[%s4 + $0x40] sm:$0xff]
        %v3516 = vld [vmem:[%s4 + $0x48] sm:$0xff]
        %vm3517 = vcmask 654336
        %v3519 = vsel %vm3517, %v3501, 0
        %3521 = vmatprep.subr.mxu0 0.0
        %3522 = vmatpush1.msra.mxu0 %v3507
        %3523 = vmatprep.subr.mxu0 0.0
        %3524 = vmatpush1.msra.mxu0 %v3508
        %3525 = vmatprep.subr.mxu0 0.0
        %3526 = vmatpush1.msra.mxu0 %v3509
        %3527 = vmatprep.subr.mxu0 0.0
        %3528 = vmatpush1.msra.mxu0 %v3510
        %3529 = vmatprep.subr.mxu0 0.0
        %3530 = vmatpush1.msra.mxu0 %v3511
        %3531 = vmatprep.subr.mxu0 0.0
        %3532 = vmatpush1.msra.mxu0 %v3512
        %3533 = vmatprep.subr.mxu0 0.0
        %3534 = vmatpush1.msra.mxu0 %v3513
        %3535 = vmatprep.subr.mxu0 0.0
        %3536 = vmatpush1.msra.mxu0 %v3514
        %3537 = vmatprep.subr.mxu0 0.0
        %3538 = vmatpush1.msra.mxu0 %v3515
        %3539 = vmatprep.subr.mxu0 0.0
        %3540 = vmatpush1.msra.mxu0 %v3516
        %3541 = vmatprep.subr.mxu0 0.0
        %3542 = vmatpush1.msra.mxu0 0.0
        %3543 = vmatprep.subr.mxu0 0.0
        %3544 = vmatpush1.msra.mxu0 0.0
        %3545 = vmatprep.subr.mxu0 0.0
        %3546 = vmatpush1.msra.mxu0 0.0
        %3547 = vmatprep.subr.mxu0 0.0
        %3548 = vmatpush1.msra.mxu0 0.0
        %3549 = vmatprep.subr.mxu0 0.0
        %3550 = vmatpush1.msra.mxu0 0.0
        %3551 = vmatprep.subr.mxu0 0.0
        %3552 = vmatpush1.msra.mxu0 0.0
        %3553 = vmatprep.subr.mxu0 0.0
        %3554 = vmatpush1.msra.mxu0 0.0
        %3555 = vmatprep.subr.mxu0 0.0
        %3556 = vmatpush1.msra.mxu0 0.0
        %3557 = vmatprep.subr.mxu0 0.0
        %3558 = vmatpush1.msra.mxu0 0.0
        %3559 = vmatprep.subr.mxu0 0.0
        %3560 = vmatpush1.msra.mxu0 0.0
        %3561 = vmatprep.subr.mxu0 0.0
        %3562 = vmatpush1.msra.mxu0 0.0
        %3563 = vmatprep.subr.mxu0 0.0
        %3564 = vmatpush1.msra.mxu0 0.0
        %3565 = vmatprep.subr.mxu0 0.0
        %3566 = vmatpush1.msra.mxu0 0.0
        %3567 = vmatprep.subr.mxu0 0.0
        %3568 = vmatpush1.msra.mxu0 0.0
        %3569 = vmatprep.subr.mxu0 0.0
        %3570 = vmatpush1.msra.mxu0 0.0
        %3571 = vmatprep.subr.mxu0 0.0
        %3572 = vmatpush1.msra.mxu0 0.0
        %3573 = vmatprep.subr.mxu0 0.0
        %3574 = vmatpush1.msra.mxu0 0.0
        %3575 = vmatprep.subr.mxu0 0.0
        %3576 = vmatpush1.msra.mxu0 0.0
        %3577 = vmatprep.subr.mxu0 0.0
        %3578 = vmatpush1.msra.mxu0 0.0
        %3579 = vmatprep.subr.mxu0 0.0
        %3580 = vmatpush1.msra.mxu0 0.0
        %3581 = vmatprep.subr.mxu0 0.0
        %3582 = vmatpush1.msra.mxu0 0.0
        %3583 = vmatprep.subr.mxu0 0.0
        %3584 = vmatpush1.msra.mxu0 0.0
        %3585 = vmatprep.mubr.f32.mxu0 0.0
        %3586 = vmatmul.mubr.f32.gmra.mrb[0].mxu0 %v3519
        %v3587 = vpop.f32.mrb[0].mxu0
        %v3588 = vadd.f32 0.0, %v3587
        %v3589 = vpop.f32.mrb[0].mxu0
        %3590 = vdwg.mxu0
        %vm3591 = vcmask 7168
        %3592 = vst.msk [vmem:[%s458] sm:$0xff] %vm3591, %v3588
        %v3594 = vsel %vm3517, %v3503, 0
        %3596 = vmatprep.subr.mxu0 0.0
        %3597 = vmatpush1.msra.mxu0 %v3507
        %3598 = vmatprep.subr.mxu0 0.0
        %3599 = vmatpush1.msra.mxu0 %v3508
        %3600 = vmatprep.subr.mxu0 0.0
        %3601 = vmatpush1.msra.mxu0 %v3509
        %3602 = vmatprep.subr.mxu0 0.0
        %3603 = vmatpush1.msra.mxu0 %v3510
        %3604 = vmatprep.subr.mxu0 0.0
        %3605 = vmatpush1.msra.mxu0 %v3511
        %3606 = vmatprep.subr.mxu0 0.0
        %3607 = vmatpush1.msra.mxu0 %v3512
        %3608 = vmatprep.subr.mxu0 0.0
        %3609 = vmatpush1.msra.mxu0 %v3513
        %3610 = vmatprep.subr.mxu0 0.0
        %3611 = vmatpush1.msra.mxu0 %v3514
        %3612 = vmatprep.subr.mxu0 0.0
        %3613 = vmatpush1.msra.mxu0 %v3515
        %3614 = vmatprep.subr.mxu0 0.0
        %3615 = vmatpush1.msra.mxu0 %v3516
        %3616 = vmatprep.subr.mxu0 0.0
        %3617 = vmatpush1.msra.mxu0 0.0
        %3618 = vmatprep.subr.mxu0 0.0
        %3619 = vmatpush1.msra.mxu0 0.0
        %3620 = vmatprep.subr.mxu0 0.0
        %3621 = vmatpush1.msra.mxu0 0.0
        %3622 = vmatprep.subr.mxu0 0.0
        %3623 = vmatpush1.msra.mxu0 0.0
        %3624 = vmatprep.subr.mxu0 0.0
        %3625 = vmatpush1.msra.mxu0 0.0
        %3626 = vmatprep.subr.mxu0 0.0
        %3627 = vmatpush1.msra.mxu0 0.0
        %3628 = vmatprep.subr.mxu0 0.0
        %3629 = vmatpush1.msra.mxu0 0.0
        %3630 = vmatprep.subr.mxu0 0.0
        %3631 = vmatpush1.msra.mxu0 0.0
        %3632 = vmatprep.subr.mxu0 0.0
        %3633 = vmatpush1.msra.mxu0 0.0
        %3634 = vmatprep.subr.mxu0 0.0
        %3635 = vmatpush1.msra.mxu0 0.0
        %3636 = vmatprep.subr.mxu0 0.0
        %3637 = vmatpush1.msra.mxu0 0.0
        %3638 = vmatprep.subr.mxu0 0.0
        %3639 = vmatpush1.msra.mxu0 0.0
        %3640 = vmatprep.subr.mxu0 0.0
        %3641 = vmatpush1.msra.mxu0 0.0
        %3642 = vmatprep.subr.mxu0 0.0
        %3643 = vmatpush1.msra.mxu0 0.0
        %3644 = vmatprep.subr.mxu0 0.0
        %3645 = vmatpush1.msra.mxu0 0.0
        %3646 = vmatprep.subr.mxu0 0.0
        %3647 = vmatpush1.msra.mxu0 0.0
        %3648 = vmatprep.subr.mxu0 0.0
        %3649 = vmatpush1.msra.mxu0 0.0
        %3650 = vmatprep.subr.mxu0 0.0
        %3651 = vmatpush1.msra.mxu0 0.0
        %3652 = vmatprep.subr.mxu0 0.0
        %3653 = vmatpush1.msra.mxu0 0.0
        %3654 = vmatprep.subr.mxu0 0.0
        %3655 = vmatpush1.msra.mxu0 0.0
        %3656 = vmatprep.subr.mxu0 0.0
        %3657 = vmatpush1.msra.mxu0 0.0
        %3658 = vmatprep.subr.mxu0 0.0
        %3659 = vmatpush1.msra.mxu0 0.0
        %3660 = vmatprep.mubr.f32.mxu0 0.0
        %3661 = vmatmul.mubr.f32.gmra.mrb[0].mxu0 %v3594
        %v3662 = vpop.f32.mrb[0].mxu0
        %v3663 = vadd.f32 0.0, %v3662
        %v3664 = vpop.f32.mrb[0].mxu0
        %3665 = vdwg.mxu0
        %3666 = vst.msk [vmem:[%s466] sm:$0xff] %vm3591, %v3663
        %s3667 = sand.u32 %s186, 1
        %s3668 = scalar_lea.sflag [#allocation4], %s3667
        %s3669 = sand.u32 %s186, 1
        %s3670 = smul.addr %s3669, 16
        %s3671 = scalar_lea.vmem [#allocation8], %s3670
        %p3672 = scmp.lt.s32.totalorder %s32, 1
        %s3673 = scalar_select %p3672, %s32, 1
        %p3674 = scmp.lt.s32.totalorder %s33, 1
        %s3675 = scalar_select %p3674, %s33, 1
        %s3676 = smul.addr %s3673, 2
        %s3677 = sadd.s32 %s3675, %s3676
        %s3678 = smul.addr %s3677, 8
        %s3679 = scalar_lea.vmem %s6, %s3678
        %p3680 = scmp.lt.s32.totalorder %s32, 1
        %s3681 = scalar_select %p3680, %s32, 1
        %p3682 = scmp.lt.s32.totalorder %s33, 1
        %s3683 = scalar_select %p3682, %s33, 1
        %s3684 = smul.addr %s3681, 2
        %s3685 = sadd.s32 %s3683, %s3684
        %s3686 = smul.addr %s3685, 8
        %s3687 = scalar_lea.vmem %s7, %s3686
        // Predicated region
        $region53: #{tpu_custom_call.1} parent=39 // pred_check
          %p3688 = pneg %p196
        $region54: #{tpu_custom_call.1} parent=39 // pred_check_branch
          %3690 = sbr.rel (%p3688) target = $region56
        $region55: #{tpu_custom_call.1} parent=39 // pred_region
          %s3691 = smul.u32 4, %s33
          %s3693 = ssub.s32 256, 256
          %3694 = vsyncadd %s3668, %s3693
          %s3695 = smul.addr %s32, 8
          %s3696 = sadd.s32 %s3691, %s3695
          %s3697 = smul.addr %s3696, 64
          %s3698 = scalar_lea.hbm %s5, %s3697
          %s3699 = sshll.u32 %s3671, 4
          %s3700 = int_to_ptr.vmem [resolvable:$true] %s3699
          %3705 = dma.vmem_to_hbm [thread:$0]  %s3700, 256, %s3698, %s3668, 64, 64, 4
        $region56: #{tpu_custom_call.1} parent=39 // pred_fallthru
          _
        // Predicated region
        $region57: #{tpu_custom_call.1} parent=39 // pred_check
          %p3706 = pneg %p224
        $region58: #{tpu_custom_call.1} parent=39 // pred_check_branch
          %3708 = sbr.rel (%p3706) target = $region60
        $region59: #{tpu_custom_call.1} parent=39 // pred_region
          _
        $region60: #{tpu_custom_call.1} parent=39 // pred_fallthru
          _
        // Predicated region
        $region61: #{tpu_custom_call.1} parent=39 // pred_check
          %p3709 = pneg %p252
        $region62: #{tpu_custom_call.1} parent=39 // pred_check_branch
          %3711 = sbr.rel (%p3709) target = $region64
        $region63: #{tpu_custom_call.1} parent=39 // pred_region
          _
        $region64: #{tpu_custom_call.1} parent=39 // pred_fallthru
          _
      $region40: #{tpu_custom_call.1} parent=5 // pred_fallthru
        _
      %p3712 = scmp.le.s32.totalorder 2, %s23
      // Predicated region
      $region65: #{tpu_custom_call.1} parent=5 // pred_check
        %p3713 = pneg %p3712
      $region66: #{tpu_custom_call.1} parent=5 // pred_check_branch
        %3715 = sbr.rel (%p3713) target = $region68
      $region67: #{tpu_custom_call.1} parent=5 // pred_region
        %s3716 = ssub.s32 %s23, 2
        // Predicated region
        $region69: #{tpu_custom_call.1} parent=67 // pred_check
          %p3717 = pneg %p202
        $region70: #{tpu_custom_call.1} parent=67 // pred_check_branch
          %3719 = sbr.rel (%p3717) target = $region72
        $region71: #{tpu_custom_call.1} parent=67 // pred_region
          %s3720 = sand.u32 %s187, 1
          %s3721 = scalar_lea.sflag [#allocation4], %s3720
          %s3722 = sand.u32 %s187, 1
          %s3723 = smul.addr %s3722, 16
          %s3724 = scalar_lea.vmem [#allocation8], %s3723
          %3725 = dma.done %s3721, 256
        $region72: #{tpu_custom_call.1} parent=67 // pred_fallthru
          _
        // Predicated region
        $region73: #{tpu_custom_call.1} parent=67 // pred_check
          %p3726 = pneg %p230
        $region74: #{tpu_custom_call.1} parent=67 // pred_check_branch
          %3728 = sbr.rel (%p3726) target = $region76
        $region75: #{tpu_custom_call.1} parent=67 // pred_region
          %p3729 = scmp.lt.s32.totalorder %s34, 1
          %s3730 = scalar_select %p3729, %s34, 1
          %p3731 = scmp.lt.s32.totalorder %s35, 1
          %s3732 = scalar_select %p3731, %s35, 1
          %s3733 = smul.addr %s3730, 2
          %s3734 = sadd.s32 %s3732, %s3733
          %s3735 = smul.addr %s3734, 8
          %s3736 = scalar_lea.vmem %s6, %s3735
        $region76: #{tpu_custom_call.1} parent=67 // pred_fallthru
          _
        // Predicated region
        $region77: #{tpu_custom_call.1} parent=67 // pred_check
          %p3737 = pneg %p258
        $region78: #{tpu_custom_call.1} parent=67 // pred_check_branch
          %3739 = sbr.rel (%p3737) target = $region80
        $region79: #{tpu_custom_call.1} parent=67 // pred_region
          %p3740 = scmp.lt.s32.totalorder %s34, 1
          %s3741 = scalar_select %p3740, %s34, 1
          %p3742 = scmp.lt.s32.totalorder %s35, 1
          %s3743 = scalar_select %p3742, %s35, 1
          %s3744 = smul.addr %s3741, 2
          %s3745 = sadd.s32 %s3743, %s3744
          %s3746 = smul.addr %s3745, 8
          %s3747 = scalar_lea.vmem %s7, %s3746
        $region80: #{tpu_custom_call.1} parent=67 // pred_fallthru
          _
      $region68: #{tpu_custom_call.1} parent=5 // pred_fallthru
        _
    $region6: #{tpu_custom_call.1} parent=1 // loop_footer
      %s27 = sadd.s32 1, %s23
    $region7: #{tpu_custom_call.1} parent=1 // loop_footer_branch
      %22 = sbr.rel target = $region3
    $region8: #{tpu_custom_call.1} parent=1 // loop_exit
      _
    %3748 = vsyncpa [#allocation3], 1
    %s3749 = scalar_lea.sflag [#allocation3], 1
    %3750 = vsyncpa %s3749, 1
    %3751 = vsyncpa [#allocation6], 1
    %s3752 = scalar_lea.sflag [#allocation6], 1
    %3753 = vsyncpa %s3752, 1
    %3754 = vsyncpa [#allocation4], 1
    %s3755 = scalar_lea.sflag [#allocation4], 1
    %3756 = vsyncpa %s3755, 1

</llo_original>
